<compile_context>
chip_gen: v6e
topology: v6e:2x2x1
jax: 0.10.0
libtpu: 0.0.40
codegen_flags: <defaults>
</compile_context>

<pallas_src>
import functools
import math

import jax
import jax.numpy as jnp
import numpy as np
from jax import lax
from jax.experimental import pallas as pl
from jax.experimental.pallas import tpu as pltpu

GELU_COEF = math.sqrt(2.0 / math.pi)  # sqrt(2/pi), tanh-GELU constant


# ---------------------------------------------------------------------------
# Fused kernel: LN1 + causal MHA + out_proj + residual + LN2 + FFN + residual
# ---------------------------------------------------------------------------
def transformer_block_kernel(x_ref, g1_ref, s1_ref,
                             wq_ref, bq_ref, wk_ref, bk_ref, wv_ref, bv_ref,
                             wo_ref, bo_ref,
                             g2_ref, s2_ref, w1_ref, b1_ref, w2_ref, b2_ref,
                             o_ref, *, num_heads, eps):
    seq, emb = x_ref.shape
    head_dim = emb // num_heads
    inv_scale = 1.0 / math.sqrt(head_dim)

    xf = x_ref[...].astype(jnp.float32)

    # ----- LayerNorm1, exactly as the module writes it:
    # unbiased variance, sqrt(var - eps), scale * norm * shift.
    mean1 = jnp.mean(xf, axis=-1, keepdims=True)
    var1 = jnp.sum((xf - mean1) ** 2, axis=-1, keepdims=True) / (emb - 1)
    ln1 = (g1_ref[...].astype(jnp.float32)
           * ((xf - mean1) / jnp.sqrt(var1 - eps))
           * s1_ref[...].astype(jnp.float32))

    # ----- Q/K/V projections: weights stay in storage dtype, f32 accumulation on the MXU.
    h = ln1.astype(wq_ref.dtype)
    q = jnp.dot(h, wq_ref[...], preferred_element_type=jnp.float32) + bq_ref[...].astype(jnp.float32)
    k = jnp.dot(h, wk_ref[...], preferred_element_type=jnp.float32) + bk_ref[...].astype(jnp.float32)
    v = jnp.dot(h, wv_ref[...], preferred_element_type=jnp.float32) + bv_ref[...].astype(jnp.float32)

    # Causal mask: torch.triu(ones) INCLUDES the diagonal (reproduced as written).
    row = lax.broadcasted_iota(jnp.int32, (seq, seq), 0)
    col = lax.broadcasted_iota(jnp.int32, (seq, seq), 1)
    masked = col >= row

    # ----- Per-head attention with out_proj folded in:
    # ctx @ Wo == sum_h ctx_h @ Wo[h*hd:(h+1)*hd, :]  (avoids re-concatenating heads)
    wo = wo_ref[...]
    attn = jnp.zeros((seq, emb), jnp.float32)
    for hh in range(num_heads):  # small static head loop -> plain 2-D MXU dots
        lo = hh * head_dim
        qh = q[:, lo:lo + head_dim]
        kh = k[:, lo:lo + head_dim]
        vh = v[:, lo:lo + head_dim]
        scores = jnp.dot(qh, kh.T, preferred_element_type=jnp.float32)
        scores = jnp.where(masked, -jnp.inf, scores) * inv_scale
        m = jnp.max(scores, axis=-1, keepdims=True)
        e = jnp.exp(scores - m)
        p = e / jnp.sum(e, axis=-1, keepdims=True)
        ctx_h = jnp.dot(p, vh, preferred_element_type=jnp.float32)
        attn = attn + jnp.dot(ctx_h.astype(wo.dtype), wo[lo:lo + head_dim, :],
                              preferred_element_type=jnp.float32)
    attn = attn + bo_ref[...].astype(jnp.float32)

    # drop_shortcut is identity in eval mode; residual with the pre-norm input.
    y = attn + xf

    # ----- LayerNorm2 (same quirky formula).
    mean2 = jnp.mean(y, axis=-1, keepdims=True)
    var2 = jnp.sum((y - mean2) ** 2, axis=-1, keepdims=True) / (emb - 1)
    ln2 = (g2_ref[...].astype(jnp.float32)
           * ((y - mean2) / jnp.sqrt(var2 - eps))
           * s2_ref[...].astype(jnp.float32))

    # ----- FeedForward: Linear(E->4E) -> tanh-GELU (f32) -> Linear(4E->E)
    hid = jnp.dot(ln2.astype(w1_ref.dtype), w1_ref[...],
                  preferred_element_type=jnp.float32) + b1_ref[...].astype(jnp.float32)
    g = 0.5 * hid * (1.0 + jnp.tanh(GELU_COEF * (hid + 0.044715 * (hid * hid * hid))))
    ffn = jnp.dot(g.astype(w2_ref.dtype), w2_ref[...],
                  preferred_element_type=jnp.float32) + b2_ref[...].astype(jnp.float32)

    # drop_shortcut is identity in eval mode; second residual.
    o_ref[...] = (ffn + y).astype(o_ref.dtype)


# ---------------------------------------------------------------------------
# Wrapper
# ---------------------------------------------------------------------------
def _clamp_vmem(nbytes):
    return int(min(max(nbytes, 16 * 1024 * 1024), 64 * 1024 * 1024))


def transformer_block(x, params, *, num_heads, eps=1e-5):
    """x: [B, S, E]. Linear weights stored as [in, out] (= nn.Linear weight.T)."""
    B, S, E = x.shape
    H = params["w1"].shape[1]
    assert E % num_heads == 0
    itemsize = x.dtype.itemsize
    w_itemsize = params["wq"].dtype.itemsize

    g1 = params["g1"].reshape(1, E)
    s1 = params["s1"].reshape(1, E)
    g2 = params["g2"].reshape(1, E)
    s2 = params["s2"].reshape(1, E)
    bq = params["bq"].reshape(1, E)
    bk = params["bk"].reshape(1, E)
    bv = params["bv"].reshape(1, E)
    bo = params["bo"].reshape(1, E)
    b1 = params["b1"].reshape(1, H)
    b2 = params["b2"].reshape(1, E)

    const = lambda b: (0, 0)  # resident parameters: same block every grid step

    vmem = _clamp_vmem(
        2 * (4 * E * E + 2 * E * H) * w_itemsize     # Wq,Wk,Wv,Wo,W1,W2 (double-buffered)
        + 4 * S * E * itemsize                       # x / out blocks (double-buffered)
        + (14 * S * E + 4 * S * H + 6 * S * S) * 4   # f32 intermediates
        + (4 << 20))                                 # headroom

    out = pl.pallas_call(
        functools.partial(transformer_block_kernel, num_heads=num_heads, eps=eps),
        out_shape=jax.ShapeDtypeStruct((B, S, E), x.dtype),
        grid=(B,),
        in_specs=[
            pl.BlockSpec((None, S, E), lambda b: (b, 0, 0)),             # x (one batch element)
            pl.BlockSpec((1, E), const), pl.BlockSpec((1, E), const),    # norm1 scale, shift
            pl.BlockSpec((E, E), const), pl.BlockSpec((1, E), const),    # Wq, bq
            pl.BlockSpec((E, E), const), pl.BlockSpec((1, E), const),    # Wk, bk
            pl.BlockSpec((E, E), const), pl.BlockSpec((1, E), const),    # Wv, bv
            pl.BlockSpec((E, E), const), pl.BlockSpec((1, E), const),    # Wo, bo
            pl.BlockSpec((1, E), const), pl.BlockSpec((1, E), const),    # norm2 scale, shift
            pl.BlockSpec((E, H), const), pl.BlockSpec((1, H), const),    # W1, b1
            pl.BlockSpec((H, E), const), pl.BlockSpec((1, E), const),    # W2, b2
        ],
        out_specs=pl.BlockSpec((None, S, E), lambda b: (b, 0, 0)),
        compiler_params=pltpu.CompilerParams(
            dimension_semantics=("parallel",),
            vmem_limit_bytes=vmem),
    )(x, g1, s1,
      params["wq"], bq, params["wk"], bk, params["wv"], bv, params["wo"], bo,
      g2, s2, params["w1"], b1, params["w2"], b2)

    return out


# ---------------------------------------------------------------------------
# Pure-JAX reference (mirrors the PyTorch module exactly, quirks included)
# ---------------------------------------------------------------------------
def reference_transformer_block(x, p, *, num_heads, eps=1e-5):
    B, S, E = x.shape
    hd = E // num_heads

    def layer_norm(v, scale, shift):
        mean = jnp.mean(v, axis=-1, keepdims=True)
        var = jnp.sum((v - mean) ** 2, axis=-1, keepdims=True) / (v.shape[-1] - 1)
        return scale * ((v - mean) / jnp.sqrt(var - eps)) * shift

    h = layer_norm(x, p["g1"], p["s1"])
    q = h @ p["wq"] + p["bq"]
    k = h @ p["wk"] + p["bk"]
    v = h @ p["wv"] + p["bv"]
    q = q.reshape(B, S, num_heads, hd).transpose(0, 2, 1, 3)
    k = k.reshape(B, S, num_heads, hd).transpose(0, 2, 1, 3)
    v = v.reshape(B, S, num_heads, hd).transpose(0, 2, 1, 3)
    scores = jnp.einsum("bhqd,bhkd->bhqk", q, k)
    mask = jnp.triu(jnp.ones((S, S), dtype=bool))  # diagonal included, as in the module
    scores = jnp.where(mask[None, None], -jnp.inf, scores) / math.sqrt(hd)
    m = jnp.max(scores, axis=-1, keepdims=True)
    e = jnp.exp(scores - m)
    w = e / jnp.sum(e, axis=-1, keepdims=True)
    ctx = jnp.einsum("bhqk,bhkd->bhqd", w, v).transpose(0, 2, 1, 3).reshape(B, S, E)
    x1 = x + (ctx @ p["wo"] + p["bo"])

    h2 = layer_norm(x1, p["g2"], p["s2"])
    hidden = h2 @ p["w1"] + p["b1"]
    g = 0.5 * hidden * (1.0 + jnp.tanh(GELU_COEF * (hidden + 0.044715 * (hidden * hidden * hidden))))
    return x1 + (g @ p["w2"] + p["b2"])


if __name__ == "__main__":
    # TODO(synk): nn.Dropout layers are treated as identity (eval/inference mode);
    # training-mode stochastic dropout is not implemented.
    cfg = {"emb_dim": 128, "context_length": 64, "n_heads": 4,
           "drop_rate": 0.0, "qkv_bias": False}
    B = 2
    S = cfg["context_length"]
    E = cfg["emb_dim"]            # multiple of 128 -> lane-dense tiles
    H = 4 * E
    NH = cfg["n_heads"]

    key = jax.random.PRNGKey(0)
    ks = jax.random.split(key, 16)

    x = jax.random.normal(ks[0], (B, S, E), dtype=jnp.float32)

    params = {
        # LayerNorm params (random, not the degenerate ones/zeros init, so the
        # module's scale*norm*shift math is actually exercised)
        "g1": 1.0 + 0.1 * jax.random.normal(ks[1], (E,), dtype=jnp.float32),
        "s1": 1.0 + 0.1 * jax.random.normal(ks[2], (E,), dtype=jnp.float32),
        "g2": 1.0 + 0.1 * jax.random.normal(ks[3], (E,), dtype=jnp.float32),
        "s2": 1.0 + 0.1 * jax.random.normal(ks[4], (E,), dtype=jnp.float32),
        # attention weights, stored [in, out] (= nn.Linear weight.T)
        "wq": 0.02 * jax.random.normal(ks[5], (E, E), dtype=jnp.float32),
        "wk": 0.02 * jax.random.normal(ks[6], (E, E), dtype=jnp.float32),
        "wv": 0.02 * jax.random.normal(ks[7], (E, E), dtype=jnp.float32),
        "bq": jnp.zeros((E,), jnp.float32),   # qkv_bias=False
        "bk": jnp.zeros((E,), jnp.float32),
        "bv": jnp.zeros((E,), jnp.float32),
        "wo": 0.02 * jax.random.normal(ks[8], (E, E), dtype=jnp.float32),
        "bo": 0.02 * jax.random.normal(ks[9], (E,), dtype=jnp.float32),
        # feed-forward weights, stored [in, out]
        "w1": 0.02 * jax.random.normal(ks[10], (E, H), dtype=jnp.float32),
        "b1": 0.02 * jax.random.normal(ks[11], (H,), dtype=jnp.float32),
        "w2": 0.02 * jax.random.normal(ks[12], (H, E), dtype=jnp.float32),
        "b2": 0.02 * jax.random.normal(ks[13], (E,), dtype=jnp.float32),
    }

    out = transformer_block(x, params, num_heads=NH)
    jax.block_until_ready(out)

    ref = reference_transformer_block(x, params, num_heads=NH)
    assert out.shape == (B, S, E)
    # Token 0 of every batch is NaN because the module's mask (torch.triu with the
    # diagonal included) masks the whole first attention row; the reference produces
    # the same NaNs and assert_allclose treats matching NaNs as equal.
    np.testing.assert_allclose(np.asarray(out), np.asarray(ref), rtol=1e-4, atol=1e-4)

    print("KERNEL_OK")
</pallas_src>

<mosaic_0001>
module attributes {stable_mosaic.version = 11 : i64} {
  func.func @transformer_block_kernel(%arg0: i32, %arg1: memref<1x64x128xf32, #tpu.memory_space<vmem>>, %arg2: memref<1x128xf32, #tpu.memory_space<vmem>>, %arg3: memref<1x128xf32, #tpu.memory_space<vmem>>, %arg4: memref<128x128xf32, #tpu.memory_space<vmem>>, %arg5: memref<1x128xf32, #tpu.memory_space<vmem>>, %arg6: memref<128x128xf32, #tpu.memory_space<vmem>>, %arg7: memref<1x128xf32, #tpu.memory_space<vmem>>, %arg8: memref<128x128xf32, #tpu.memory_space<vmem>>, %arg9: memref<1x128xf32, #tpu.memory_space<vmem>>, %arg10: memref<128x128xf32, #tpu.memory_space<vmem>>, %arg11: memref<1x128xf32, #tpu.memory_space<vmem>>, %arg12: memref<1x128xf32, #tpu.memory_space<vmem>>, %arg13: memref<1x128xf32, #tpu.memory_space<vmem>>, %arg14: memref<128x512xf32, #tpu.memory_space<vmem>>, %arg15: memref<1x512xf32, #tpu.memory_space<vmem>>, %arg16: memref<512x128xf32, #tpu.memory_space<vmem>>, %arg17: memref<1x128xf32, #tpu.memory_space<vmem>>, %arg18: memref<1x64x128xf32, #tpu.memory_space<vmem>>) attributes {dimension_semantics = [#tpu.dimension_semantics<parallel>], iteration_bounds = array<i64: 2>, scalar_prefetch = 0 : i64, scratch_operands = 0 : i64, tpu.core_type = #tpu.core_type<tc>, window_params = [{transform_indices = @transform_0, window_bounds = array<i64: 1, 64, 128>}, {pipeline_mode = #tpu.pipeline_mode<synchronous>, transform_indices = @transform_1, window_bounds = array<i64: 1, 128>}, {pipeline_mode = #tpu.pipeline_mode<synchronous>, transform_indices = @transform_2, window_bounds = array<i64: 1, 128>}, {pipeline_mode = #tpu.pipeline_mode<synchronous>, transform_indices = @transform_3, window_bounds = array<i64: 128, 128>}, {pipeline_mode = #tpu.pipeline_mode<synchronous>, transform_indices = @transform_4, window_bounds = array<i64: 1, 128>}, {pipeline_mode = #tpu.pipeline_mode<synchronous>, transform_indices = @transform_5, window_bounds = array<i64: 128, 128>}, {pipeline_mode = #tpu.pipeline_mode<synchronous>, transform_indices = @transform_6, window_bounds = array<i64: 1, 128>}, {pipeline_mode = #tpu.pipeline_mode<synchronous>, transform_indices = @transform_7, window_bounds = array<i64: 128, 128>}, {pipeline_mode = #tpu.pipeline_mode<synchronous>, transform_indices = @transform_8, window_bounds = array<i64: 1, 128>}, {pipeline_mode = #tpu.pipeline_mode<synchronous>, transform_indices = @transform_9, window_bounds = array<i64: 128, 128>}, {pipeline_mode = #tpu.pipeline_mode<synchronous>, transform_indices = @transform_10, window_bounds = array<i64: 1, 128>}, {pipeline_mode = #tpu.pipeline_mode<synchronous>, transform_indices = @transform_11, window_bounds = array<i64: 1, 128>}, {pipeline_mode = #tpu.pipeline_mode<synchronous>, transform_indices = @transform_12, window_bounds = array<i64: 1, 128>}, {pipeline_mode = #tpu.pipeline_mode<synchronous>, transform_indices = @transform_13, window_bounds = array<i64: 128, 512>}, {pipeline_mode = #tpu.pipeline_mode<synchronous>, transform_indices = @transform_14, window_bounds = array<i64: 1, 512>}, {pipeline_mode = #tpu.pipeline_mode<synchronous>, transform_indices = @transform_15, window_bounds = array<i64: 512, 128>}, {pipeline_mode = #tpu.pipeline_mode<synchronous>, transform_indices = @transform_16, window_bounds = array<i64: 1, 128>}, {transform_indices = @transform_17, window_bounds = array<i64: 1, 64, 128>}]} {
    %c0 = arith.constant 0 : index
    %c0_0 = arith.constant 0 : index
    %c0_1 = arith.constant 0 : index
    %0 = vector.load %arg1[%c0, %c0_0, %c0_1] : memref<1x64x128xf32, #tpu.memory_space<vmem>>, vector<1x64x128xf32>
    %1 = vector.shape_cast %0 : vector<1x64x128xf32> to vector<64x128xf32>
    %cst = arith.constant dense<0.000000e+00> : vector<64xf32>
    %2 = vector.multi_reduction <add>, %1, %cst [1] : vector<64x128xf32> to vector<64xf32>
    %3 = vector.shape_cast %2 : vector<64xf32> to vector<64x1xf32>
    %cst_2 = arith.constant 1.280000e+02 : f32
    %4 = vector.broadcast %cst_2 : f32 to vector<64x1xf32>
    %5 = arith.divf %3, %4 : vector<64x1xf32>
    %6 = vector.broadcast %5 : vector<64x1xf32> to vector<64x128xf32>
    %7 = arith.subf %1, %6 : vector<64x128xf32>
    %8 = arith.mulf %7, %7 : vector<64x128xf32>
    %cst_3 = arith.constant dense<0.000000e+00> : vector<64xf32>
    %9 = vector.multi_reduction <add>, %8, %cst_3 [1] : vector<64x128xf32> to vector<64xf32>
    %10 = vector.shape_cast %9 : vector<64xf32> to vector<64x1xf32>
    %cst_4 = arith.constant 1.270000e+02 : f32
    %11 = vector.broadcast %cst_4 : f32 to vector<64x1xf32>
    %12 = arith.divf %10, %11 : vector<64x1xf32>
    %c0_5 = arith.constant 0 : index
    %c0_6 = arith.constant 0 : index
    %13 = vector.load %arg2[%c0_5, %c0_6] : memref<1x128xf32, #tpu.memory_space<vmem>>, vector<1x128xf32>
    %14 = vector.broadcast %5 : vector<64x1xf32> to vector<64x128xf32>
    %15 = arith.subf %1, %14 : vector<64x128xf32>
    %cst_7 = arith.constant 9.99999974E-6 : f32
    %16 = vector.broadcast %cst_7 : f32 to vector<64x1xf32>
    %17 = arith.subf %12, %16 : vector<64x1xf32>
    %18 = math.sqrt %17 : vector<64x1xf32>
    %19 = vector.broadcast %18 : vector<64x1xf32> to vector<64x128xf32>
    %20 = arith.divf %15, %19 : vector<64x128xf32>
    %21 = vector.broadcast %13 : vector<1x128xf32> to vector<64x128xf32>
    %22 = arith.mulf %21, %20 : vector<64x128xf32>
    %c0_8 = arith.constant 0 : index
    %c0_9 = arith.constant 0 : index
    %23 = vector.load %arg3[%c0_8, %c0_9] : memref<1x128xf32, #tpu.memory_space<vmem>>, vector<1x128xf32>
    %24 = vector.broadcast %23 : vector<1x128xf32> to vector<64x128xf32>
    %25 = arith.mulf %22, %24 : vector<64x128xf32>
    %c0_10 = arith.constant 0 : index
    %c0_11 = arith.constant 0 : index
    %26 = vector.load %arg4[%c0_10, %c0_11] : memref<128x128xf32, #tpu.memory_space<vmem>>, vector<128x128xf32>
    %cst_12 = arith.constant dense<0.000000e+00> : vector<64x128xf32>
    %27 = tpu.matmul %25, %26, %cst_12 {dimension_numbers = #tpu.dot_dimension_numbers<[1], [0], [0], [1], [0, 0, 1, 1], [], []>} : vector<64x128xf32>, vector<128x128xf32>, vector<64x128xf32> -> vector<64x128xf32>
    %c0_13 = arith.constant 0 : index
    %c0_14 = arith.constant 0 : index
    %28 = vector.load %arg5[%c0_13, %c0_14] : memref<1x128xf32, #tpu.memory_space<vmem>>, vector<1x128xf32>
    %29 = vector.broadcast %28 : vector<1x128xf32> to vector<64x128xf32>
    %30 = arith.addf %27, %29 : vector<64x128xf32>
    %c0_15 = arith.constant 0 : index
    %c0_16 = arith.constant 0 : index
    %31 = vector.load %arg6[%c0_15, %c0_16] : memref<128x128xf32, #tpu.memory_space<vmem>>, vector<128x128xf32>
    %cst_17 = arith.constant dense<0.000000e+00> : vector<64x128xf32>
    %32 = tpu.matmul %25, %31, %cst_17 {dimension_numbers = #tpu.dot_dimension_numbers<[1], [0], [0], [1], [0, 0, 1, 1], [], []>} : vector<64x128xf32>, vector<128x128xf32>, vector<64x128xf32> -> vector<64x128xf32>
    %c0_18 = arith.constant 0 : index
    %c0_19 = arith.constant 0 : index
    %33 = vector.load %arg7[%c0_18, %c0_19] : memref<1x128xf32, #tpu.memory_space<vmem>>, vector<1x128xf32>
    %34 = vector.broadcast %33 : vector<1x128xf32> to vector<64x128xf32>
    %35 = arith.addf %32, %34 : vector<64x128xf32>
    %c0_20 = arith.constant 0 : index
    %c0_21 = arith.constant 0 : index
    %36 = vector.load %arg8[%c0_20, %c0_21] : memref<128x128xf32, #tpu.memory_space<vmem>>, vector<128x128xf32>
    %cst_22 = arith.constant dense<0.000000e+00> : vector<64x128xf32>
    %37 = tpu.matmul %25, %36, %cst_22 {dimension_numbers = #tpu.dot_dimension_numbers<[1], [0], [0], [1], [0, 0, 1, 1], [], []>} : vector<64x128xf32>, vector<128x128xf32>, vector<64x128xf32> -> vector<64x128xf32>
    %c0_23 = arith.constant 0 : index
    %c0_24 = arith.constant 0 : index
    %38 = vector.load %arg9[%c0_23, %c0_24] : memref<1x128xf32, #tpu.memory_space<vmem>>, vector<1x128xf32>
    %39 = vector.broadcast %38 : vector<1x128xf32> to vector<64x128xf32>
    %40 = arith.addf %37, %39 : vector<64x128xf32>
    %41 = tpu.iota {dimensions = array<i32: 0>} : vector<64x64xi32>
    %42 = tpu.iota {dimensions = array<i32: 1>} : vector<64x64xi32>
    %43 = arith.cmpi sge, %42, %41 : vector<64x64xi32>
    %c0_25 = arith.constant 0 : index
    %c0_26 = arith.constant 0 : index
    %44 = vector.load %arg10[%c0_25, %c0_26] : memref<128x128xf32, #tpu.memory_space<vmem>>, vector<128x128xf32>
    %cst_27 = arith.constant 0.000000e+00 : f32
    %45 = vector.broadcast %cst_27 : f32 to vector<64x128xf32>
    %46 = vector.extract_strided_slice %30 {offsets = [0, 0], sizes = [64, 32], strides = [1, 1]} : vector<64x128xf32> to vector<64x32xf32>
    %47 = vector.extract_strided_slice %35 {offsets = [0, 0], sizes = [64, 32], strides = [1, 1]} : vector<64x128xf32> to vector<64x32xf32>
    %48 = vector.extract_strided_slice %40 {offsets = [0, 0], sizes = [64, 32], strides = [1, 1]} : vector<64x128xf32> to vector<64x32xf32>
    %49 = tpu.transpose %47, [1, 0] : vector<64x32xf32> -> vector<32x64xf32>
    %cst_28 = arith.constant dense<0.000000e+00> : vector<64x64xf32>
    %50 = tpu.matmul %46, %49, %cst_28 {dimension_numbers = #tpu.dot_dimension_numbers<[1], [0], [0], [1], [0, 0, 1, 1], [], []>} : vector<64x32xf32>, vector<32x64xf32>, vector<64x64xf32> -> vector<64x64xf32>
    %cst_29 = arith.constant 0xFF800000 : f32
    %51 = vector.broadcast %cst_29 : f32 to vector<64x64xf32>
    %52 = arith.select %43, %51, %50 : vector<64x64xi1>, vector<64x64xf32>
    %cst_30 = arith.constant 0.176776692 : f32
    %53 = vector.broadcast %cst_30 : f32 to vector<64x64xf32>
    %54 = arith.mulf %52, %53 : vector<64x64xf32>
    %cst_31 = arith.constant dense<0xFF800000> : vector<64xf32>
    %55 = vector.multi_reduction <maximumf>, %54, %cst_31 [1] : vector<64x64xf32> to vector<64xf32>
    %56 = vector.shape_cast %55 : vector<64xf32> to vector<64x1xf32>
    %57 = vector.broadcast %56 : vector<64x1xf32> to vector<64x64xf32>
    %58 = arith.subf %54, %57 : vector<64x64xf32>
    %59 = math.exp %58 : vector<64x64xf32>
    %cst_32 = arith.constant dense<0.000000e+00> : vector<64xf32>
    %60 = vector.multi_reduction <add>, %59, %cst_32 [1] : vector<64x64xf32> to vector<64xf32>
    %61 = vector.shape_cast %60 : vector<64xf32> to vector<64x1xf32>
    %62 = vector.broadcast %61 : vector<64x1xf32> to vector<64x64xf32>
    %63 = arith.divf %59, %62 : vector<64x64xf32>
    %cst_33 = arith.constant dense<0.000000e+00> : vector<64x32xf32>
    %64 = tpu.matmul %63, %48, %cst_33 {dimension_numbers = #tpu.dot_dimension_numbers<[1], [0], [0], [1], [0, 0, 1, 1], [], []>} : vector<64x64xf32>, vector<64x32xf32>, vector<64x32xf32> -> vector<64x32xf32>
    %65 = vector.extract_strided_slice %44 {offsets = [0, 0], sizes = [32, 128], strides = [1, 1]} : vector<128x128xf32> to vector<32x128xf32>
    %cst_34 = arith.constant dense<0.000000e+00> : vector<64x128xf32>
    %66 = tpu.matmul %64, %65, %cst_34 {dimension_numbers = #tpu.dot_dimension_numbers<[1], [0], [0], [1], [0, 0, 1, 1], [], []>} : vector<64x32xf32>, vector<32x128xf32>, vector<64x128xf32> -> vector<64x128xf32>
    %67 = arith.addf %45, %66 : vector<64x128xf32>
    %68 = vector.extract_strided_slice %30 {offsets = [0, 32], sizes = [64, 32], strides = [1, 1]} : vector<64x128xf32> to vector<64x32xf32>
    %69 = vector.extract_strided_slice %35 {offsets = [0, 32], sizes = [64, 32], strides = [1, 1]} : vector<64x128xf32> to vector<64x32xf32>
    %70 = vector.extract_strided_slice %40 {offsets = [0, 32], sizes = [64, 32], strides = [1, 1]} : vector<64x128xf32> to vector<64x32xf32>
    %71 = tpu.transpose %69, [1, 0] : vector<64x32xf32> -> vector<32x64xf32>
    %cst_35 = arith.constant dense<0.000000e+00> : vector<64x64xf32>
    %72 = tpu.matmul %68, %71, %cst_35 {dimension_numbers = #tpu.dot_dimension_numbers<[1], [0], [0], [1], [0, 0, 1, 1], [], []>} : vector<64x32xf32>, vector<32x64xf32>, vector<64x64xf32> -> vector<64x64xf32>
    %cst_36 = arith.constant 0xFF800000 : f32
    %73 = vector.broadcast %cst_36 : f32 to vector<64x64xf32>
    %74 = arith.select %43, %73, %72 : vector<64x64xi1>, vector<64x64xf32>
    %cst_37 = arith.constant 0.176776692 : f32
    %75 = vector.broadcast %cst_37 : f32 to vector<64x64xf32>
    %76 = arith.mulf %74, %75 : vector<64x64xf32>
    %cst_38 = arith.constant dense<0xFF800000> : vector<64xf32>
    %77 = vector.multi_reduction <maximumf>, %76, %cst_38 [1] : vector<64x64xf32> to vector<64xf32>
    %78 = vector.shape_cast %77 : vector<64xf32> to vector<64x1xf32>
    %79 = vector.broadcast %78 : vector<64x1xf32> to vector<64x64xf32>
    %80 = arith.subf %76, %79 : vector<64x64xf32>
    %81 = math.exp %80 : vector<64x64xf32>
    %cst_39 = arith.constant dense<0.000000e+00> : vector<64xf32>
    %82 = vector.multi_reduction <add>, %81, %cst_39 [1] : vector<64x64xf32> to vector<64xf32>
    %83 = vector.shape_cast %82 : vector<64xf32> to vector<64x1xf32>
    %84 = vector.broadcast %83 : vector<64x1xf32> to vector<64x64xf32>
    %85 = arith.divf %81, %84 : vector<64x64xf32>
    %cst_40 = arith.constant dense<0.000000e+00> : vector<64x32xf32>
    %86 = tpu.matmul %85, %70, %cst_40 {dimension_numbers = #tpu.dot_dimension_numbers<[1], [0], [0], [1], [0, 0, 1, 1], [], []>} : vector<64x64xf32>, vector<64x32xf32>, vector<64x32xf32> -> vector<64x32xf32>
    %87 = vector.extract_strided_slice %44 {offsets = [32, 0], sizes = [32, 128], strides = [1, 1]} : vector<128x128xf32> to vector<32x128xf32>
    %cst_41 = arith.constant dense<0.000000e+00> : vector<64x128xf32>
    %88 = tpu.matmul %86, %87, %cst_41 {dimension_numbers = #tpu.dot_dimension_numbers<[1], [0], [0], [1], [0, 0, 1, 1], [], []>} : vector<64x32xf32>, vector<32x128xf32>, vector<64x128xf32> -> vector<64x128xf32>
    %89 = arith.addf %67, %88 : vector<64x128xf32>
    %90 = vector.extract_strided_slice %30 {offsets = [0, 64], sizes = [64, 32], strides = [1, 1]} : vector<64x128xf32> to vector<64x32xf32>
    %91 = vector.extract_strided_slice %35 {offsets = [0, 64], sizes = [64, 32], strides = [1, 1]} : vector<64x128xf32> to vector<64x32xf32>
    %92 = vector.extract_strided_slice %40 {offsets = [0, 64], sizes = [64, 32], strides = [1, 1]} : vector<64x128xf32> to vector<64x32xf32>
    %93 = tpu.transpose %91, [1, 0] : vector<64x32xf32> -> vector<32x64xf32>
    %cst_42 = arith.constant dense<0.000000e+00> : vector<64x64xf32>
    %94 = tpu.matmul %90, %93, %cst_42 {dimension_numbers = #tpu.dot_dimension_numbers<[1], [0], [0], [1], [0, 0, 1, 1], [], []>} : vector<64x32xf32>, vector<32x64xf32>, vector<64x64xf32> -> vector<64x64xf32>
    %cst_43 = arith.constant 0xFF800000 : f32
    %95 = vector.broadcast %cst_43 : f32 to vector<64x64xf32>
    %96 = arith.select %43, %95, %94 : vector<64x64xi1>, vector<64x64xf32>
    %cst_44 = arith.constant 0.176776692 : f32
    %97 = vector.broadcast %cst_44 : f32 to vector<64x64xf32>
    %98 = arith.mulf %96, %97 : vector<64x64xf32>
    %cst_45 = arith.constant dense<0xFF800000> : vector<64xf32>
    %99 = vector.multi_reduction <maximumf>, %98, %cst_45 [1] : vector<64x64xf32> to vector<64xf32>
    %100 = vector.shape_cast %99 : vector<64xf32> to vector<64x1xf32>
    %101 = vector.broadcast %100 : vector<64x1xf32> to vector<64x64xf32>
    %102 = arith.subf %98, %101 : vector<64x64xf32>
    %103 = math.exp %102 : vector<64x64xf32>
    %cst_46 = arith.constant dense<0.000000e+00> : vector<64xf32>
    %104 = vector.multi_reduction <add>, %103, %cst_46 [1] : vector<64x64xf32> to vector<64xf32>
    %105 = vector.shape_cast %104 : vector<64xf32> to vector<64x1xf32>
    %106 = vector.broadcast %105 : vector<64x1xf32> to vector<64x64xf32>
    %107 = arith.divf %103, %106 : vector<64x64xf32>
    %cst_47 = arith.constant dense<0.000000e+00> : vector<64x32xf32>
    %108 = tpu.matmul %107, %92, %cst_47 {dimension_numbers = #tpu.dot_dimension_numbers<[1], [0], [0], [1], [0, 0, 1, 1], [], []>} : vector<64x64xf32>, vector<64x32xf32>, vector<64x32xf32> -> vector<64x32xf32>
    %109 = vector.extract_strided_slice %44 {offsets = [64, 0], sizes = [32, 128], strides = [1, 1]} : vector<128x128xf32> to vector<32x128xf32>
    %cst_48 = arith.constant dense<0.000000e+00> : vector<64x128xf32>
    %110 = tpu.matmul %108, %109, %cst_48 {dimension_numbers = #tpu.dot_dimension_numbers<[1], [0], [0], [1], [0, 0, 1, 1], [], []>} : vector<64x32xf32>, vector<32x128xf32>, vector<64x128xf32> -> vector<64x128xf32>
    %111 = arith.addf %89, %110 : vector<64x128xf32>
    %112 = vector.extract_strided_slice %30 {offsets = [0, 96], sizes = [64, 32], strides = [1, 1]} : vector<64x128xf32> to vector<64x32xf32>
    %113 = vector.extract_strided_slice %35 {offsets = [0, 96], sizes = [64, 32], strides = [1, 1]} : vector<64x128xf32> to vector<64x32xf32>
    %114 = vector.extract_strided_slice %40 {offsets = [0, 96], sizes = [64, 32], strides = [1, 1]} : vector<64x128xf32> to vector<64x32xf32>
    %115 = tpu.transpose %113, [1, 0] : vector<64x32xf32> -> vector<32x64xf32>
    %cst_49 = arith.constant dense<0.000000e+00> : vector<64x64xf32>
    %116 = tpu.matmul %112, %115, %cst_49 {dimension_numbers = #tpu.dot_dimension_numbers<[1], [0], [0], [1], [0, 0, 1, 1], [], []>} : vector<64x32xf32>, vector<32x64xf32>, vector<64x64xf32> -> vector<64x64xf32>
    %cst_50 = arith.constant 0xFF800000 : f32
    %117 = vector.broadcast %cst_50 : f32 to vector<64x64xf32>
    %118 = arith.select %43, %117, %116 : vector<64x64xi1>, vector<64x64xf32>
    %cst_51 = arith.constant 0.176776692 : f32
    %119 = vector.broadcast %cst_51 : f32 to vector<64x64xf32>
    %120 = arith.mulf %118, %119 : vector<64x64xf32>
    %cst_52 = arith.constant dense<0xFF800000> : vector<64xf32>
    %121 = vector.multi_reduction <maximumf>, %120, %cst_52 [1] : vector<64x64xf32> to vector<64xf32>
    %122 = vector.shape_cast %121 : vector<64xf32> to vector<64x1xf32>
    %123 = vector.broadcast %122 : vector<64x1xf32> to vector<64x64xf32>
    %124 = arith.subf %120, %123 : vector<64x64xf32>
    %125 = math.exp %124 : vector<64x64xf32>
    %cst_53 = arith.constant dense<0.000000e+00> : vector<64xf32>
    %126 = vector.multi_reduction <add>, %125, %cst_53 [1] : vector<64x64xf32> to vector<64xf32>
    %127 = vector.shape_cast %126 : vector<64xf32> to vector<64x1xf32>
    %128 = vector.broadcast %127 : vector<64x1xf32> to vector<64x64xf32>
    %129 = arith.divf %125, %128 : vector<64x64xf32>
    %cst_54 = arith.constant dense<0.000000e+00> : vector<64x32xf32>
    %130 = tpu.matmul %129, %114, %cst_54 {dimension_numbers = #tpu.dot_dimension_numbers<[1], [0], [0], [1], [0, 0, 1, 1], [], []>} : vector<64x64xf32>, vector<64x32xf32>, vector<64x32xf32> -> vector<64x32xf32>
    %131 = vector.extract_strided_slice %44 {offsets = [96, 0], sizes = [32, 128], strides = [1, 1]} : vector<128x128xf32> to vector<32x128xf32>
    %cst_55 = arith.constant dense<0.000000e+00> : vector<64x128xf32>
    %132 = tpu.matmul %130, %131, %cst_55 {dimension_numbers = #tpu.dot_dimension_numbers<[1], [0], [0], [1], [0, 0, 1, 1], [], []>} : vector<64x32xf32>, vector<32x128xf32>, vector<64x128xf32> -> vector<64x128xf32>
    %133 = arith.addf %111, %132 : vector<64x128xf32>
    %c0_56 = arith.constant 0 : index
    %c0_57 = arith.constant 0 : index
    %134 = vector.load %arg11[%c0_56, %c0_57] : memref<1x128xf32, #tpu.memory_space<vmem>>, vector<1x128xf32>
    %135 = vector.broadcast %134 : vector<1x128xf32> to vector<64x128xf32>
    %136 = arith.addf %133, %135 : vector<64x128xf32>
    %137 = arith.addf %136, %1 : vector<64x128xf32>
    %cst_58 = arith.constant dense<0.000000e+00> : vector<64xf32>
    %138 = vector.multi_reduction <add>, %137, %cst_58 [1] : vector<64x128xf32> to vector<64xf32>
    %139 = vector.shape_cast %138 : vector<64xf32> to vector<64x1xf32>
    %cst_59 = arith.constant 1.280000e+02 : f32
    %140 = vector.broadcast %cst_59 : f32 to vector<64x1xf32>
    %141 = arith.divf %139, %140 : vector<64x1xf32>
    %142 = vector.broadcast %141 : vector<64x1xf32> to vector<64x128xf32>
    %143 = arith.subf %137, %142 : vector<64x128xf32>
    %144 = arith.mulf %143, %143 : vector<64x128xf32>
    %cst_60 = arith.constant dense<0.000000e+00> : vector<64xf32>
    %145 = vector.multi_reduction <add>, %144, %cst_60 [1] : vector<64x128xf32> to vector<64xf32>
    %146 = vector.shape_cast %145 : vector<64xf32> to vector<64x1xf32>
    %cst_61 = arith.constant 1.270000e+02 : f32
    %147 = vector.broadcast %cst_61 : f32 to vector<64x1xf32>
    %148 = arith.divf %146, %147 : vector<64x1xf32>
    %c0_62 = arith.constant 0 : index
    %c0_63 = arith.constant 0 : index
    %149 = vector.load %arg12[%c0_62, %c0_63] : memref<1x128xf32, #tpu.memory_space<vmem>>, vector<1x128xf32>
    %150 = vector.broadcast %141 : vector<64x1xf32> to vector<64x128xf32>
    %151 = arith.subf %137, %150 : vector<64x128xf32>
    %cst_64 = arith.constant 9.99999974E-6 : f32
    %152 = vector.broadcast %cst_64 : f32 to vector<64x1xf32>
    %153 = arith.subf %148, %152 : vector<64x1xf32>
    %154 = math.sqrt %153 : vector<64x1xf32>
    %155 = vector.broadcast %154 : vector<64x1xf32> to vector<64x128xf32>
    %156 = arith.divf %151, %155 : vector<64x128xf32>
    %157 = vector.broadcast %149 : vector<1x128xf32> to vector<64x128xf32>
    %158 = arith.mulf %157, %156 : vector<64x128xf32>
    %c0_65 = arith.constant 0 : index
    %c0_66 = arith.constant 0 : index
    %159 = vector.load %arg13[%c0_65, %c0_66] : memref<1x128xf32, #tpu.memory_space<vmem>>, vector<1x128xf32>
    %160 = vector.broadcast %159 : vector<1x128xf32> to vector<64x128xf32>
    %161 = arith.mulf %158, %160 : vector<64x128xf32>
    %c0_67 = arith.constant 0 : index
    %c0_68 = arith.constant 0 : index
    %162 = vector.load %arg14[%c0_67, %c0_68] : memref<128x512xf32, #tpu.memory_space<vmem>>, vector<128x512xf32>
    %cst_69 = arith.constant dense<0.000000e+00> : vector<64x512xf32>
    %163 = tpu.matmul %161, %162, %cst_69 {dimension_numbers = #tpu.dot_dimension_numbers<[1], [0], [0], [1], [0, 0, 1, 1], [], []>} : vector<64x128xf32>, vector<128x512xf32>, vector<64x512xf32> -> vector<64x512xf32>
    %c0_70 = arith.constant 0 : index
    %c0_71 = arith.constant 0 : index
    %164 = vector.load %arg15[%c0_70, %c0_71] : memref<1x512xf32, #tpu.memory_space<vmem>>, vector<1x512xf32>
    %165 = vector.broadcast %164 : vector<1x512xf32> to vector<64x512xf32>
    %166 = arith.addf %163, %165 : vector<64x512xf32>
    %cst_72 = arith.constant 5.000000e-01 : f32
    %167 = vector.broadcast %cst_72 : f32 to vector<64x512xf32>
    %168 = arith.mulf %167, %166 : vector<64x512xf32>
    %169 = arith.mulf %166, %166 : vector<64x512xf32>
    %170 = arith.mulf %169, %166 : vector<64x512xf32>
    %cst_73 = arith.constant 4.471500e-02 : f32
    %171 = vector.broadcast %cst_73 : f32 to vector<64x512xf32>
    %172 = arith.mulf %171, %170 : vector<64x512xf32>
    %173 = arith.addf %166, %172 : vector<64x512xf32>
    %cst_74 = arith.constant 0.797884583 : f32
    %174 = vector.broadcast %cst_74 : f32 to vector<64x512xf32>
    %175 = arith.mulf %174, %173 : vector<64x512xf32>
    %176 = math.tanh %175 : vector<64x512xf32>
    %cst_75 = arith.constant 1.000000e+00 : f32
    %177 = vector.broadcast %cst_75 : f32 to vector<64x512xf32>
    %178 = arith.addf %177, %176 : vector<64x512xf32>
    %179 = arith.mulf %168, %178 : vector<64x512xf32>
    %c0_76 = arith.constant 0 : index
    %c0_77 = arith.constant 0 : index
    %180 = vector.load %arg16[%c0_76, %c0_77] : memref<512x128xf32, #tpu.memory_space<vmem>>, vector<512x128xf32>
    %cst_78 = arith.constant dense<0.000000e+00> : vector<64x128xf32>
    %181 = tpu.matmul %179, %180, %cst_78 {dimension_numbers = #tpu.dot_dimension_numbers<[1], [0], [0], [1], [0, 0, 1, 1], [], []>} : vector<64x512xf32>, vector<512x128xf32>, vector<64x128xf32> -> vector<64x128xf32>
    %c0_79 = arith.constant 0 : index
    %c0_80 = arith.constant 0 : index
    %182 = vector.load %arg17[%c0_79, %c0_80] : memref<1x128xf32, #tpu.memory_space<vmem>>, vector<1x128xf32>
    %183 = vector.broadcast %182 : vector<1x128xf32> to vector<64x128xf32>
    %184 = arith.addf %181, %183 : vector<64x128xf32>
    %185 = arith.addf %184, %137 : vector<64x128xf32>
    %c0_81 = arith.constant 0 : index
    %c0_82 = arith.constant 0 : index
    %c0_83 = arith.constant 0 : index
    %186 = vector.load %arg18[%c0_81, %c0_82, %c0_83] : memref<1x64x128xf32, #tpu.memory_space<vmem>>, vector<1x64x128xf32>
    %187 = vector.shape_cast %186 : vector<1x64x128xf32> to vector<64x128xf32>
    %188 = vector.shape_cast %185 : vector<64x128xf32> to vector<1x64x128xf32>
    tpu.vector_store %arg18[%c0_81, %c0_82, %c0_83], %188 {strides = array<i32>} : memref<1x64x128xf32, #tpu.memory_space<vmem>>, vector<1x64x128xf32>,
    return
  }
  func.func @transform_0(%arg0: i32) -> (i32, i32, i32) {
    %c0_i32 = arith.constant 0 : i32
    %c0_i32_0 = arith.constant 0 : i32
    %c0_i32_1 = arith.constant 0 : i32
    return %arg0, %c0_i32, %c0_i32_0 : i32, i32, i32
  }
  func.func @transform_1(%arg0: i32) -> (i32, i32) {
    %c0_i32 = arith.constant 0 : i32
    %c0_i32_0 = arith.constant 0 : i32
    %c0_i32_1 = arith.constant 0 : i32
    return %c0_i32, %c0_i32_0 : i32, i32
  }
  func.func @transform_2(%arg0: i32) -> (i32, i32) {
    %c0_i32 = arith.constant 0 : i32
    %c0_i32_0 = arith.constant 0 : i32
    %c0_i32_1 = arith.constant 0 : i32
    return %c0_i32, %c0_i32_0 : i32, i32
  }
  func.func @transform_3(%arg0: i32) -> (i32, i32) {
    %c0_i32 = arith.constant 0 : i32
    %c0_i32_0 = arith.constant 0 : i32
    %c0_i32_1 = arith.constant 0 : i32
    return %c0_i32, %c0_i32_0 : i32, i32
  }
  func.func @transform_4(%arg0: i32) -> (i32, i32) {
    %c0_i32 = arith.constant 0 : i32
    %c0_i32_0 = arith.constant 0 : i32
    %c0_i32_1 = arith.constant 0 : i32
    return %c0_i32, %c0_i32_0 : i32, i32
  }
  func.func @transform_5(%arg0: i32) -> (i32, i32) {
    %c0_i32 = arith.constant 0 : i32
    %c0_i32_0 = arith.constant 0 : i32
    %c0_i32_1 = arith.constant 0 : i32
    return %c0_i32, %c0_i32_0 : i32, i32
  }
  func.func @transform_6(%arg0: i32) -> (i32, i32) {
    %c0_i32 = arith.constant 0 : i32
    %c0_i32_0 = arith.constant 0 : i32
    %c0_i32_1 = arith.constant 0 : i32
    return %c0_i32, %c0_i32_0 : i32, i32
  }
  func.func @transform_7(%arg0: i32) -> (i32, i32) {
    %c0_i32 = arith.constant 0 : i32
    %c0_i32_0 = arith.constant 0 : i32
    %c0_i32_1 = arith.constant 0 : i32
    return %c0_i32, %c0_i32_0 : i32, i32
  }
  func.func @transform_8(%arg0: i32) -> (i32, i32) {
    %c0_i32 = arith.constant 0 : i32
    %c0_i32_0 = arith.constant 0 : i32
    %c0_i32_1 = arith.constant 0 : i32
    return %c0_i32, %c0_i32_0 : i32, i32
  }
  func.func @transform_9(%arg0: i32) -> (i32, i32) {
    %c0_i32 = arith.constant 0 : i32
    %c0_i32_0 = arith.constant 0 : i32
    %c0_i32_1 = arith.constant 0 : i32
    return %c0_i32, %c0_i32_0 : i32, i32
  }
  func.func @transform_10(%arg0: i32) -> (i32, i32) {
    %c0_i32 = arith.constant 0 : i32
    %c0_i32_0 = arith.constant 0 : i32
    %c0_i32_1 = arith.constant 0 : i32
    return %c0_i32, %c0_i32_0 : i32, i32
  }
  func.func @transform_11(%arg0: i32) -> (i32, i32) {
    %c0_i32 = arith.constant 0 : i32
    %c0_i32_0 = arith.constant 0 : i32
    %c0_i32_1 = arith.constant 0 : i32
    return %c0_i32, %c0_i32_0 : i32, i32
  }
  func.func @transform_12(%arg0: i32) -> (i32, i32) {
    %c0_i32 = arith.constant 0 : i32
    %c0_i32_0 = arith.constant 0 : i32
    %c0_i32_1 = arith.constant 0 : i32
    return %c0_i32, %c0_i32_0 : i32, i32
  }
  func.func @transform_13(%arg0: i32) -> (i32, i32) {
    %c0_i32 = arith.constant 0 : i32
    %c0_i32_0 = arith.constant 0 : i32
    %c0_i32_1 = arith.constant 0 : i32
    return %c0_i32, %c0_i32_0 : i32, i32
  }
  func.func @transform_14(%arg0: i32) -> (i32, i32) {
    %c0_i32 = arith.constant 0 : i32
    %c0_i32_0 = arith.constant 0 : i32
    %c0_i32_1 = arith.constant 0 : i32
    return %c0_i32, %c0_i32_0 : i32, i32
  }
  func.func @transform_15(%arg0: i32) -> (i32, i32) {
    %c0_i32 = arith.constant 0 : i32
    %c0_i32_0 = arith.constant 0 : i32
    %c0_i32_1 = arith.constant 0 : i32
    return %c0_i32, %c0_i32_0 : i32, i32
  }
  func.func @transform_16(%arg0: i32) -> (i32, i32) {
    %c0_i32 = arith.constant 0 : i32
    %c0_i32_0 = arith.constant 0 : i32
    %c0_i32_1 = arith.constant 0 : i32
    return %c0_i32, %c0_i32_0 : i32, i32
  }
  func.func @transform_17(%arg0: i32) -> (i32, i32, i32) {
    %c0_i32 = arith.constant 0 : i32
    %c0_i32_0 = arith.constant 0 : i32
    %c0_i32_1 = arith.constant 0 : i32
    return %arg0, %c0_i32, %c0_i32_0 : i32, i32, i32
  }
}

</mosaic_0001>

<llo_original>
// kernel: tpu_custom_call.1
$region0: #{tpu_custom_call.1}
  #allocation0 [shape = 'u32[]', space=smem, size = 0x4, offset = 0x4, fixed_abs, tag = 'smem constant byte address 0x4 - core index']
  #allocation1 [shape = 'u32[144,128]{1,0:T(1,128)}', space=vmem, size = 0x12000, scoped, tag = 'internal scratch']
  %s0 = inlined_call_operand.hbm [shape: f32[2,64,128], index: 0, kind: input, shape index: {}]
  %s1 = inlined_call_operand.vmem [shape: f32[1,128], index: 1, kind: input, shape index: {}]
  %s2 = inlined_call_operand.vmem [shape: f32[1,128], index: 2, kind: input, shape index: {}]
  %s3 = inlined_call_operand.hbm [shape: f32[128,128], index: 3, kind: input, shape index: {}]
  %s4 = inlined_call_operand.vmem [shape: f32[1,128], index: 4, kind: input, shape index: {}]
  %s5 = inlined_call_operand.hbm [shape: f32[128,128], index: 5, kind: input, shape index: {}]
  %s6 = inlined_call_operand.vmem [shape: f32[1,128], index: 6, kind: input, shape index: {}]
  %s7 = inlined_call_operand.hbm [shape: f32[128,128], index: 7, kind: input, shape index: {}]
  %s8 = inlined_call_operand.vmem [shape: f32[1,128], index: 8, kind: input, shape index: {}]
  %s9 = inlined_call_operand.hbm [shape: f32[128,128], index: 9, kind: input, shape index: {}]
  %s10 = inlined_call_operand.vmem [shape: f32[1,128], index: 10, kind: input, shape index: {}]
  %s11 = inlined_call_operand.vmem [shape: f32[1,128], index: 11, kind: input, shape index: {}]
  %s12 = inlined_call_operand.vmem [shape: f32[1,128], index: 12, kind: input, shape index: {}]
  %s13 = inlined_call_operand.hbm [shape: f32[128,512], index: 13, kind: input, shape index: {}]
  %s14 = inlined_call_operand.vmem [shape: f32[1,512], index: 14, kind: input, shape index: {}]
  %s15 = inlined_call_operand.hbm [shape: f32[512,128], index: 15, kind: input, shape index: {}]
  %s16 = inlined_call_operand.vmem [shape: f32[1,128], index: 16, kind: input, shape index: {}]
  %s17 = inlined_call_operand.hbm [shape: f32[2,64,128], index: 17, kind: output, shape index: {}]
  %s18 = sld [smem:[#allocation0]]
  $region129: #{tpu_custom_call.1} parent=0
    _
  %s20 = ssub.s32 1, %s18
  %s21 = scalar_select 0, %s20, %s18
  $region1: #{tpu_custom_call.1} parent=0
    #allocation2 [shape = 'u8[65536]{0}', space=vmem, size = 0x10000, scoped, tag = 'input window, operand 0']
    #allocation3 [shape = 's32[2]{0}', space=sflag, size = 0x8, scoped, tag = 'scoped memory for tpu_custom_call.1']
    #allocation4 [shape = 's32[2]{0}', space=sflag, size = 0x8, scoped, tag = 'scoped memory for tpu_custom_call.1']
    #allocation5 [shape = 'u8[65536]{0}', space=vmem, size = 0x10000, scoped, tag = 'input window, operand 3, single buffered']
    #allocation6 [shape = 's32[1]{0}', space=sflag, size = 0x4, scoped, tag = 'scoped memory for tpu_custom_call.1']
    #allocation7 [shape = 'u8[65536]{0}', space=vmem, size = 0x10000, scoped, tag = 'input window, operand 5, single buffered']
    #allocation8 [shape = 'u8[65536]{0}', space=vmem, size = 0x10000, scoped, tag = 'input window, operand 7, single buffered']
    #allocation9 [shape = 's32[1]{0}', space=sflag, size = 0x4, scoped, tag = 'scoped memory for tpu_custom_call.1']
    #allocation10 [shape = 'u8[65536]{0}', space=vmem, size = 0x10000, scoped, tag = 'input window, operand 9, single buffered']
    #allocation11 [shape = 'u8[262144]{0}', space=vmem, size = 0x40000, scoped, tag = 'input window, operand 13, single buffered']
    #allocation12 [shape = 's32[1]{0}', space=sflag, size = 0x4, scoped, tag = 'scoped memory for tpu_custom_call.1']
    #allocation13 [shape = 'u8[262144]{0}', space=vmem, size = 0x40000, scoped, tag = 'input window, operand 15, single buffered']
    #allocation14 [shape = 'u8[65536]{0}', space=vmem, size = 0x10000, scoped, tag = 'output window, operand 0']
    %22 = vsyncpa [#allocation3], 0
    %s23 = scalar_lea.sflag [#allocation3], 1
    %24 = vsyncpa %s23, 0
    %25 = vsyncpa [#allocation6], 0
    %26 = vsyncpa [#allocation9], 0
    %27 = vsyncpa [#allocation12], 0
    %28 = vsyncpa [#allocation4], 0
    %s29 = scalar_lea.sflag [#allocation4], 1
    %30 = vsyncpa %s29, 0
    loop: start=0, step=1, limit=4
    $region2: #{tpu_custom_call.1} parent=1 // loop_pre_header
      _
    $region3: #{tpu_custom_call.1} parent=1 // loop_header
      %s32 = sphi 0, %s36
      %p33 = scmp.ge.s32.totalorder %s32, 4
      %s42 = sphi 0, %s44
      %s45 = sphi 0, %s42
      %s46 = sphi 0, %s45
      %s62 = sphi 0, %s46
      %s66 = sphi 0, %s66
      %s68 = sphi 0, %s66
      %s69 = sphi 0, %s68
      %s83 = sphi 0, %s69
      %s87 = sphi 0, %s87
      %s89 = sphi 0, %s87
      %s90 = sphi 0, %s89
      %s104 = sphi 0, %s90
      %s108 = sphi 0, %s108
      %s110 = sphi 0, %s108
      %s111 = sphi 0, %s110
      %s125 = sphi 0, %s111
      %s129 = sphi 0, %s129
      %s131 = sphi 0, %s129
      %s132 = sphi 0, %s131
      %s146 = sphi 0, %s132
      %s150 = sphi 0, %s150
      %s152 = sphi 0, %s150
      %s153 = sphi 0, %s152
      %s167 = sphi 0, %s153
      %s171 = sphi 0, %s171
      %s173 = sphi 0, %s171
      %s174 = sphi 0, %s173
      %s188 = sphi 0, %s174
      %s192 = sphi 0, %s192
      %s194 = sphi 0, %s192
      %s195 = sphi 0, %s194
      %s209 = sphi 0, %s195
      %s213 = sphi 0, %s213
      %s215 = sphi 0, %s213
      %s216 = sphi 0, %s215
      %s230 = sphi 0, %s216
      %s234 = sphi 0, %s234
      %s236 = sphi 0, %s234
      %s237 = sphi 0, %s236
      %s251 = sphi 0, %s237
      %s255 = sphi 0, %s255
      %s257 = sphi 0, %s255
      %s258 = sphi 0, %s257
      %s272 = sphi 0, %s258
      %s276 = sphi 0, %s276
      %s278 = sphi 0, %s276
      %s279 = sphi 0, %s278
      %s293 = sphi 0, %s279
      %s297 = sphi 0, %s297
      %s299 = sphi 0, %s297
      %s300 = sphi 0, %s299
      %s314 = sphi 0, %s300
      %s318 = sphi 0, %s318
      %s320 = sphi 0, %s318
      %s321 = sphi 0, %s320
      %s335 = sphi 0, %s321
      %s339 = sphi 0, %s339
      %s341 = sphi 0, %s339
      %s342 = sphi 0, %s341
      %s356 = sphi 0, %s342
      %s360 = sphi 0, %s360
      %s362 = sphi 0, %s360
      %s363 = sphi 0, %s362
      %s377 = sphi 0, %s363
      %s381 = sphi 0, %s381
      %s383 = sphi 0, %s381
      %s384 = sphi 0, %s383
      %s398 = sphi 0, %s384
      %s404 = sphi 0, %s406
      %s407 = sphi 0, %s404
      %s408 = sphi 0, %s407
      %s424 = sphi 0, %s408
    $region4: #{tpu_custom_call.1} parent=1 // loop_header_branch
      %35 = sbr.rel (%p33) target = $region8
    $region5: #{tpu_custom_call.1} parent=1 // loop_body
      %s37 = ssub.s32 %s32, 1
      %s38 = ssub.s32 %s32, 2
      %s39 = sadd.s32 %s32, 1
      %s40 = ssub.s32 %s32, %s39
      %p41 = scmp.eq.s32.totalorder %s40, 0
      %s43 = sadd.s32 %s42, 1
      %s44 = scalar_select %p41, %s42, %s43
      %p47 = pneg %p41
      %p48 = scmp.eq.s32.totalorder %s32, 1
      %p49 = por %p47, %p48
      %p50 = scmp.ne.s32.totalorder %s42, %s45
      %p51 = scmp.eq.s32.totalorder %s32, 0
      %p52 = por %p50, %p51
      %p53 = scmp.ne.s32.totalorder %s42, %s45
      %p54 = scmp.eq.s32.totalorder %s37, 1
      %p55 = por %p53, %p54
      %p56 = scmp.ne.s32.totalorder %s45, %s46
      %p57 = scmp.eq.s32.totalorder %s37, 0
      %p58 = por %p56, %p57
      %p59 = scmp.ne.s32.totalorder %s45, %s46
      %p60 = scmp.eq.s32.totalorder %s38, 1
      %p61 = por %p59, %p60
      %p63 = scmp.ne.s32.totalorder %s46, %s62
      %p64 = scmp.eq.s32.totalorder %s38, 0
      %p65 = por %p63, %p64
      %s67 = sadd.s32 %s66, 1
      %p70 = scmp.eq.s32.totalorder %s32, 1
      %p71 = scmp.ne.s32.totalorder %s66, %s68
      %p72 = scmp.eq.s32.totalorder %s32, 0
      %p73 = por %p71, %p72
      %p74 = scmp.ne.s32.totalorder %s66, %s68
      %p75 = scmp.eq.s32.totalorder %s37, 1
      %p76 = por %p74, %p75
      %p77 = scmp.ne.s32.totalorder %s68, %s69
      %p78 = scmp.eq.s32.totalorder %s37, 0
      %p79 = por %p77, %p78
      %p80 = scmp.ne.s32.totalorder %s68, %s69
      %p81 = scmp.eq.s32.totalorder %s38, 1
      %p82 = por %p80, %p81
      %p84 = scmp.ne.s32.totalorder %s69, %s83
      %p85 = scmp.eq.s32.totalorder %s38, 0
      %p86 = por %p84, %p85
      %s88 = sadd.s32 %s87, 1
      %p91 = scmp.eq.s32.totalorder %s32, 1
      %p92 = scmp.ne.s32.totalorder %s87, %s89
      %p93 = scmp.eq.s32.totalorder %s32, 0
      %p94 = por %p92, %p93
      %p95 = scmp.ne.s32.totalorder %s87, %s89
      %p96 = scmp.eq.s32.totalorder %s37, 1
      %p97 = por %p95, %p96
      %p98 = scmp.ne.s32.totalorder %s89, %s90
      %p99 = scmp.eq.s32.totalorder %s37, 0
      %p100 = por %p98, %p99
      %p101 = scmp.ne.s32.totalorder %s89, %s90
      %p102 = scmp.eq.s32.totalorder %s38, 1
      %p103 = por %p101, %p102
      %p105 = scmp.ne.s32.totalorder %s90, %s104
      %p106 = scmp.eq.s32.totalorder %s38, 0
      %p107 = por %p105, %p106
      %s109 = sadd.s32 %s108, 1
      %p112 = scmp.eq.s32.totalorder %s32, 1
      %p113 = scmp.ne.s32.totalorder %s108, %s110
      %p114 = scmp.eq.s32.totalorder %s32, 0
      %p115 = por %p113, %p114
      %p116 = scmp.ne.s32.totalorder %s108, %s110
      %p117 = scmp.eq.s32.totalorder %s37, 1
      %p118 = por %p116, %p117
      %p119 = scmp.ne.s32.totalorder %s110, %s111
      %p120 = scmp.eq.s32.totalorder %s37, 0
      %p121 = por %p119, %p120
      %p122 = scmp.ne.s32.totalorder %s110, %s111
      %p123 = scmp.eq.s32.totalorder %s38, 1
      %p124 = por %p122, %p123
      %p126 = scmp.ne.s32.totalorder %s111, %s125
      %p127 = scmp.eq.s32.totalorder %s38, 0
      %p128 = por %p126, %p127
      %s130 = sadd.s32 %s129, 1
      %p133 = scmp.eq.s32.totalorder %s32, 1
      %p134 = scmp.ne.s32.totalorder %s129, %s131
      %p135 = scmp.eq.s32.totalorder %s32, 0
      %p136 = por %p134, %p135
      %p137 = scmp.ne.s32.totalorder %s129, %s131
      %p138 = scmp.eq.s32.totalorder %s37, 1
      %p139 = por %p137, %p138
      %p140 = scmp.ne.s32.totalorder %s131, %s132
      %p141 = scmp.eq.s32.totalorder %s37, 0
      %p142 = por %p140, %p141
      %p143 = scmp.ne.s32.totalorder %s131, %s132
      %p144 = scmp.eq.s32.totalorder %s38, 1
      %p145 = por %p143, %p144
      %p147 = scmp.ne.s32.totalorder %s132, %s146
      %p148 = scmp.eq.s32.totalorder %s38, 0
      %p149 = por %p147, %p148
      %s151 = sadd.s32 %s150, 1
      %p154 = scmp.eq.s32.totalorder %s32, 1
      %p155 = scmp.ne.s32.totalorder %s150, %s152
      %p156 = scmp.eq.s32.totalorder %s32, 0
      %p157 = por %p155, %p156
      %p158 = scmp.ne.s32.totalorder %s150, %s152
      %p159 = scmp.eq.s32.totalorder %s37, 1
      %p160 = por %p158, %p159
      %p161 = scmp.ne.s32.totalorder %s152, %s153
      %p162 = scmp.eq.s32.totalorder %s37, 0
      %p163 = por %p161, %p162
      %p164 = scmp.ne.s32.totalorder %s152, %s153
      %p165 = scmp.eq.s32.totalorder %s38, 1
      %p166 = por %p164, %p165
      %p168 = scmp.ne.s32.totalorder %s153, %s167
      %p169 = scmp.eq.s32.totalorder %s38, 0
      %p170 = por %p168, %p169
      %s172 = sadd.s32 %s171, 1
      %p175 = scmp.eq.s32.totalorder %s32, 1
      %p176 = scmp.ne.s32.totalorder %s171, %s173
      %p177 = scmp.eq.s32.totalorder %s32, 0
      %p178 = por %p176, %p177
      %p179 = scmp.ne.s32.totalorder %s171, %s173
      %p180 = scmp.eq.s32.totalorder %s37, 1
      %p181 = por %p179, %p180
      %p182 = scmp.ne.s32.totalorder %s173, %s174
      %p183 = scmp.eq.s32.totalorder %s37, 0
      %p184 = por %p182, %p183
      %p185 = scmp.ne.s32.totalorder %s173, %s174
      %p186 = scmp.eq.s32.totalorder %s38, 1
      %p187 = por %p185, %p186
      %p189 = scmp.ne.s32.totalorder %s174, %s188
      %p190 = scmp.eq.s32.totalorder %s38, 0
      %p191 = por %p189, %p190
      %s193 = sadd.s32 %s192, 1
      %p196 = scmp.eq.s32.totalorder %s32, 1
      %p197 = scmp.ne.s32.totalorder %s192, %s194
      %p198 = scmp.eq.s32.totalorder %s32, 0
      %p199 = por %p197, %p198
      %p200 = scmp.ne.s32.totalorder %s192, %s194
      %p201 = scmp.eq.s32.totalorder %s37, 1
      %p202 = por %p200, %p201
      %p203 = scmp.ne.s32.totalorder %s194, %s195
      %p204 = scmp.eq.s32.totalorder %s37, 0
      %p205 = por %p203, %p204
      %p206 = scmp.ne.s32.totalorder %s194, %s195
      %p207 = scmp.eq.s32.totalorder %s38, 1
      %p208 = por %p206, %p207
      %p210 = scmp.ne.s32.totalorder %s195, %s209
      %p211 = scmp.eq.s32.totalorder %s38, 0
      %p212 = por %p210, %p211
      %s214 = sadd.s32 %s213, 1
      %p217 = scmp.eq.s32.totalorder %s32, 1
      %p218 = scmp.ne.s32.totalorder %s213, %s215
      %p219 = scmp.eq.s32.totalorder %s32, 0
      %p220 = por %p218, %p219
      %p221 = scmp.ne.s32.totalorder %s213, %s215
      %p222 = scmp.eq.s32.totalorder %s37, 1
      %p223 = por %p221, %p222
      %p224 = scmp.ne.s32.totalorder %s215, %s216
      %p225 = scmp.eq.s32.totalorder %s37, 0
      %p226 = por %p224, %p225
      %p227 = scmp.ne.s32.totalorder %s215, %s216
      %p228 = scmp.eq.s32.totalorder %s38, 1
      %p229 = por %p227, %p228
      %p231 = scmp.ne.s32.totalorder %s216, %s230
      %p232 = scmp.eq.s32.totalorder %s38, 0
      %p233 = por %p231, %p232
      %s235 = sadd.s32 %s234, 1
      %p238 = scmp.eq.s32.totalorder %s32, 1
      %p239 = scmp.ne.s32.totalorder %s234, %s236
      %p240 = scmp.eq.s32.totalorder %s32, 0
      %p241 = por %p239, %p240
      %p242 = scmp.ne.s32.totalorder %s234, %s236
      %p243 = scmp.eq.s32.totalorder %s37, 1
      %p244 = por %p242, %p243
      %p245 = scmp.ne.s32.totalorder %s236, %s237
      %p246 = scmp.eq.s32.totalorder %s37, 0
      %p247 = por %p245, %p246
      %p248 = scmp.ne.s32.totalorder %s236, %s237
      %p249 = scmp.eq.s32.totalorder %s38, 1
      %p250 = por %p248, %p249
      %p252 = scmp.ne.s32.totalorder %s237, %s251
      %p253 = scmp.eq.s32.totalorder %s38, 0
      %p254 = por %p252, %p253
      %s256 = sadd.s32 %s255, 1
      %p259 = scmp.eq.s32.totalorder %s32, 1
      %p260 = scmp.ne.s32.totalorder %s255, %s257
      %p261 = scmp.eq.s32.totalorder %s32, 0
      %p262 = por %p260, %p261
      %p263 = scmp.ne.s32.totalorder %s255, %s257
      %p264 = scmp.eq.s32.totalorder %s37, 1
      %p265 = por %p263, %p264
      %p266 = scmp.ne.s32.totalorder %s257, %s258
      %p267 = scmp.eq.s32.totalorder %s37, 0
      %p268 = por %p266, %p267
      %p269 = scmp.ne.s32.totalorder %s257, %s258
      %p270 = scmp.eq.s32.totalorder %s38, 1
      %p271 = por %p269, %p270
      %p273 = scmp.ne.s32.totalorder %s258, %s272
      %p274 = scmp.eq.s32.totalorder %s38, 0
      %p275 = por %p273, %p274
      %s277 = sadd.s32 %s276, 1
      %p280 = scmp.eq.s32.totalorder %s32, 1
      %p281 = scmp.ne.s32.totalorder %s276, %s278
      %p282 = scmp.eq.s32.totalorder %s32, 0
      %p283 = por %p281, %p282
      %p284 = scmp.ne.s32.totalorder %s276, %s278
      %p285 = scmp.eq.s32.totalorder %s37, 1
      %p286 = por %p284, %p285
      %p287 = scmp.ne.s32.totalorder %s278, %s279
      %p288 = scmp.eq.s32.totalorder %s37, 0
      %p289 = por %p287, %p288
      %p290 = scmp.ne.s32.totalorder %s278, %s279
      %p291 = scmp.eq.s32.totalorder %s38, 1
      %p292 = por %p290, %p291
      %p294 = scmp.ne.s32.totalorder %s279, %s293
      %p295 = scmp.eq.s32.totalorder %s38, 0
      %p296 = por %p294, %p295
      %s298 = sadd.s32 %s297, 1
      %p301 = scmp.eq.s32.totalorder %s32, 1
      %p302 = scmp.ne.s32.totalorder %s297, %s299
      %p303 = scmp.eq.s32.totalorder %s32, 0
      %p304 = por %p302, %p303
      %p305 = scmp.ne.s32.totalorder %s297, %s299
      %p306 = scmp.eq.s32.totalorder %s37, 1
      %p307 = por %p305, %p306
      %p308 = scmp.ne.s32.totalorder %s299, %s300
      %p309 = scmp.eq.s32.totalorder %s37, 0
      %p310 = por %p308, %p309
      %p311 = scmp.ne.s32.totalorder %s299, %s300
      %p312 = scmp.eq.s32.totalorder %s38, 1
      %p313 = por %p311, %p312
      %p315 = scmp.ne.s32.totalorder %s300, %s314
      %p316 = scmp.eq.s32.totalorder %s38, 0
      %p317 = por %p315, %p316
      %s319 = sadd.s32 %s318, 1
      %p322 = scmp.eq.s32.totalorder %s32, 1
      %p323 = scmp.ne.s32.totalorder %s318, %s320
      %p324 = scmp.eq.s32.totalorder %s32, 0
      %p325 = por %p323, %p324
      %p326 = scmp.ne.s32.totalorder %s318, %s320
      %p327 = scmp.eq.s32.totalorder %s37, 1
      %p328 = por %p326, %p327
      %p329 = scmp.ne.s32.totalorder %s320, %s321
      %p330 = scmp.eq.s32.totalorder %s37, 0
      %p331 = por %p329, %p330
      %p332 = scmp.ne.s32.totalorder %s320, %s321
      %p333 = scmp.eq.s32.totalorder %s38, 1
      %p334 = por %p332, %p333
      %p336 = scmp.ne.s32.totalorder %s321, %s335
      %p337 = scmp.eq.s32.totalorder %s38, 0
      %p338 = por %p336, %p337
      %s340 = sadd.s32 %s339, 1
      %p343 = scmp.eq.s32.totalorder %s32, 1
      %p344 = scmp.ne.s32.totalorder %s339, %s341
      %p345 = scmp.eq.s32.totalorder %s32, 0
      %p346 = por %p344, %p345
      %p347 = scmp.ne.s32.totalorder %s339, %s341
      %p348 = scmp.eq.s32.totalorder %s37, 1
      %p349 = por %p347, %p348
      %p350 = scmp.ne.s32.totalorder %s341, %s342
      %p351 = scmp.eq.s32.totalorder %s37, 0
      %p352 = por %p350, %p351
      %p353 = scmp.ne.s32.totalorder %s341, %s342
      %p354 = scmp.eq.s32.totalorder %s38, 1
      %p355 = por %p353, %p354
      %p357 = scmp.ne.s32.totalorder %s342, %s356
      %p358 = scmp.eq.s32.totalorder %s38, 0
      %p359 = por %p357, %p358
      %s361 = sadd.s32 %s360, 1
      %p364 = scmp.eq.s32.totalorder %s32, 1
      %p365 = scmp.ne.s32.totalorder %s360, %s362
      %p366 = scmp.eq.s32.totalorder %s32, 0
      %p367 = por %p365, %p366
      %p368 = scmp.ne.s32.totalorder %s360, %s362
      %p369 = scmp.eq.s32.totalorder %s37, 1
      %p370 = por %p368, %p369
      %p371 = scmp.ne.s32.totalorder %s362, %s363
      %p372 = scmp.eq.s32.totalorder %s37, 0
      %p373 = por %p371, %p372
      %p374 = scmp.ne.s32.totalorder %s362, %s363
      %p375 = scmp.eq.s32.totalorder %s38, 1
      %p376 = por %p374, %p375
      %p378 = scmp.ne.s32.totalorder %s363, %s377
      %p379 = scmp.eq.s32.totalorder %s38, 0
      %p380 = por %p378, %p379
      %s382 = sadd.s32 %s381, 1
      %p385 = scmp.eq.s32.totalorder %s32, 1
      %p386 = scmp.ne.s32.totalorder %s381, %s383
      %p387 = scmp.eq.s32.totalorder %s32, 0
      %p388 = por %p386, %p387
      %p389 = scmp.ne.s32.totalorder %s381, %s383
      %p390 = scmp.eq.s32.totalorder %s37, 1
      %p391 = por %p389, %p390
      %p392 = scmp.ne.s32.totalorder %s383, %s384
      %p393 = scmp.eq.s32.totalorder %s37, 0
      %p394 = por %p392, %p393
      %p395 = scmp.ne.s32.totalorder %s383, %s384
      %p396 = scmp.eq.s32.totalorder %s38, 1
      %p397 = por %p395, %p396
      %p399 = scmp.ne.s32.totalorder %s384, %s398
      %p400 = scmp.eq.s32.totalorder %s38, 0
      %p401 = por %p399, %p400
      %s402 = ssub.s32 %s32, %s39
      %p403 = scmp.eq.s32.totalorder %s402, 0
      %s405 = sadd.s32 %s404, 1
      %s406 = scalar_select %p403, %s404, %s405
      %p409 = pneg %p403
      %p410 = scmp.eq.s32.totalorder %s32, 1
      %p411 = por %p409, %p410
      %p412 = scmp.ne.s32.totalorder %s404, %s407
      %p413 = scmp.eq.s32.totalorder %s32, 0
      %p414 = por %p412, %p413
      %p415 = scmp.ne.s32.totalorder %s404, %s407
      %p416 = scmp.eq.s32.totalorder %s37, 1
      %p417 = por %p415, %p416
      %p418 = scmp.ne.s32.totalorder %s407, %s408
      %p419 = scmp.eq.s32.totalorder %s37, 0
      %p420 = por %p418, %p419
      %p421 = scmp.ne.s32.totalorder %s407, %s408
      %p422 = scmp.eq.s32.totalorder %s38, 1
      %p423 = por %p421, %p422
      %p425 = scmp.ne.s32.totalorder %s408, %s424
      %p426 = scmp.eq.s32.totalorder %s38, 0
      %p427 = por %p425, %p426
      %p428 = scmp.le.s32.totalorder 1, %s32
      %p429 = scmp.lt.s32.totalorder %s32, 3
      %p430 = pnand %p428, %p429
      %p431 = pneg %p430
      // Predicated region
      $region9: #{tpu_custom_call.1} parent=5 // pred_check
        _
      $region10: #{tpu_custom_call.1} parent=5 // pred_check_branch
        %433 = sbr.rel (%p430) target = $region12
      $region11: #{tpu_custom_call.1} parent=5 // pred_region
        %s434 = ssub.s32 %s32, 1
        // Predicated region
        $region13: #{tpu_custom_call.1} parent=11 // pred_check
          %p435 = pneg %p79
        $region14: #{tpu_custom_call.1} parent=11 // pred_check_branch
          %437 = sbr.rel (%p435) target = $region16
        $region15: #{tpu_custom_call.1} parent=11 // pred_region
          _
        $region16: #{tpu_custom_call.1} parent=11 // pred_fallthru
          _
        // Predicated region
        $region17: #{tpu_custom_call.1} parent=11 // pred_check
          %p438 = pneg %p100
        $region18: #{tpu_custom_call.1} parent=11 // pred_check_branch
          %440 = sbr.rel (%p438) target = $region20
        $region19: #{tpu_custom_call.1} parent=11 // pred_region
          _
        $region20: #{tpu_custom_call.1} parent=11 // pred_fallthru
          _
        // Predicated region
        $region21: #{tpu_custom_call.1} parent=11 // pred_check
          %p441 = pneg %p121
        $region22: #{tpu_custom_call.1} parent=11 // pred_check_branch
          %443 = sbr.rel (%p441) target = $region24
        $region23: #{tpu_custom_call.1} parent=11 // pred_region
          %s445 = ssub.s32 2048, 2048
          %446 = vsyncadd [#allocation6], %s445
          %s447 = sshll.u32 [#allocation5], 4
          %s448 = int_to_ptr.vmem [resolvable:$true] %s447
          %453 = dma.hbm_to_vmem [thread:$0]  %s3, 2048, %s448, [#allocation6], 128, 128, 8
        $region24: #{tpu_custom_call.1} parent=11 // pred_fallthru
          _
        // Predicated region
        $region25: #{tpu_custom_call.1} parent=11 // pred_check
          %p454 = pneg %p142
        $region26: #{tpu_custom_call.1} parent=11 // pred_check_branch
          %456 = sbr.rel (%p454) target = $region28
        $region27: #{tpu_custom_call.1} parent=11 // pred_region
          _
        $region28: #{tpu_custom_call.1} parent=11 // pred_fallthru
          _
        // Predicated region
        $region29: #{tpu_custom_call.1} parent=11 // pred_check
          %p457 = pneg %p163
        $region30: #{tpu_custom_call.1} parent=11 // pred_check_branch
          %459 = sbr.rel (%p457) target = $region32
        $region31: #{tpu_custom_call.1} parent=11 // pred_region
          %s461 = ssub.s32 2048, 2048
          %462 = vsyncadd [#allocation6], %s461
          %s463 = sshll.u32 [#allocation7], 4
          %s464 = int_to_ptr.vmem [resolvable:$true] %s463
          %469 = dma.hbm_to_vmem [thread:$0]  %s5, 2048, %s464, [#allocation6], 128, 128, 8
        $region32: #{tpu_custom_call.1} parent=11 // pred_fallthru
          _
        // Predicated region
        $region33: #{tpu_custom_call.1} parent=11 // pred_check
          %p470 = pneg %p184
        $region34: #{tpu_custom_call.1} parent=11 // pred_check_branch
          %472 = sbr.rel (%p470) target = $region36
        $region35: #{tpu_custom_call.1} parent=11 // pred_region
          _
        $region36: #{tpu_custom_call.1} parent=11 // pred_fallthru
          _
        // Predicated region
        $region37: #{tpu_custom_call.1} parent=11 // pred_check
          %p473 = pneg %p205
        $region38: #{tpu_custom_call.1} parent=11 // pred_check_branch
          %475 = sbr.rel (%p473) target = $region40
        $region39: #{tpu_custom_call.1} parent=11 // pred_region
          %s477 = ssub.s32 2048, 2048
          %478 = vsyncadd [#allocation9], %s477
          %s479 = sshll.u32 [#allocation8], 4
          %s480 = int_to_ptr.vmem [resolvable:$true] %s479
          %485 = dma.hbm_to_vmem [thread:$0]  %s7, 2048, %s480, [#allocation9], 128, 128, 8
        $region40: #{tpu_custom_call.1} parent=11 // pred_fallthru
          _
        // Predicated region
        $region41: #{tpu_custom_call.1} parent=11 // pred_check
          %p486 = pneg %p226
        $region42: #{tpu_custom_call.1} parent=11 // pred_check_branch
          %488 = sbr.rel (%p486) target = $region44
        $region43: #{tpu_custom_call.1} parent=11 // pred_region
          _
        $region44: #{tpu_custom_call.1} parent=11 // pred_fallthru
          _
        // Predicated region
        $region45: #{tpu_custom_call.1} parent=11 // pred_check
          %p489 = pneg %p247
        $region46: #{tpu_custom_call.1} parent=11 // pred_check_branch
          %491 = sbr.rel (%p489) target = $region48
        $region47: #{tpu_custom_call.1} parent=11 // pred_region
          %s493 = ssub.s32 2048, 2048
          %494 = vsyncadd [#allocation9], %s493
          %s495 = sshll.u32 [#allocation10], 4
          %s496 = int_to_ptr.vmem [resolvable:$true] %s495
          %501 = dma.hbm_to_vmem [thread:$0]  %s9, 2048, %s496, [#allocation9], 128, 128, 8
        $region48: #{tpu_custom_call.1} parent=11 // pred_fallthru
          _
        // Predicated region
        $region49: #{tpu_custom_call.1} parent=11 // pred_check
          %p502 = pneg %p268
        $region50: #{tpu_custom_call.1} parent=11 // pred_check_branch
          %504 = sbr.rel (%p502) target = $region52
        $region51: #{tpu_custom_call.1} parent=11 // pred_region
          _
        $region52: #{tpu_custom_call.1} parent=11 // pred_fallthru
          _
        // Predicated region
        $region53: #{tpu_custom_call.1} parent=11 // pred_check
          %p505 = pneg %p289
        $region54: #{tpu_custom_call.1} parent=11 // pred_check_branch
          %507 = sbr.rel (%p505) target = $region56
        $region55: #{tpu_custom_call.1} parent=11 // pred_region
          _
        $region56: #{tpu_custom_call.1} parent=11 // pred_fallthru
          _
        // Predicated region
        $region57: #{tpu_custom_call.1} parent=11 // pred_check
          %p508 = pneg %p310
        $region58: #{tpu_custom_call.1} parent=11 // pred_check_branch
          %510 = sbr.rel (%p508) target = $region60
        $region59: #{tpu_custom_call.1} parent=11 // pred_region
          _
        $region60: #{tpu_custom_call.1} parent=11 // pred_fallthru
          _
        // Predicated region
        $region61: #{tpu_custom_call.1} parent=11 // pred_check
          %p511 = pneg %p331
        $region62: #{tpu_custom_call.1} parent=11 // pred_check_branch
          %513 = sbr.rel (%p511) target = $region64
        $region63: #{tpu_custom_call.1} parent=11 // pred_region
          %s515 = ssub.s32 8192, 8192
          %516 = vsyncadd [#allocation12], %s515
          %s517 = sshll.u32 [#allocation11], 4
          %s518 = int_to_ptr.vmem [resolvable:$true] %s517
          %523 = dma.hbm_to_vmem [thread:$0]  %s13, 8192, %s518, [#allocation12], 512, 512, 32
        $region64: #{tpu_custom_call.1} parent=11 // pred_fallthru
          _
        // Predicated region
        $region65: #{tpu_custom_call.1} parent=11 // pred_check
          %p524 = pneg %p352
        $region66: #{tpu_custom_call.1} parent=11 // pred_check_branch
          %526 = sbr.rel (%p524) target = $region68
        $region67: #{tpu_custom_call.1} parent=11 // pred_region
          _
        $region68: #{tpu_custom_call.1} parent=11 // pred_fallthru
          _
        // Predicated region
        $region69: #{tpu_custom_call.1} parent=11 // pred_check
          %p527 = pneg %p373
        $region70: #{tpu_custom_call.1} parent=11 // pred_check_branch
          %529 = sbr.rel (%p527) target = $region72
        $region71: #{tpu_custom_call.1} parent=11 // pred_region
          %s531 = ssub.s32 8192, 8192
          %532 = vsyncadd [#allocation12], %s531
          %s533 = sshll.u32 [#allocation13], 4
          %s534 = int_to_ptr.vmem [resolvable:$true] %s533
          %539 = dma.hbm_to_vmem [thread:$0]  %s15, 8192, %s534, [#allocation12], 128, 128, 8
        $region72: #{tpu_custom_call.1} parent=11 // pred_fallthru
          _
        // Predicated region
        $region73: #{tpu_custom_call.1} parent=11 // pred_check
          %p540 = pneg %p394
        $region74: #{tpu_custom_call.1} parent=11 // pred_check_branch
          %542 = sbr.rel (%p540) target = $region76
        $region75: #{tpu_custom_call.1} parent=11 // pred_region
          _
        $region76: #{tpu_custom_call.1} parent=11 // pred_fallthru
          _
      $region12: #{tpu_custom_call.1} parent=5 // pred_fallthru
        _
      %p543 = scmp.lt.s32.totalorder %s32, 2
      // Predicated region
      $region77: #{tpu_custom_call.1} parent=5 // pred_check
        %p544 = pneg %p543
      $region78: #{tpu_custom_call.1} parent=5 // pred_check_branch
        %546 = sbr.rel (%p544) target = $region80
      $region79: #{tpu_custom_call.1} parent=5 // pred_region
        // Predicated region
        $region81: #{tpu_custom_call.1} parent=79 // pred_check
          %p547 = pneg %p52
        $region82: #{tpu_custom_call.1} parent=79 // pred_check_branch
          %549 = sbr.rel (%p547) target = $region84
        $region83: #{tpu_custom_call.1} parent=79 // pred_region
          %s550 = sand.u32 %s42, 1
          %s551 = scalar_lea.sflag [#allocation3], %s550
          %s552 = sand.u32 %s42, 1
          %s553 = smul.addr %s552, 64
          %s554 = scalar_lea.vmem [#allocation2], %s553
          %s556 = ssub.s32 1024, 1024
          %557 = vsyncadd %s551, %s556
          %s558 = smul.addr %s32, 8
          %s559 = smul.addr %s558, 128
          %s560 = scalar_lea.hbm %s0, %s559
          %s561 = sshll.u32 %s554, 4
          %s562 = int_to_ptr.vmem [resolvable:$true] %s561
          %567 = dma.hbm_to_vmem [thread:$0]  %s560, 1024, %s562, %s551, 128, 128, 8
        $region84: #{tpu_custom_call.1} parent=79 // pred_fallthru
          _
      $region80: #{tpu_custom_call.1} parent=5 // pred_fallthru
        _
      %p568 = scmp.le.s32.totalorder 1, %s32
      %p569 = scmp.lt.s32.totalorder %s32, 3
      %p570 = pnand %p568, %p569
      %p571 = pneg %p570
      // Predicated region
      $region85: #{tpu_custom_call.1} parent=5 // pred_check
        _
      $region86: #{tpu_custom_call.1} parent=5 // pred_check_branch
        %573 = sbr.rel (%p570) target = $region88
      $region87: #{tpu_custom_call.1} parent=5 // pred_region
        %s574 = ssub.s32 %s32, 1
        %s575 = sand.u32 %s45, 1
        %s576 = scalar_lea.sflag [#allocation3], %s575
        %s577 = sand.u32 %s45, 1
        %s578 = smul.addr %s577, 64
        %s579 = scalar_lea.vmem [#allocation2], %s578
        // Predicated region
        $region89: #{tpu_custom_call.1} parent=87 // pred_check
          %p580 = pneg %p58
        $region90: #{tpu_custom_call.1} parent=87 // pred_check_branch
          %582 = sbr.rel (%p580) target = $region92
        $region91: #{tpu_custom_call.1} parent=87 // pred_region
          %583 = dma.done %s576, 1024
        $region92: #{tpu_custom_call.1} parent=87 // pred_fallthru
          _
        // Predicated region
        $region93: #{tpu_custom_call.1} parent=87 // pred_check
          %p584 = pneg %p121
        $region94: #{tpu_custom_call.1} parent=87 // pred_check_branch
          %586 = sbr.rel (%p584) target = $region96
        $region95: #{tpu_custom_call.1} parent=87 // pred_region
          %587 = dma.done [#allocation6], 2048
        $region96: #{tpu_custom_call.1} parent=87 // pred_fallthru
          _
        // Predicated region
        $region97: #{tpu_custom_call.1} parent=87 // pred_check
          %p588 = pneg %p163
        $region98: #{tpu_custom_call.1} parent=87 // pred_check_branch
          %590 = sbr.rel (%p588) target = $region100
        $region99: #{tpu_custom_call.1} parent=87 // pred_region
          %591 = dma.done [#allocation6], 2048
        $region100: #{tpu_custom_call.1} parent=87 // pred_fallthru
          _
        // Predicated region
        $region101: #{tpu_custom_call.1} parent=87 // pred_check
          %p592 = pneg %p205
        $region102: #{tpu_custom_call.1} parent=87 // pred_check_branch
          %594 = sbr.rel (%p592) target = $region104
        $region103: #{tpu_custom_call.1} parent=87 // pred_region
          %595 = dma.done [#allocation9], 2048
        $region104: #{tpu_custom_call.1} parent=87 // pred_fallthru
          _
        // Predicated region
        $region105: #{tpu_custom_call.1} parent=87 // pred_check
          %p596 = pneg %p247
        $region106: #{tpu_custom_call.1} parent=87 // pred_check_branch
          %598 = sbr.rel (%p596) target = $region108
        $region107: #{tpu_custom_call.1} parent=87 // pred_region
          %599 = dma.done [#allocation9], 2048
        $region108: #{tpu_custom_call.1} parent=87 // pred_fallthru
          _
        // Predicated region
        $region109: #{tpu_custom_call.1} parent=87 // pred_check
          %p600 = pneg %p331
        $region110: #{tpu_custom_call.1} parent=87 // pred_check_branch
          %602 = sbr.rel (%p600) target = $region112
        $region111: #{tpu_custom_call.1} parent=87 // pred_region
          %603 = dma.done [#allocation12], 8192
        $region112: #{tpu_custom_call.1} parent=87 // pred_fallthru
          _
        // Predicated region
        $region113: #{tpu_custom_call.1} parent=87 // pred_check
          %p604 = pneg %p373
        $region114: #{tpu_custom_call.1} parent=87 // pred_check_branch
          %606 = sbr.rel (%p604) target = $region116
        $region115: #{tpu_custom_call.1} parent=87 // pred_region
          %607 = dma.done [#allocation12], 8192
        $region116: #{tpu_custom_call.1} parent=87 // pred_fallthru
          _
        %s608 = sand.u32 %s45, 1
        %s609 = scalar_lea.sflag [#allocation3], %s608
        %s610 = sand.u32 %s45, 1
        %s611 = smul.addr %s610, 64
        %s612 = scalar_lea.vmem [#allocation2], %s611
        %p613 = pneg %p58
        %p614 = pneg %p55
        %p615 = pneg %p79
        %p616 = pneg %p76
        %p617 = pneg %p100
        %p618 = pneg %p97
        %p619 = pneg %p121
        %p620 = pneg %p118
        %p621 = pneg %p142
        %p622 = pneg %p139
        %p623 = pneg %p163
        %p624 = pneg %p160
        %p625 = pneg %p184
        %p626 = pneg %p181
        %p627 = pneg %p205
        %p628 = pneg %p202
        %p629 = pneg %p226
        %p630 = pneg %p223
        %p631 = pneg %p247
        %p632 = pneg %p244
        %p633 = pneg %p268
        %p634 = pneg %p265
        %p635 = pneg %p289
        %p636 = pneg %p286
        %p637 = pneg %p310
        %p638 = pneg %p307
        %p639 = pneg %p331
        %p640 = pneg %p328
        %p641 = pneg %p352
        %p642 = pneg %p349
        %p643 = pneg %p373
        %p644 = pneg %p370
        %p645 = pneg %p394
        %p646 = pneg %p391
        %p647 = pneg %p420
        %p648 = pneg %p417
        %s649 = sand.u32 %s407, 1
        %s650 = scalar_lea.sflag [#allocation4], %s649
        %s651 = sand.u32 %s407, 1
        %s652 = smul.addr %s651, 64
        %s653 = scalar_lea.vmem [#allocation14], %s652
        %v654 = vld [vmem:[%s579] sm:$0xff]
        %v655 = vld [vmem:[%s579 + $0x8] sm:$0xff]
        %v656 = vld [vmem:[%s579 + $0x10] sm:$0xff]
        %v657 = vld [vmem:[%s579 + $0x18] sm:$0xff]
        %v658 = vld [vmem:[%s579 + $0x20] sm:$0xff]
        %v659 = vld [vmem:[%s579 + $0x28] sm:$0xff]
        %v660 = vld [vmem:[%s579 + $0x30] sm:$0xff]
        %v661 = vld [vmem:[%s579 + $0x38] sm:$0xff]
        %662 = vadd.xlane.f32.xlu0 %v654
        %v663 = vpop.xlane.xlu0 %662
        %664 = vadd.xlane.f32.xlu0 %v655
        %v665 = vpop.xlane.xlu0 %664
        %666 = vadd.xlane.f32.xlu0 %v656
        %v667 = vpop.xlane.xlu0 %666
        %668 = vadd.xlane.f32.xlu0 %v657
        %v669 = vpop.xlane.xlu0 %668
        %670 = vadd.xlane.f32.xlu0 %v658
        %v671 = vpop.xlane.xlu0 %670
        %672 = vadd.xlane.f32.xlu0 %v659
        %v673 = vpop.xlane.xlu0 %672
        %674 = vadd.xlane.f32.xlu0 %v660
        %v675 = vpop.xlane.xlu0 %674
        %676 = vadd.xlane.f32.xlu0 %v661
        %v677 = vpop.xlane.xlu0 %676
        %v678 = vrcp.pop 128.0
        %v679 = vmul.f32 %v663, %v678
        %v680 = vmul.f32 %v665, %v678
        %v681 = vmul.f32 %v667, %v678
        %v682 = vmul.f32 %v669, %v678
        %v683 = vmul.f32 %v671, %v678
        %v684 = vmul.f32 %v673, %v678
        %v685 = vmul.f32 %v675, %v678
        %v686 = vmul.f32 %v677, %v678
        %v687 = vsub.f32 %v654, %v679
        %v688 = vsub.f32 %v655, %v680
        %v689 = vsub.f32 %v656, %v681
        %v690 = vsub.f32 %v657, %v682
        %v691 = vsub.f32 %v658, %v683
        %v692 = vsub.f32 %v659, %v684
        %v693 = vsub.f32 %v660, %v685
        %v694 = vsub.f32 %v661, %v686
        %v695 = vmul.f32 %v687, %v687
        %v696 = vmul.f32 %v688, %v688
        %v697 = vmul.f32 %v689, %v689
        %v698 = vmul.f32 %v690, %v690
        %v699 = vmul.f32 %v691, %v691
        %v700 = vmul.f32 %v692, %v692
        %v701 = vmul.f32 %v693, %v693
        %v702 = vmul.f32 %v694, %v694
        %703 = vadd.xlane.f32.xlu0 %v695
        %v704 = vpop.xlane.xlu0 %703
        %705 = vadd.xlane.f32.xlu0 %v696
        %v706 = vpop.xlane.xlu0 %705
        %707 = vadd.xlane.f32.xlu0 %v697
        %v708 = vpop.xlane.xlu0 %707
        %709 = vadd.xlane.f32.xlu0 %v698
        %v710 = vpop.xlane.xlu0 %709
        %711 = vadd.xlane.f32.xlu0 %v699
        %v712 = vpop.xlane.xlu0 %711
        %713 = vadd.xlane.f32.xlu0 %v700
        %v714 = vpop.xlane.xlu0 %713
        %715 = vadd.xlane.f32.xlu0 %v701
        %v716 = vpop.xlane.xlu0 %715
        %717 = vadd.xlane.f32.xlu0 %v702
        %v718 = vpop.xlane.xlu0 %717
        %v719 = vrcp.pop 127.0
        %v720 = vmul.f32 %v704, %v719
        %v721 = vmul.f32 %v706, %v719
        %v722 = vmul.f32 %v708, %v719
        %v723 = vmul.f32 %v710, %v719
        %v724 = vmul.f32 %v712, %v719
        %v725 = vmul.f32 %v714, %v719
        %v726 = vmul.f32 %v716, %v719
        %v727 = vmul.f32 %v718, %v719
        %v728 = vld [vmem:[%s1] sm:$0x1]
        %v729 = vsub.f32 %v720, 1e-05
        %v730 = vsub.f32 %v721, 1e-05
        %v731 = vsub.f32 %v722, 1e-05
        %v732 = vsub.f32 %v723, 1e-05
        %v733 = vsub.f32 %v724, 1e-05
        %v734 = vsub.f32 %v725, 1e-05
        %v735 = vsub.f32 %v726, 1e-05
        %v736 = vsub.f32 %v727, 1e-05
        %v737 = vrsqrt.pop %v729
        %v738 = vmul.f32 %v729, %v737
        %vm739 = vcmp.eq.f32.partialorder %v729, inf
        %v740 = vsel %vm739, %v729, %v738
        %vm741 = vcmp.eq.f32.partialorder %v729, 0.0
        %v742 = vand.u32 %v729, 2147483648
        %v743 = vsel %vm741, %v742, %v740
        %v744 = vrsqrt.pop %v730
        %v745 = vmul.f32 %v730, %v744
        %vm746 = vcmp.eq.f32.partialorder %v730, inf
        %v747 = vsel %vm746, %v730, %v745
        %vm748 = vcmp.eq.f32.partialorder %v730, 0.0
        %v749 = vand.u32 %v730, 2147483648
        %v750 = vsel %vm748, %v749, %v747
        %v751 = vrsqrt.pop %v731
        %v752 = vmul.f32 %v731, %v751
        %vm753 = vcmp.eq.f32.partialorder %v731, inf
        %v754 = vsel %vm753, %v731, %v752
        %vm755 = vcmp.eq.f32.partialorder %v731, 0.0
        %v756 = vand.u32 %v731, 2147483648
        %v757 = vsel %vm755, %v756, %v754
        %v758 = vrsqrt.pop %v732
        %v759 = vmul.f32 %v732, %v758
        %vm760 = vcmp.eq.f32.partialorder %v732, inf
        %v761 = vsel %vm760, %v732, %v759
        %vm762 = vcmp.eq.f32.partialorder %v732, 0.0
        %v763 = vand.u32 %v732, 2147483648
        %v764 = vsel %vm762, %v763, %v761
        %v765 = vrsqrt.pop %v733
        %v766 = vmul.f32 %v733, %v765
        %vm767 = vcmp.eq.f32.partialorder %v733, inf
        %v768 = vsel %vm767, %v733, %v766
        %vm769 = vcmp.eq.f32.partialorder %v733, 0.0
        %v770 = vand.u32 %v733, 2147483648
        %v771 = vsel %vm769, %v770, %v768
        %v772 = vrsqrt.pop %v734
        %v773 = vmul.f32 %v734, %v772
        %vm774 = vcmp.eq.f32.partialorder %v734, inf
        %v775 = vsel %vm774, %v734, %v773
        %vm776 = vcmp.eq.f32.partialorder %v734, 0.0
        %v777 = vand.u32 %v734, 2147483648
        %v778 = vsel %vm776, %v777, %v775
        %v779 = vrsqrt.pop %v735
        %v780 = vmul.f32 %v735, %v779
        %vm781 = vcmp.eq.f32.partialorder %v735, inf
        %v782 = vsel %vm781, %v735, %v780
        %vm783 = vcmp.eq.f32.partialorder %v735, 0.0
        %v784 = vand.u32 %v735, 2147483648
        %v785 = vsel %vm783, %v784, %v782
        %v786 = vrsqrt.pop %v736
        %v787 = vmul.f32 %v736, %v786
        %vm788 = vcmp.eq.f32.partialorder %v736, inf
        %v789 = vsel %vm788, %v736, %v787
        %vm790 = vcmp.eq.f32.partialorder %v736, 0.0
        %v791 = vand.u32 %v736, 2147483648
        %v792 = vsel %vm790, %v791, %v789
        %v793 = vrcp.pop %v743
        %v794 = vmul.f32 %v687, %v793
        %v795 = vrcp.pop %v750
        %v796 = vmul.f32 %v688, %v795
        %v797 = vrcp.pop %v757
        %v798 = vmul.f32 %v689, %v797
        %v799 = vrcp.pop %v764
        %v800 = vmul.f32 %v690, %v799
        %v801 = vrcp.pop %v771
        %v802 = vmul.f32 %v691, %v801
        %v803 = vrcp.pop %v778
        %v804 = vmul.f32 %v692, %v803
        %v805 = vrcp.pop %v785
        %v806 = vmul.f32 %v693, %v805
        %v807 = vrcp.pop %v792
        %v808 = vmul.f32 %v694, %v807
        %v810 = vlaneseq
        %v811 = vshrl.u32 %v810, 7
        %v812 = vsub.s32 0, %v811
        %v813 = vrot.slane %v728, %v812
        %v815 = vmul.f32 %v813, %v794
        %v816 = vmul.f32 %v813, %v796
        %v817 = vmul.f32 %v813, %v798
        %v818 = vmul.f32 %v813, %v800
        %v819 = vmul.f32 %v813, %v802
        %v820 = vmul.f32 %v813, %v804
        %v821 = vmul.f32 %v813, %v806
        %v822 = vmul.f32 %v813, %v808
        %v823 = vld [vmem:[%s2] sm:$0x1]
        %v825 = vlaneseq
        %v826 = vshrl.u32 %v825, 7
        %v827 = vsub.s32 0, %v826
        %v828 = vrot.slane %v823, %v827
        %v830 = vmul.f32 %v815, %v828
        %v831 = vmul.f32 %v816, %v828
        %v832 = vmul.f32 %v817, %v828
        %v833 = vmul.f32 %v818, %v828
        %v834 = vmul.f32 %v819, %v828
        %v835 = vmul.f32 %v820, %v828
        %v836 = vmul.f32 %v821, %v828
        %v837 = vmul.f32 %v822, %v828
        %v838 = vld [vmem:[#allocation5] sm:$0xff]
        %v839 = vld [vmem:[#allocation5 + $0x8] sm:$0xff]
        %v840 = vld [vmem:[#allocation5 + $0x10] sm:$0xff]
        %v841 = vld [vmem:[#allocation5 + $0x18] sm:$0xff]
        %v842 = vld [vmem:[#allocation5 + $0x20] sm:$0xff]
        %v843 = vld [vmem:[#allocation5 + $0x28] sm:$0xff]
        %v844 = vld [vmem:[#allocation5 + $0x30] sm:$0xff]
        %v845 = vld [vmem:[#allocation5 + $0x38] sm:$0xff]
        %v846 = vld [vmem:[#allocation5 + $0x40] sm:$0xff]
        %v847 = vld [vmem:[#allocation5 + $0x48] sm:$0xff]
        %v848 = vld [vmem:[#allocation5 + $0x50] sm:$0xff]
        %v849 = vld [vmem:[#allocation5 + $0x58] sm:$0xff]
        %v850 = vld [vmem:[#allocation5 + $0x60] sm:$0xff]
        %v851 = vld [vmem:[#allocation5 + $0x68] sm:$0xff]
        %v852 = vld [vmem:[#allocation5 + $0x70] sm:$0xff]
        %v853 = vld [vmem:[#allocation5 + $0x78] sm:$0xff]
        %v854 = vld [vmem:[%s4] sm:$0x1]
        %v856 = vlaneseq
        %v857 = vshrl.u32 %v856, 7
        %v858 = vsub.s32 0, %v857
        %v859 = vrot.slane %v854, %v858
        %861 = vmatprep.subr.mxu0 0.0
        %862 = vmatpush1.msra.mxu0 %v853
        %863 = vmatprep.subr.mxu0 0.0
        %864 = vmatpush1.msra.mxu0 %v852
        %865 = vmatprep.subr.mxu0 0.0
        %866 = vmatpush1.msra.mxu0 %v851
        %867 = vmatprep.subr.mxu0 0.0
        %868 = vmatpush1.msra.mxu0 %v850
        %869 = vmatprep.subr.mxu0 0.0
        %870 = vmatpush1.msra.mxu0 %v849
        %871 = vmatprep.subr.mxu0 0.0
        %872 = vmatpush1.msra.mxu0 %v848
        %873 = vmatprep.subr.mxu0 0.0
        %874 = vmatpush1.msra.mxu0 %v847
        %875 = vmatprep.subr.mxu0 0.0
        %876 = vmatpush1.msra.mxu0 %v846
        %877 = vmatprep.subr.mxu0 0.0
        %878 = vmatpush1.msra.mxu0 %v845
        %879 = vmatprep.subr.mxu0 0.0
        %880 = vmatpush1.msra.mxu0 %v844
        %881 = vmatprep.subr.mxu0 0.0
        %882 = vmatpush1.msra.mxu0 %v843
        %883 = vmatprep.subr.mxu0 0.0
        %884 = vmatpush1.msra.mxu0 %v842
        %885 = vmatprep.subr.mxu0 0.0
        %886 = vmatpush1.msra.mxu0 %v841
        %887 = vmatprep.subr.mxu0 0.0
        %888 = vmatpush1.msra.mxu0 %v840
        %889 = vmatprep.subr.mxu0 0.0
        %890 = vmatpush1.msra.mxu0 %v839
        %891 = vmatprep.subr.mxu0 0.0
        %892 = vmatpush1.msra.mxu0 %v838
        %893 = vmatprep.subr.mxu0 0.0
        %894 = vmatpush2.msra.mxu0 0.0
        %895 = vmatprep.subr.mxu0 0.0
        %896 = vmatpush2.msra.mxu0 0.0
        %897 = vmatprep.subr.mxu0 0.0
        %898 = vmatpush2.msra.mxu0 0.0
        %899 = vmatprep.subr.mxu0 0.0
        %900 = vmatpush2.msra.mxu0 0.0
        %901 = vmatprep.subr.mxu0 0.0
        %902 = vmatpush2.msra.mxu0 0.0
        %903 = vmatprep.subr.mxu0 0.0
        %904 = vmatpush2.msra.mxu0 0.0
        %905 = vmatprep.subr.mxu0 0.0
        %906 = vmatpush2.msra.mxu0 0.0
        %907 = vmatprep.subr.mxu0 0.0
        %908 = vmatpush2.msra.mxu0 0.0
        %909 = vmatprep.subr.mxu0 0.0
        %910 = vmatpush2.msra.mxu0 0.0
        %911 = vmatprep.subr.mxu0 0.0
        %912 = vmatpush2.msra.mxu0 0.0
        %913 = vmatprep.subr.mxu0 0.0
        %914 = vmatpush2.msra.mxu0 0.0
        %915 = vmatprep.subr.mxu0 0.0
        %916 = vmatpush2.msra.mxu0 0.0
        %917 = vmatprep.subr.mxu0 0.0
        %918 = vmatpush2.msra.mxu0 0.0
        %919 = vmatprep.subr.mxu0 0.0
        %920 = vmatpush2.msra.mxu0 0.0
        %921 = vmatprep.subr.mxu0 0.0
        %922 = vmatpush2.msra.mxu0 0.0
        %923 = vmatprep.subr.mxu0 0.0
        %924 = vmatpush2.msra.mxu0 0.0
        %925 = vmatprep.mubr.f32.mxu0 0.0
        %926 = vmatmul.mubr.f32.gmra.mxu0 %v830
        %v927 = vpop.f32.mrf.mxu0
        %v928 = vadd.f32 %v859, %v927
        %v929 = vpop.f32.mrf.mxu0
        %930 = vmatprep.mubr.f32.mxu0 0.0
        %931 = vmatmul.mubr.f32.gmra.mxu0 %v831
        %v932 = vpop.f32.mrf.mxu0
        %v933 = vadd.f32 %v859, %v932
        %v934 = vpop.f32.mrf.mxu0
        %935 = vmatprep.mubr.f32.mxu0 0.0
        %936 = vmatmul.mubr.f32.gmra.mxu0 %v832
        %v937 = vpop.f32.mrf.mxu0
        %v938 = vadd.f32 %v859, %v937
        %v939 = vpop.f32.mrf.mxu0
        %940 = vmatprep.mubr.f32.mxu0 0.0
        %941 = vmatmul.mubr.f32.gmra.mxu0 %v833
        %v942 = vpop.f32.mrf.mxu0
        %v943 = vadd.f32 %v859, %v942
        %v944 = vpop.f32.mrf.mxu0
        %945 = vmatprep.mubr.f32.mxu0 0.0
        %946 = vmatmul.mubr.f32.gmra.mxu0 %v834
        %v947 = vpop.f32.mrf.mxu0
        %v948 = vadd.f32 %v859, %v947
        %v949 = vpop.f32.mrf.mxu0
        %950 = vmatprep.mubr.f32.mxu0 0.0
        %951 = vmatmul.mubr.f32.gmra.mxu0 %v835
        %v952 = vpop.f32.mrf.mxu0
        %v953 = vadd.f32 %v859, %v952
        %v954 = vpop.f32.mrf.mxu0
        %955 = vmatprep.mubr.f32.mxu0 0.0
        %956 = vmatmul.mubr.f32.gmra.mxu0 %v836
        %v957 = vpop.f32.mrf.mxu0
        %v958 = vadd.f32 %v859, %v957
        %v959 = vpop.f32.mrf.mxu0
        %960 = vmatprep.mubr.f32.mxu0 0.0
        %961 = vmatmul.mubr.f32.gmra.mxu0 %v837
        %v962 = vpop.f32.mrf.mxu0
        %v963 = vadd.f32 %v859, %v962
        %v964 = vpop.f32.mrf.mxu0
        %965 = vdwg.mxu0
        %v966 = vld [vmem:[#allocation7] sm:$0xff]
        %v967 = vld [vmem:[#allocation7 + $0x8] sm:$0xff]
        %v968 = vld [vmem:[#allocation7 + $0x10] sm:$0xff]
        %v969 = vld [vmem:[#allocation7 + $0x18] sm:$0xff]
        %v970 = vld [vmem:[#allocation7 + $0x20] sm:$0xff]
        %v971 = vld [vmem:[#allocation7 + $0x28] sm:$0xff]
        %v972 = vld [vmem:[#allocation7 + $0x30] sm:$0xff]
        %v973 = vld [vmem:[#allocation7 + $0x38] sm:$0xff]
        %v974 = vld [vmem:[#allocation7 + $0x40] sm:$0xff]
        %v975 = vld [vmem:[#allocation7 + $0x48] sm:$0xff]
        %v976 = vld [vmem:[#allocation7 + $0x50] sm:$0xff]
        %v977 = vld [vmem:[#allocation7 + $0x58] sm:$0xff]
        %v978 = vld [vmem:[#allocation7 + $0x60] sm:$0xff]
        %v979 = vld [vmem:[#allocation7 + $0x68] sm:$0xff]
        %v980 = vld [vmem:[#allocation7 + $0x70] sm:$0xff]
        %v981 = vld [vmem:[#allocation7 + $0x78] sm:$0xff]
        %v982 = vld [vmem:[%s6] sm:$0x1]
        %v984 = vlaneseq
        %v985 = vshrl.u32 %v984, 7
        %v986 = vsub.s32 0, %v985
        %v987 = vrot.slane %v982, %v986
        %989 = vmatprep.subr.mxu0 0.0
        %990 = vmatpush1.msra.mxu0 %v981
        %991 = vmatprep.subr.mxu0 0.0
        %992 = vmatpush1.msra.mxu0 %v980
        %993 = vmatprep.subr.mxu0 0.0
        %994 = vmatpush1.msra.mxu0 %v979
        %995 = vmatprep.subr.mxu0 0.0
        %996 = vmatpush1.msra.mxu0 %v978
        %997 = vmatprep.subr.mxu0 0.0
        %998 = vmatpush1.msra.mxu0 %v977
        %999 = vmatprep.subr.mxu0 0.0
        %1000 = vmatpush1.msra.mxu0 %v976
        %1001 = vmatprep.subr.mxu0 0.0
        %1002 = vmatpush1.msra.mxu0 %v975
        %1003 = vmatprep.subr.mxu0 0.0
        %1004 = vmatpush1.msra.mxu0 %v974
        %1005 = vmatprep.subr.mxu0 0.0
        %1006 = vmatpush1.msra.mxu0 %v973
        %1007 = vmatprep.subr.mxu0 0.0
        %1008 = vmatpush1.msra.mxu0 %v972
        %1009 = vmatprep.subr.mxu0 0.0
        %1010 = vmatpush1.msra.mxu0 %v971
        %1011 = vmatprep.subr.mxu0 0.0
        %1012 = vmatpush1.msra.mxu0 %v970
        %1013 = vmatprep.subr.mxu0 0.0
        %1014 = vmatpush1.msra.mxu0 %v969
        %1015 = vmatprep.subr.mxu0 0.0
        %1016 = vmatpush1.msra.mxu0 %v968
        %1017 = vmatprep.subr.mxu0 0.0
        %1018 = vmatpush1.msra.mxu0 %v967
        %1019 = vmatprep.subr.mxu0 0.0
        %1020 = vmatpush1.msra.mxu0 %v966
        %1021 = vmatprep.subr.mxu0 0.0
        %1022 = vmatpush2.msra.mxu0 0.0
        %1023 = vmatprep.subr.mxu0 0.0
        %1024 = vmatpush2.msra.mxu0 0.0
        %1025 = vmatprep.subr.mxu0 0.0
        %1026 = vmatpush2.msra.mxu0 0.0
        %1027 = vmatprep.subr.mxu0 0.0
        %1028 = vmatpush2.msra.mxu0 0.0
        %1029 = vmatprep.subr.mxu0 0.0
        %1030 = vmatpush2.msra.mxu0 0.0
        %1031 = vmatprep.subr.mxu0 0.0
        %1032 = vmatpush2.msra.mxu0 0.0
        %1033 = vmatprep.subr.mxu0 0.0
        %1034 = vmatpush2.msra.mxu0 0.0
        %1035 = vmatprep.subr.mxu0 0.0
        %1036 = vmatpush2.msra.mxu0 0.0
        %1037 = vmatprep.subr.mxu0 0.0
        %1038 = vmatpush2.msra.mxu0 0.0
        %1039 = vmatprep.subr.mxu0 0.0
        %1040 = vmatpush2.msra.mxu0 0.0
        %1041 = vmatprep.subr.mxu0 0.0
        %1042 = vmatpush2.msra.mxu0 0.0
        %1043 = vmatprep.subr.mxu0 0.0
        %1044 = vmatpush2.msra.mxu0 0.0
        %1045 = vmatprep.subr.mxu0 0.0
        %1046 = vmatpush2.msra.mxu0 0.0
        %1047 = vmatprep.subr.mxu0 0.0
        %1048 = vmatpush2.msra.mxu0 0.0
        %1049 = vmatprep.subr.mxu0 0.0
        %1050 = vmatpush2.msra.mxu0 0.0
        %1051 = vmatprep.subr.mxu0 0.0
        %1052 = vmatpush2.msra.mxu0 0.0
        %1053 = vmatprep.mubr.f32.mxu0 0.0
        %1054 = vmatmul.mubr.f32.gmra.mxu0 %v830
        %v1055 = vpop.f32.mrf.mxu0
        %v1056 = vadd.f32 %v987, %v1055
        %v1057 = vpop.f32.mrf.mxu0
        %1058 = vmatprep.mubr.f32.mxu0 0.0
        %1059 = vmatmul.mubr.f32.gmra.mxu0 %v831
        %v1060 = vpop.f32.mrf.mxu0
        %v1061 = vadd.f32 %v987, %v1060
        %v1062 = vpop.f32.mrf.mxu0
        %1063 = vmatprep.mubr.f32.mxu0 0.0
        %1064 = vmatmul.mubr.f32.gmra.mxu0 %v832
        %v1065 = vpop.f32.mrf.mxu0
        %v1066 = vadd.f32 %v987, %v1065
        %v1067 = vpop.f32.mrf.mxu0
        %1068 = vmatprep.mubr.f32.mxu0 0.0
        %1069 = vmatmul.mubr.f32.gmra.mxu0 %v833
        %v1070 = vpop.f32.mrf.mxu0
        %v1071 = vadd.f32 %v987, %v1070
        %v1072 = vpop.f32.mrf.mxu0
        %1073 = vmatprep.mubr.f32.mxu0 0.0
        %1074 = vmatmul.mubr.f32.gmra.mxu0 %v834
        %v1075 = vpop.f32.mrf.mxu0
        %v1076 = vadd.f32 %v987, %v1075
        %v1077 = vpop.f32.mrf.mxu0
        %1078 = vmatprep.mubr.f32.mxu0 0.0
        %1079 = vmatmul.mubr.f32.gmra.mxu0 %v835
        %v1080 = vpop.f32.mrf.mxu0
        %v1081 = vadd.f32 %v987, %v1080
        %v1082 = vpop.f32.mrf.mxu0
        %1083 = vmatprep.mubr.f32.mxu0 0.0
        %1084 = vmatmul.mubr.f32.gmra.mxu0 %v836
        %v1085 = vpop.f32.mrf.mxu0
        %v1086 = vadd.f32 %v987, %v1085
        %v1087 = vpop.f32.mrf.mxu0
        %1088 = vmatprep.mubr.f32.mxu0 0.0
        %1089 = vmatmul.mubr.f32.gmra.mxu0 %v837
        %v1090 = vpop.f32.mrf.mxu0
        %v1091 = vadd.f32 %v987, %v1090
        %v1092 = vpop.f32.mrf.mxu0
        %1093 = vdwg.mxu0
        %v1094 = vld [vmem:[#allocation8] sm:$0xff]
        %v1095 = vld [vmem:[#allocation8 + $0x8] sm:$0xff]
        %v1096 = vld [vmem:[#allocation8 + $0x10] sm:$0xff]
        %v1097 = vld [vmem:[#allocation8 + $0x18] sm:$0xff]
        %v1098 = vld [vmem:[#allocation8 + $0x20] sm:$0xff]
        %v1099 = vld [vmem:[#allocation8 + $0x28] sm:$0xff]
        %v1100 = vld [vmem:[#allocation8 + $0x30] sm:$0xff]
        %v1101 = vld [vmem:[#allocation8 + $0x38] sm:$0xff]
        %v1102 = vld [vmem:[#allocation8 + $0x40] sm:$0xff]
        %v1103 = vld [vmem:[#allocation8 + $0x48] sm:$0xff]
        %v1104 = vld [vmem:[#allocation8 + $0x50] sm:$0xff]
        %v1105 = vld [vmem:[#allocation8 + $0x58] sm:$0xff]
        %v1106 = vld [vmem:[#allocation8 + $0x60] sm:$0xff]
        %v1107 = vld [vmem:[#allocation8 + $0x68] sm:$0xff]
        %v1108 = vld [vmem:[#allocation8 + $0x70] sm:$0xff]
        %v1109 = vld [vmem:[#allocation8 + $0x78] sm:$0xff]
        %v1110 = vld [vmem:[%s8] sm:$0x1]
        %v1112 = vlaneseq
        %v1113 = vshrl.u32 %v1112, 7
        %v1114 = vsub.s32 0, %v1113
        %v1115 = vrot.slane %v1110, %v1114
        %1117 = vmatprep.subr.mxu0 0.0
        %1118 = vmatpush1.msra.mxu0 %v1109
        %1119 = vmatprep.subr.mxu0 0.0
        %1120 = vmatpush1.msra.mxu0 %v1108
        %1121 = vmatprep.subr.mxu0 0.0
        %1122 = vmatpush1.msra.mxu0 %v1107
        %1123 = vmatprep.subr.mxu0 0.0
        %1124 = vmatpush1.msra.mxu0 %v1106
        %1125 = vmatprep.subr.mxu0 0.0
        %1126 = vmatpush1.msra.mxu0 %v1105
        %1127 = vmatprep.subr.mxu0 0.0
        %1128 = vmatpush1.msra.mxu0 %v1104
        %1129 = vmatprep.subr.mxu0 0.0
        %1130 = vmatpush1.msra.mxu0 %v1103
        %1131 = vmatprep.subr.mxu0 0.0
        %1132 = vmatpush1.msra.mxu0 %v1102
        %1133 = vmatprep.subr.mxu0 0.0
        %1134 = vmatpush1.msra.mxu0 %v1101
        %1135 = vmatprep.subr.mxu0 0.0
        %1136 = vmatpush1.msra.mxu0 %v1100
        %1137 = vmatprep.subr.mxu0 0.0
        %1138 = vmatpush1.msra.mxu0 %v1099
        %1139 = vmatprep.subr.mxu0 0.0
        %1140 = vmatpush1.msra.mxu0 %v1098
        %1141 = vmatprep.subr.mxu0 0.0
        %1142 = vmatpush1.msra.mxu0 %v1097
        %1143 = vmatprep.subr.mxu0 0.0
        %1144 = vmatpush1.msra.mxu0 %v1096
        %1145 = vmatprep.subr.mxu0 0.0
        %1146 = vmatpush1.msra.mxu0 %v1095
        %1147 = vmatprep.subr.mxu0 0.0
        %1148 = vmatpush1.msra.mxu0 %v1094
        %1149 = vmatprep.subr.mxu0 0.0
        %1150 = vmatpush2.msra.mxu0 0.0
        %1151 = vmatprep.subr.mxu0 0.0
        %1152 = vmatpush2.msra.mxu0 0.0
        %1153 = vmatprep.subr.mxu0 0.0
        %1154 = vmatpush2.msra.mxu0 0.0
        %1155 = vmatprep.subr.mxu0 0.0
        %1156 = vmatpush2.msra.mxu0 0.0
        %1157 = vmatprep.subr.mxu0 0.0
        %1158 = vmatpush2.msra.mxu0 0.0
        %1159 = vmatprep.subr.mxu0 0.0
        %1160 = vmatpush2.msra.mxu0 0.0
        %1161 = vmatprep.subr.mxu0 0.0
        %1162 = vmatpush2.msra.mxu0 0.0
        %1163 = vmatprep.subr.mxu0 0.0
        %1164 = vmatpush2.msra.mxu0 0.0
        %1165 = vmatprep.subr.mxu0 0.0
        %1166 = vmatpush2.msra.mxu0 0.0
        %1167 = vmatprep.subr.mxu0 0.0
        %1168 = vmatpush2.msra.mxu0 0.0
        %1169 = vmatprep.subr.mxu0 0.0
        %1170 = vmatpush2.msra.mxu0 0.0
        %1171 = vmatprep.subr.mxu0 0.0
        %1172 = vmatpush2.msra.mxu0 0.0
        %1173 = vmatprep.subr.mxu0 0.0
        %1174 = vmatpush2.msra.mxu0 0.0
        %1175 = vmatprep.subr.mxu0 0.0
        %1176 = vmatpush2.msra.mxu0 0.0
        %1177 = vmatprep.subr.mxu0 0.0
        %1178 = vmatpush2.msra.mxu0 0.0
        %1179 = vmatprep.subr.mxu0 0.0
        %1180 = vmatpush2.msra.mxu0 0.0
        %1181 = vmatprep.mubr.f32.mxu0 0.0
        %1182 = vmatmul.mubr.f32.gmra.mxu0 %v830
        %v1183 = vpop.f32.mrf.mxu0
        %v1184 = vadd.f32 %v1115, %v1183
        %v1185 = vpop.f32.mrf.mxu0
        %1186 = vmatprep.mubr.f32.mxu0 0.0
        %1187 = vmatmul.mubr.f32.gmra.mxu0 %v831
        %v1188 = vpop.f32.mrf.mxu0
        %v1189 = vadd.f32 %v1115, %v1188
        %v1190 = vpop.f32.mrf.mxu0
        %1191 = vmatprep.mubr.f32.mxu0 0.0
        %1192 = vmatmul.mubr.f32.gmra.mxu0 %v832
        %v1193 = vpop.f32.mrf.mxu0
        %v1194 = vadd.f32 %v1115, %v1193
        %v1195 = vpop.f32.mrf.mxu0
        %1196 = vmatprep.mubr.f32.mxu0 0.0
        %1197 = vmatmul.mubr.f32.gmra.mxu0 %v833
        %v1198 = vpop.f32.mrf.mxu0
        %v1199 = vadd.f32 %v1115, %v1198
        %v1200 = vpop.f32.mrf.mxu0
        %1201 = vmatprep.mubr.f32.mxu0 0.0
        %1202 = vmatmul.mubr.f32.gmra.mxu0 %v834
        %v1203 = vpop.f32.mrf.mxu0
        %v1204 = vadd.f32 %v1115, %v1203
        %v1205 = vpop.f32.mrf.mxu0
        %1206 = vmatprep.mubr.f32.mxu0 0.0
        %1207 = vmatmul.mubr.f32.gmra.mxu0 %v835
        %v1208 = vpop.f32.mrf.mxu0
        %v1209 = vadd.f32 %v1115, %v1208
        %v1210 = vpop.f32.mrf.mxu0
        %1211 = vmatprep.mubr.f32.mxu0 0.0
        %1212 = vmatmul.mubr.f32.gmra.mxu0 %v836
        %v1213 = vpop.f32.mrf.mxu0
        %v1214 = vadd.f32 %v1115, %v1213
        %v1215 = vpop.f32.mrf.mxu0
        %1216 = vmatprep.mubr.f32.mxu0 0.0
        %1217 = vmatmul.mubr.f32.gmra.mxu0 %v837
        %v1218 = vpop.f32.mrf.mxu0
        %v1219 = vadd.f32 %v1115, %v1218
        %v1220 = vpop.f32.mrf.mxu0
        %1221 = vdwg.mxu0
        %v1222 = vlaneseq
        %v1223 = vshrl.u32 %v1222, 7
        %v1224 = vadd.s32 %v1223, 8
        %v1225 = vadd.s32 %v1223, 16
        %v1226 = vadd.s32 %v1223, 24
        %v1227 = vadd.s32 %v1223, 32
        %v1228 = vadd.s32 %v1223, 40
        %v1229 = vadd.s32 %v1223, 48
        %v1230 = vadd.s32 %v1223, 56
        %v1231 = vlaneseq
        %v1232 = vand.u32 %v1231, 127
        %vm1233 = vcmp.ge.s32.totalorder %v1232, %v1223
        %vm1234 = vcmp.ge.s32.totalorder %v1232, %v1224
        %vm1235 = vcmp.ge.s32.totalorder %v1232, %v1225
        %vm1236 = vcmp.ge.s32.totalorder %v1232, %v1226
        %vm1237 = vcmp.ge.s32.totalorder %v1232, %v1227
        %vm1238 = vcmp.ge.s32.totalorder %v1232, %v1228
        %vm1239 = vcmp.ge.s32.totalorder %v1232, %v1229
        %vm1240 = vcmp.ge.s32.totalorder %v1232, %v1230
        %v1241 = vld [vmem:[#allocation10] sm:$0xff]
        %v1242 = vld [vmem:[#allocation10 + $0x8] sm:$0xff]
        %v1243 = vld [vmem:[#allocation10 + $0x10] sm:$0xff]
        %v1244 = vld [vmem:[#allocation10 + $0x18] sm:$0xff]
        %v1245 = vld [vmem:[#allocation10 + $0x20] sm:$0xff]
        %v1246 = vld [vmem:[#allocation10 + $0x28] sm:$0xff]
        %v1247 = vld [vmem:[#allocation10 + $0x30] sm:$0xff]
        %v1248 = vld [vmem:[#allocation10 + $0x38] sm:$0xff]
        %v1249 = vld [vmem:[#allocation10 + $0x40] sm:$0xff]
        %v1250 = vld [vmem:[#allocation10 + $0x48] sm:$0xff]
        %v1251 = vld [vmem:[#allocation10 + $0x50] sm:$0xff]
        %v1252 = vld [vmem:[#allocation10 + $0x58] sm:$0xff]
        %v1253 = vld [vmem:[#allocation10 + $0x60] sm:$0xff]
        %v1254 = vld [vmem:[#allocation10 + $0x68] sm:$0xff]
        %v1255 = vld [vmem:[#allocation10 + $0x70] sm:$0xff]
        %v1256 = vld [vmem:[#allocation10 + $0x78] sm:$0xff]
        %vm1257 = vcmask 261120
        %v1259 = vsel %vm1257, %v928, 0
        %v1262 = vsel %vm1257, %v933, 0
        %v1265 = vsel %vm1257, %v938, 0
        %v1268 = vsel %vm1257, %v943, 0
        %v1271 = vsel %vm1257, %v948, 0
        %v1274 = vsel %vm1257, %v953, 0
        %v1277 = vsel %vm1257, %v958, 0
        %v1280 = vsel %vm1257, %v963, 0
        %v1283 = vsel %vm1257, %v1056, 0
        %v1286 = vsel %vm1257, %v1061, 0
        %v1289 = vsel %vm1257, %v1066, 0
        %v1292 = vsel %vm1257, %v1071, 0
        %v1295 = vsel %vm1257, %v1076, 0
        %v1298 = vsel %vm1257, %v1081, 0
        %v1301 = vsel %vm1257, %v1086, 0
        %v1304 = vsel %vm1257, %v1091, 0
        %1306 = vmatprep.subr.mxu0 0.0
        %1307 = vmatpush1.xpose.msra.mxu0 0.0
        %1308 = vmatprep.subr.mxu0 0.0
        %1309 = vmatpush1.xpose.msra.mxu0 0.0
        %1310 = vmatprep.subr.mxu0 0.0
        %1311 = vmatpush1.xpose.msra.mxu0 0.0
        %1312 = vmatprep.subr.mxu0 0.0
        %1313 = vmatpush1.xpose.msra.mxu0 0.0
        %1314 = vmatprep.subr.mxu0 0.0
        %1315 = vmatpush1.xpose.msra.mxu0 0.0
        %1316 = vmatprep.subr.mxu0 0.0
        %1317 = vmatpush1.xpose.msra.mxu0 0.0
        %1318 = vmatprep.subr.mxu0 0.0
        %1319 = vmatpush1.xpose.msra.mxu0 0.0
        %1320 = vmatprep.subr.mxu0 0.0
        %1321 = vmatpush1.xpose.msra.mxu0 0.0
        %1322 = vmatprep.subr.mxu0 0.0
        %1323 = vmatpush1.xpose.msra.mxu0 %v1304
        %1324 = vmatprep.subr.mxu0 0.0
        %1325 = vmatpush1.xpose.msra.mxu0 %v1301
        %1326 = vmatprep.subr.mxu0 0.0
        %1327 = vmatpush1.xpose.msra.mxu0 %v1298
        %1328 = vmatprep.subr.mxu0 0.0
        %1329 = vmatpush1.xpose.msra.mxu0 %v1295
        %1330 = vmatprep.subr.mxu0 0.0
        %1331 = vmatpush1.xpose.msra.mxu0 %v1292
        %1332 = vmatprep.subr.mxu0 0.0
        %1333 = vmatpush1.xpose.msra.mxu0 %v1289
        %1334 = vmatprep.subr.mxu0 0.0
        %1335 = vmatpush1.xpose.msra.mxu0 %v1286
        %1336 = vmatprep.subr.mxu0 0.0
        %1337 = vmatpush1.xpose.msra.mxu0 %v1283
        %1338 = vmatprep.subr.mxu0 0.0
        %1339 = vmatpush2.xpose.msra.mxu0 0.0
        %1340 = vmatprep.subr.mxu0 0.0
        %1341 = vmatpush2.xpose.msra.mxu0 0.0
        %1342 = vmatprep.subr.mxu0 0.0
        %1343 = vmatpush2.xpose.msra.mxu0 0.0
        %1344 = vmatprep.subr.mxu0 0.0
        %1345 = vmatpush2.xpose.msra.mxu0 0.0
        %1346 = vmatprep.subr.mxu0 0.0
        %1347 = vmatpush2.xpose.msra.mxu0 0.0
        %1348 = vmatprep.subr.mxu0 0.0
        %1349 = vmatpush2.xpose.msra.mxu0 0.0
        %1350 = vmatprep.subr.mxu0 0.0
        %1351 = vmatpush2.xpose.msra.mxu0 0.0
        %1352 = vmatprep.subr.mxu0 0.0
        %1353 = vmatpush2.xpose.msra.mxu0 0.0
        %1354 = vmatprep.subr.mxu0 0.0
        %1355 = vmatpush2.xpose.msra.mxu0 0.0
        %1356 = vmatprep.subr.mxu0 0.0
        %1357 = vmatpush2.xpose.msra.mxu0 0.0
        %1358 = vmatprep.subr.mxu0 0.0
        %1359 = vmatpush2.xpose.msra.mxu0 0.0
        %1360 = vmatprep.subr.mxu0 0.0
        %1361 = vmatpush2.xpose.msra.mxu0 0.0
        %1362 = vmatprep.subr.mxu0 0.0
        %1363 = vmatpush2.xpose.msra.mxu0 0.0
        %1364 = vmatprep.subr.mxu0 0.0
        %1365 = vmatpush2.xpose.msra.mxu0 0.0
        %1366 = vmatprep.subr.mxu0 0.0
        %1367 = vmatpush2.xpose.msra.mxu0 0.0
        %1368 = vmatprep.subr.mxu0 0.0
        %1369 = vmatpush2.xpose.msra.mxu0 0.0
        %1370 = vmatprep.mubr.f32.mxu0 0.0
        %1371 = vmatmul.mubr.f32.gmra.mxu0 %v1259
        %v1372 = vpop.f32.mrf.mxu0
        %v1373 = vadd.f32 0.0, %v1372
        %v1374 = vpop.f32.mrf.mxu0
        %1375 = vmatprep.mubr.f32.mxu0 0.0
        %1376 = vmatmul.mubr.f32.gmra.mxu0 %v1262
        %v1377 = vpop.f32.mrf.mxu0
        %v1378 = vadd.f32 0.0, %v1377
        %v1379 = vpop.f32.mrf.mxu0
        %1380 = vmatprep.mubr.f32.mxu0 0.0
        %1381 = vmatmul.mubr.f32.gmra.mxu0 %v1265
        %v1382 = vpop.f32.mrf.mxu0
        %v1383 = vadd.f32 0.0, %v1382
        %v1384 = vpop.f32.mrf.mxu0
        %1385 = vmatprep.mubr.f32.mxu0 0.0
        %1386 = vmatmul.mubr.f32.gmra.mxu0 %v1268
        %v1387 = vpop.f32.mrf.mxu0
        %v1388 = vadd.f32 0.0, %v1387
        %v1389 = vpop.f32.mrf.mxu0
        %1390 = vmatprep.mubr.f32.mxu0 0.0
        %1391 = vmatmul.mubr.f32.gmra.mxu0 %v1271
        %v1392 = vpop.f32.mrf.mxu0
        %v1393 = vadd.f32 0.0, %v1392
        %v1394 = vpop.f32.mrf.mxu0
        %1395 = vmatprep.mubr.f32.mxu0 0.0
        %1396 = vmatmul.mubr.f32.gmra.mxu0 %v1274
        %v1397 = vpop.f32.mrf.mxu0
        %v1398 = vadd.f32 0.0, %v1397
        %v1399 = vpop.f32.mrf.mxu0
        %1400 = vmatprep.mubr.f32.mxu0 0.0
        %1401 = vmatmul.mubr.f32.gmra.mxu0 %v1277
        %v1402 = vpop.f32.mrf.mxu0
        %v1403 = vadd.f32 0.0, %v1402
        %v1404 = vpop.f32.mrf.mxu0
        %1405 = vmatprep.mubr.f32.mxu0 0.0
        %1406 = vmatmul.mubr.f32.gmra.mxu0 %v1280
        %v1407 = vpop.f32.mrf.mxu0
        %v1408 = vadd.f32 0.0, %v1407
        %v1409 = vpop.f32.mrf.mxu0
        %1410 = vdwg.mxu0
        %v1411 = vsel %vm1233, -inf, %v1373
        %v1412 = vsel %vm1234, -inf, %v1378
        %v1413 = vsel %vm1235, -inf, %v1383
        %v1414 = vsel %vm1236, -inf, %v1388
        %v1415 = vsel %vm1237, -inf, %v1393
        %v1416 = vsel %vm1238, -inf, %v1398
        %v1417 = vsel %vm1239, -inf, %v1403
        %v1418 = vsel %vm1240, -inf, %v1408
        %v1419 = vmul.f32 %v1411, 0.17677669
        %v1420 = vmul.f32 %v1412, 0.17677669
        %v1421 = vmul.f32 %v1413, 0.17677669
        %v1422 = vmul.f32 %v1414, 0.17677669
        %v1423 = vmul.f32 %v1415, 0.17677669
        %v1424 = vmul.f32 %v1416, 0.17677669
        %v1425 = vmul.f32 %v1417, 0.17677669
        %v1426 = vmul.f32 %v1418, 0.17677669
        %vm1427 = vcmask 523264
        %v1428 = vsel %vm1427, %v1419, -inf
        %1429 = vmax.xlane.f32.xlu0 %v1428
        %v1430 = vpop.xlane.xlu0 %1429
        %v1431 = vsel %vm1427, %v1420, -inf
        %1432 = vmax.xlane.f32.xlu0 %v1431
        %v1433 = vpop.xlane.xlu0 %1432
        %v1434 = vsel %vm1427, %v1421, -inf
        %1435 = vmax.xlane.f32.xlu0 %v1434
        %v1436 = vpop.xlane.xlu0 %1435
        %v1437 = vsel %vm1427, %v1422, -inf
        %1438 = vmax.xlane.f32.xlu0 %v1437
        %v1439 = vpop.xlane.xlu0 %1438
        %v1440 = vsel %vm1427, %v1423, -inf
        %1441 = vmax.xlane.f32.xlu0 %v1440
        %v1442 = vpop.xlane.xlu0 %1441
        %v1443 = vsel %vm1427, %v1424, -inf
        %1444 = vmax.xlane.f32.xlu0 %v1443
        %v1445 = vpop.xlane.xlu0 %1444
        %v1446 = vsel %vm1427, %v1425, -inf
        %1447 = vmax.xlane.f32.xlu0 %v1446
        %v1448 = vpop.xlane.xlu0 %1447
        %v1449 = vsel %vm1427, %v1426, -inf
        %1450 = vmax.xlane.f32.xlu0 %v1449
        %v1451 = vpop.xlane.xlu0 %1450
        %v1452 = vsub.f32 %v1419, %v1430
        %v1453 = vsub.f32 %v1420, %v1433
        %v1454 = vsub.f32 %v1421, %v1436
        %v1455 = vsub.f32 %v1422, %v1439
        %v1456 = vsub.f32 %v1423, %v1442
        %v1457 = vsub.f32 %v1424, %v1445
        %v1458 = vsub.f32 %v1425, %v1448
        %v1459 = vsub.f32 %v1426, %v1451
        %v1460 = vmul.f32 %v1452, 1.442695
        %v1461 = vpow.pop %v1460
        %v1462 = vmul.f32 %v1453, 1.442695
        %v1463 = vpow.pop %v1462
        %v1464 = vmul.f32 %v1454, 1.442695
        %v1465 = vpow.pop %v1464
        %v1466 = vmul.f32 %v1455, 1.442695
        %v1467 = vpow.pop %v1466
        %v1468 = vmul.f32 %v1456, 1.442695
        %v1469 = vpow.pop %v1468
        %v1470 = vmul.f32 %v1457, 1.442695
        %v1471 = vpow.pop %v1470
        %v1472 = vmul.f32 %v1458, 1.442695
        %v1473 = vpow.pop %v1472
        %v1474 = vmul.f32 %v1459, 1.442695
        %v1475 = vpow.pop %v1474
        %v1476 = vsel %vm1427, %v1461, 0.0
        %1477 = vadd.xlane.f32.xlu0 %v1476
        %v1478 = vpop.xlane.xlu0 %1477
        %v1479 = vsel %vm1427, %v1463, 0.0
        %1480 = vadd.xlane.f32.xlu0 %v1479
        %v1481 = vpop.xlane.xlu0 %1480
        %v1482 = vsel %vm1427, %v1465, 0.0
        %1483 = vadd.xlane.f32.xlu0 %v1482
        %v1484 = vpop.xlane.xlu0 %1483
        %v1485 = vsel %vm1427, %v1467, 0.0
        %1486 = vadd.xlane.f32.xlu0 %v1485
        %v1487 = vpop.xlane.xlu0 %1486
        %v1488 = vsel %vm1427, %v1469, 0.0
        %1489 = vadd.xlane.f32.xlu0 %v1488
        %v1490 = vpop.xlane.xlu0 %1489
        %v1491 = vsel %vm1427, %v1471, 0.0
        %1492 = vadd.xlane.f32.xlu0 %v1491
        %v1493 = vpop.xlane.xlu0 %1492
        %v1494 = vsel %vm1427, %v1473, 0.0
        %1495 = vadd.xlane.f32.xlu0 %v1494
        %v1496 = vpop.xlane.xlu0 %1495
        %v1497 = vsel %vm1427, %v1475, 0.0
        %1498 = vadd.xlane.f32.xlu0 %v1497
        %v1499 = vpop.xlane.xlu0 %1498
        %v1500 = vrcp.pop %v1478
        %v1501 = vmul.f32 %v1461, %v1500
        %v1502 = vrcp.pop %v1481
        %v1503 = vmul.f32 %v1463, %v1502
        %v1504 = vrcp.pop %v1484
        %v1505 = vmul.f32 %v1465, %v1504
        %v1506 = vrcp.pop %v1487
        %v1507 = vmul.f32 %v1467, %v1506
        %v1508 = vrcp.pop %v1490
        %v1509 = vmul.f32 %v1469, %v1508
        %v1510 = vrcp.pop %v1493
        %v1511 = vmul.f32 %v1471, %v1510
        %v1512 = vrcp.pop %v1496
        %v1513 = vmul.f32 %v1473, %v1512
        %v1514 = vrcp.pop %v1499
        %v1515 = vmul.f32 %v1475, %v1514
        %v1517 = vsel %vm1427, %v1501, 0
        %v1520 = vsel %vm1427, %v1503, 0
        %v1523 = vsel %vm1427, %v1505, 0
        %v1526 = vsel %vm1427, %v1507, 0
        %v1529 = vsel %vm1427, %v1509, 0
        %v1532 = vsel %vm1427, %v1511, 0
        %v1535 = vsel %vm1427, %v1513, 0
        %v1538 = vsel %vm1427, %v1515, 0
        %1540 = vmatprep.subr.mxu0 0.0
        %1541 = vmatpush1.msra.mxu0 0.0
        %1542 = vmatprep.subr.mxu0 0.0
        %1543 = vmatpush1.msra.mxu0 0.0
        %1544 = vmatprep.subr.mxu0 0.0
        %1545 = vmatpush1.msra.mxu0 0.0
        %1546 = vmatprep.subr.mxu0 0.0
        %1547 = vmatpush1.msra.mxu0 0.0
        %1548 = vmatprep.subr.mxu0 0.0
        %1549 = vmatpush1.msra.mxu0 0.0
        %1550 = vmatprep.subr.mxu0 0.0
        %1551 = vmatpush1.msra.mxu0 0.0
        %1552 = vmatprep.subr.mxu0 0.0
        %1553 = vmatpush1.msra.mxu0 0.0
        %1554 = vmatprep.subr.mxu0 0.0
        %1555 = vmatpush1.msra.mxu0 0.0
        %1556 = vmatprep.subr.mxu0 0.0
        %1557 = vmatpush1.msra.mxu0 %v1219
        %1558 = vmatprep.subr.mxu0 0.0
        %1559 = vmatpush1.msra.mxu0 %v1214
        %1560 = vmatprep.subr.mxu0 0.0
        %1561 = vmatpush1.msra.mxu0 %v1209
        %1562 = vmatprep.subr.mxu0 0.0
        %1563 = vmatpush1.msra.mxu0 %v1204
        %1564 = vmatprep.subr.mxu0 0.0
        %1565 = vmatpush1.msra.mxu0 %v1199
        %1566 = vmatprep.subr.mxu0 0.0
        %1567 = vmatpush1.msra.mxu0 %v1194
        %1568 = vmatprep.subr.mxu0 0.0
        %1569 = vmatpush1.msra.mxu0 %v1189
        %1570 = vmatprep.subr.mxu0 0.0
        %1571 = vmatpush1.msra.mxu0 %v1184
        %1572 = vmatprep.subr.mxu0 0.0
        %1573 = vmatpush2.msra.mxu0 0.0
        %1574 = vmatprep.subr.mxu0 0.0
        %1575 = vmatpush2.msra.mxu0 0.0
        %1576 = vmatprep.subr.mxu0 0.0
        %1577 = vmatpush2.msra.mxu0 0.0
        %1578 = vmatprep.subr.mxu0 0.0
        %1579 = vmatpush2.msra.mxu0 0.0
        %1580 = vmatprep.subr.mxu0 0.0
        %1581 = vmatpush2.msra.mxu0 0.0
        %1582 = vmatprep.subr.mxu0 0.0
        %1583 = vmatpush2.msra.mxu0 0.0
        %1584 = vmatprep.subr.mxu0 0.0
        %1585 = vmatpush2.msra.mxu0 0.0
        %1586 = vmatprep.subr.mxu0 0.0
        %1587 = vmatpush2.msra.mxu0 0.0
        %1588 = vmatprep.subr.mxu0 0.0
        %1589 = vmatpush2.msra.mxu0 0.0
        %1590 = vmatprep.subr.mxu0 0.0
        %1591 = vmatpush2.msra.mxu0 0.0
        %1592 = vmatprep.subr.mxu0 0.0
        %1593 = vmatpush2.msra.mxu0 0.0
        %1594 = vmatprep.subr.mxu0 0.0
        %1595 = vmatpush2.msra.mxu0 0.0
        %1596 = vmatprep.subr.mxu0 0.0
        %1597 = vmatpush2.msra.mxu0 0.0
        %1598 = vmatprep.subr.mxu0 0.0
        %1599 = vmatpush2.msra.mxu0 0.0
        %1600 = vmatprep.subr.mxu0 0.0
        %1601 = vmatpush2.msra.mxu0 0.0
        %1602 = vmatprep.subr.mxu0 0.0
        %1603 = vmatpush2.msra.mxu0 0.0
        %1604 = vmatprep.mubr.f32.mxu0 0.0
        %1605 = vmatmul.mubr.f32.gmra.mxu0 %v1517
        %v1606 = vpop.f32.mrf.mxu0
        %v1607 = vadd.f32 0.0, %v1606
        %v1608 = vpop.f32.mrf.mxu0
        %1609 = vmatprep.mubr.f32.mxu0 0.0
        %1610 = vmatmul.mubr.f32.gmra.mxu0 %v1520
        %v1611 = vpop.f32.mrf.mxu0
        %v1612 = vadd.f32 0.0, %v1611
        %v1613 = vpop.f32.mrf.mxu0
        %1614 = vmatprep.mubr.f32.mxu0 0.0
        %1615 = vmatmul.mubr.f32.gmra.mxu0 %v1523
        %v1616 = vpop.f32.mrf.mxu0
        %v1617 = vadd.f32 0.0, %v1616
        %v1618 = vpop.f32.mrf.mxu0
        %1619 = vmatprep.mubr.f32.mxu0 0.0
        %1620 = vmatmul.mubr.f32.gmra.mxu0 %v1526
        %v1621 = vpop.f32.mrf.mxu0
        %v1622 = vadd.f32 0.0, %v1621
        %v1623 = vpop.f32.mrf.mxu0
        %1624 = vmatprep.mubr.f32.mxu0 0.0
        %1625 = vmatmul.mubr.f32.gmra.mxu0 %v1529
        %v1626 = vpop.f32.mrf.mxu0
        %v1627 = vadd.f32 0.0, %v1626
        %v1628 = vpop.f32.mrf.mxu0
        %1629 = vmatprep.mubr.f32.mxu0 0.0
        %1630 = vmatmul.mubr.f32.gmra.mxu0 %v1532
        %v1631 = vpop.f32.mrf.mxu0
        %v1632 = vadd.f32 0.0, %v1631
        %v1633 = vpop.f32.mrf.mxu0
        %1634 = vmatprep.mubr.f32.mxu0 0.0
        %1635 = vmatmul.mubr.f32.gmra.mxu0 %v1535
        %v1636 = vpop.f32.mrf.mxu0
        %v1637 = vadd.f32 0.0, %v1636
        %v1638 = vpop.f32.mrf.mxu0
        %1639 = vmatprep.mubr.f32.mxu0 0.0
        %1640 = vmatmul.mubr.f32.gmra.mxu0 %v1538
        %v1641 = vpop.f32.mrf.mxu0
        %v1642 = vadd.f32 0.0, %v1641
        %v1643 = vpop.f32.mrf.mxu0
        %1644 = vdwg.mxu0
        %1645 = vrot.lane.b32.xlu0 %v928, 96
        %v1646 = vpop.permute.xlu0 %1645
        %1647 = vrot.lane.b32.xlu0 %v933, 96
        %v1648 = vpop.permute.xlu0 %1647
        %1649 = vrot.lane.b32.xlu0 %v938, 96
        %v1650 = vpop.permute.xlu0 %1649
        %1651 = vrot.lane.b32.xlu0 %v943, 96
        %v1652 = vpop.permute.xlu0 %1651
        %1653 = vrot.lane.b32.xlu0 %v948, 96
        %v1654 = vpop.permute.xlu0 %1653
        %1655 = vrot.lane.b32.xlu0 %v953, 96
        %v1656 = vpop.permute.xlu0 %1655
        %1657 = vrot.lane.b32.xlu0 %v958, 96
        %v1658 = vpop.permute.xlu0 %1657
        %1659 = vrot.lane.b32.xlu0 %v963, 96
        %v1660 = vpop.permute.xlu0 %1659
        %1661 = vrot.lane.b32.xlu0 %v1056, 96
        %v1662 = vpop.permute.xlu0 %1661
        %1663 = vrot.lane.b32.xlu0 %v1061, 96
        %v1664 = vpop.permute.xlu0 %1663
        %1665 = vrot.lane.b32.xlu0 %v1066, 96
        %v1666 = vpop.permute.xlu0 %1665
        %1667 = vrot.lane.b32.xlu0 %v1071, 96
        %v1668 = vpop.permute.xlu0 %1667
        %1669 = vrot.lane.b32.xlu0 %v1076, 96
        %v1670 = vpop.permute.xlu0 %1669
        %1671 = vrot.lane.b32.xlu0 %v1081, 96
        %v1672 = vpop.permute.xlu0 %1671
        %1673 = vrot.lane.b32.xlu0 %v1086, 96
        %v1674 = vpop.permute.xlu0 %1673
        %1675 = vrot.lane.b32.xlu0 %v1091, 96
        %v1676 = vpop.permute.xlu0 %1675
        %v1677 = vsel %vm1257, %v1646, 0
        %v1679 = vsel %vm1257, %v1648, 0
        %v1681 = vsel %vm1257, %v1650, 0
        %v1683 = vsel %vm1257, %v1652, 0
        %v1685 = vsel %vm1257, %v1654, 0
        %v1687 = vsel %vm1257, %v1656, 0
        %v1689 = vsel %vm1257, %v1658, 0
        %v1691 = vsel %vm1257, %v1660, 0
        %v1693 = vsel %vm1257, %v1662, 0
        %v1695 = vsel %vm1257, %v1664, 0
        %v1697 = vsel %vm1257, %v1666, 0
        %v1699 = vsel %vm1257, %v1668, 0
        %v1701 = vsel %vm1257, %v1670, 0
        %v1703 = vsel %vm1257, %v1672, 0
        %v1705 = vsel %vm1257, %v1674, 0
        %v1707 = vsel %vm1257, %v1676, 0
        %1709 = vmatprep.subr.mxu0 0.0
        %1710 = vmatpush1.xpose.msra.mxu0 0.0
        %1711 = vmatprep.subr.mxu0 0.0
        %1712 = vmatpush1.xpose.msra.mxu0 0.0
        %1713 = vmatprep.subr.mxu0 0.0
        %1714 = vmatpush1.xpose.msra.mxu0 0.0
        %1715 = vmatprep.subr.mxu0 0.0
        %1716 = vmatpush1.xpose.msra.mxu0 0.0
        %1717 = vmatprep.subr.mxu0 0.0
        %1718 = vmatpush1.xpose.msra.mxu0 0.0
        %1719 = vmatprep.subr.mxu0 0.0
        %1720 = vmatpush1.xpose.msra.mxu0 0.0
        %1721 = vmatprep.subr.mxu0 0.0
        %1722 = vmatpush1.xpose.msra.mxu0 0.0
        %1723 = vmatprep.subr.mxu0 0.0
        %1724 = vmatpush1.xpose.msra.mxu0 0.0
        %1725 = vmatprep.subr.mxu0 0.0
        %1726 = vmatpush1.xpose.msra.mxu0 %v1707
        %1727 = vmatprep.subr.mxu0 0.0
        %1728 = vmatpush1.xpose.msra.mxu0 %v1705
        %1729 = vmatprep.subr.mxu0 0.0
        %1730 = vmatpush1.xpose.msra.mxu0 %v1703
        %1731 = vmatprep.subr.mxu0 0.0
        %1732 = vmatpush1.xpose.msra.mxu0 %v1701
        %1733 = vmatprep.subr.mxu0 0.0
        %1734 = vmatpush1.xpose.msra.mxu0 %v1699
        %1735 = vmatprep.subr.mxu0 0.0
        %1736 = vmatpush1.xpose.msra.mxu0 %v1697
        %1737 = vmatprep.subr.mxu0 0.0
        %1738 = vmatpush1.xpose.msra.mxu0 %v1695
        %1739 = vmatprep.subr.mxu0 0.0
        %1740 = vmatpush1.xpose.msra.mxu0 %v1693
        %1741 = vmatprep.subr.mxu0 0.0
        %1742 = vmatpush2.xpose.msra.mxu0 0.0
        %1743 = vmatprep.subr.mxu0 0.0
        %1744 = vmatpush2.xpose.msra.mxu0 0.0
        %1745 = vmatprep.subr.mxu0 0.0
        %1746 = vmatpush2.xpose.msra.mxu0 0.0
        %1747 = vmatprep.subr.mxu0 0.0
        %1748 = vmatpush2.xpose.msra.mxu0 0.0
        %1749 = vmatprep.subr.mxu0 0.0
        %1750 = vmatpush2.xpose.msra.mxu0 0.0
        %1751 = vmatprep.subr.mxu0 0.0
        %1752 = vmatpush2.xpose.msra.mxu0 0.0
        %1753 = vmatprep.subr.mxu0 0.0
        %1754 = vmatpush2.xpose.msra.mxu0 0.0
        %1755 = vmatprep.subr.mxu0 0.0
        %1756 = vmatpush2.xpose.msra.mxu0 0.0
        %1757 = vmatprep.subr.mxu0 0.0
        %1758 = vmatpush2.xpose.msra.mxu0 0.0
        %1759 = vmatprep.subr.mxu0 0.0
        %1760 = vmatpush2.xpose.msra.mxu0 0.0
        %1761 = vmatprep.subr.mxu0 0.0
        %1762 = vmatpush2.xpose.msra.mxu0 0.0
        %1763 = vmatprep.subr.mxu0 0.0
        %1764 = vmatpush2.xpose.msra.mxu0 0.0
        %1765 = vmatprep.subr.mxu0 0.0
        %1766 = vmatpush2.xpose.msra.mxu0 0.0
        %1767 = vmatprep.subr.mxu0 0.0
        %1768 = vmatpush2.xpose.msra.mxu0 0.0
        %1769 = vmatprep.subr.mxu0 0.0
        %1770 = vmatpush2.xpose.msra.mxu0 0.0
        %1771 = vmatprep.subr.mxu0 0.0
        %1772 = vmatpush2.xpose.msra.mxu0 0.0
        %1773 = vmatprep.mubr.f32.mxu0 0.0
        %1774 = vmatmul.mubr.f32.gmra.mxu0 %v1677
        %v1775 = vpop.f32.mrf.mxu0
        %v1776 = vadd.f32 0.0, %v1775
        %v1777 = vpop.f32.mrf.mxu0
        %1778 = vmatprep.mubr.f32.mxu0 0.0
        %1779 = vmatmul.mubr.f32.gmra.mxu0 %v1679
        %v1780 = vpop.f32.mrf.mxu0
        %v1781 = vadd.f32 0.0, %v1780
        %v1782 = vpop.f32.mrf.mxu0
        %1783 = vmatprep.mubr.f32.mxu0 0.0
        %1784 = vmatmul.mubr.f32.gmra.mxu0 %v1681
        %v1785 = vpop.f32.mrf.mxu0
        %v1786 = vadd.f32 0.0, %v1785
        %v1787 = vpop.f32.mrf.mxu0
        %1788 = vmatprep.mubr.f32.mxu0 0.0
        %1789 = vmatmul.mubr.f32.gmra.mxu0 %v1683
        %v1790 = vpop.f32.mrf.mxu0
        %v1791 = vadd.f32 0.0, %v1790
        %v1792 = vpop.f32.mrf.mxu0
        %1793 = vmatprep.mubr.f32.mxu0 0.0
        %1794 = vmatmul.mubr.f32.gmra.mxu0 %v1685
        %v1795 = vpop.f32.mrf.mxu0
        %v1796 = vadd.f32 0.0, %v1795
        %v1797 = vpop.f32.mrf.mxu0
        %1798 = vmatprep.mubr.f32.mxu0 0.0
        %1799 = vmatmul.mubr.f32.gmra.mxu0 %v1687
        %v1800 = vpop.f32.mrf.mxu0
        %v1801 = vadd.f32 0.0, %v1800
        %v1802 = vpop.f32.mrf.mxu0
        %1803 = vmatprep.mubr.f32.mxu0 0.0
        %1804 = vmatmul.mubr.f32.gmra.mxu0 %v1689
        %v1805 = vpop.f32.mrf.mxu0
        %v1806 = vadd.f32 0.0, %v1805
        %v1807 = vpop.f32.mrf.mxu0
        %1808 = vmatprep.mubr.f32.mxu0 0.0
        %1809 = vmatmul.mubr.f32.gmra.mxu0 %v1691
        %v1810 = vpop.f32.mrf.mxu0
        %v1811 = vadd.f32 0.0, %v1810
        %v1812 = vpop.f32.mrf.mxu0
        %1813 = vdwg.mxu0
        %v1814 = vsel %vm1233, -inf, %v1776
        %v1815 = vsel %vm1234, -inf, %v1781
        %v1816 = vsel %vm1235, -inf, %v1786
        %v1817 = vsel %vm1236, -inf, %v1791
        %v1818 = vsel %vm1237, -inf, %v1796
        %v1819 = vsel %vm1238, -inf, %v1801
        %v1820 = vsel %vm1239, -inf, %v1806
        %v1821 = vsel %vm1240, -inf, %v1811
        %v1822 = vmul.f32 %v1814, 0.17677669
        %v1823 = vmul.f32 %v1815, 0.17677669
        %v1824 = vmul.f32 %v1816, 0.17677669
        %v1825 = vmul.f32 %v1817, 0.17677669
        %v1826 = vmul.f32 %v1818, 0.17677669
        %v1827 = vmul.f32 %v1819, 0.17677669
        %v1828 = vmul.f32 %v1820, 0.17677669
        %v1829 = vmul.f32 %v1821, 0.17677669
        %v1830 = vsel %vm1427, %v1822, -inf
        %1831 = vmax.xlane.f32.xlu0 %v1830
        %v1832 = vpop.xlane.xlu0 %1831
        %v1833 = vsel %vm1427, %v1823, -inf
        %1834 = vmax.xlane.f32.xlu0 %v1833
        %v1835 = vpop.xlane.xlu0 %1834
        %v1836 = vsel %vm1427, %v1824, -inf
        %1837 = vmax.xlane.f32.xlu0 %v1836
        %v1838 = vpop.xlane.xlu0 %1837
        %v1839 = vsel %vm1427, %v1825, -inf
        %1840 = vmax.xlane.f32.xlu0 %v1839
        %v1841 = vpop.xlane.xlu0 %1840
        %v1842 = vsel %vm1427, %v1826, -inf
        %1843 = vmax.xlane.f32.xlu0 %v1842
        %v1844 = vpop.xlane.xlu0 %1843
        %v1845 = vsel %vm1427, %v1827, -inf
        %1846 = vmax.xlane.f32.xlu0 %v1845
        %v1847 = vpop.xlane.xlu0 %1846
        %v1848 = vsel %vm1427, %v1828, -inf
        %1849 = vmax.xlane.f32.xlu0 %v1848
        %v1850 = vpop.xlane.xlu0 %1849
        %v1851 = vsel %vm1427, %v1829, -inf
        %1852 = vmax.xlane.f32.xlu0 %v1851
        %v1853 = vpop.xlane.xlu0 %1852
        %v1854 = vsub.f32 %v1822, %v1832
        %v1855 = vsub.f32 %v1823, %v1835
        %v1856 = vsub.f32 %v1824, %v1838
        %v1857 = vsub.f32 %v1825, %v1841
        %v1858 = vsub.f32 %v1826, %v1844
        %v1859 = vsub.f32 %v1827, %v1847
        %v1860 = vsub.f32 %v1828, %v1850
        %v1861 = vsub.f32 %v1829, %v1853
        %v1862 = vmul.f32 %v1854, 1.442695
        %v1863 = vpow.pop %v1862
        %v1864 = vmul.f32 %v1855, 1.442695
        %v1865 = vpow.pop %v1864
        %v1866 = vmul.f32 %v1856, 1.442695
        %v1867 = vpow.pop %v1866
        %v1868 = vmul.f32 %v1857, 1.442695
        %v1869 = vpow.pop %v1868
        %v1870 = vmul.f32 %v1858, 1.442695
        %v1871 = vpow.pop %v1870
        %v1872 = vmul.f32 %v1859, 1.442695
        %v1873 = vpow.pop %v1872
        %v1874 = vmul.f32 %v1860, 1.442695
        %v1875 = vpow.pop %v1874
        %v1876 = vmul.f32 %v1861, 1.442695
        %v1877 = vpow.pop %v1876
        %v1878 = vsel %vm1427, %v1863, 0.0
        %1879 = vadd.xlane.f32.xlu0 %v1878
        %v1880 = vpop.xlane.xlu0 %1879
        %v1881 = vsel %vm1427, %v1865, 0.0
        %1882 = vadd.xlane.f32.xlu0 %v1881
        %v1883 = vpop.xlane.xlu0 %1882
        %v1884 = vsel %vm1427, %v1867, 0.0
        %1885 = vadd.xlane.f32.xlu0 %v1884
        %v1886 = vpop.xlane.xlu0 %1885
        %v1887 = vsel %vm1427, %v1869, 0.0
        %1888 = vadd.xlane.f32.xlu0 %v1887
        %v1889 = vpop.xlane.xlu0 %1888
        %v1890 = vsel %vm1427, %v1871, 0.0
        %1891 = vadd.xlane.f32.xlu0 %v1890
        %v1892 = vpop.xlane.xlu0 %1891
        %v1893 = vsel %vm1427, %v1873, 0.0
        %1894 = vadd.xlane.f32.xlu0 %v1893
        %v1895 = vpop.xlane.xlu0 %1894
        %v1896 = vsel %vm1427, %v1875, 0.0
        %1897 = vadd.xlane.f32.xlu0 %v1896
        %v1898 = vpop.xlane.xlu0 %1897
        %v1899 = vsel %vm1427, %v1877, 0.0
        %1900 = vadd.xlane.f32.xlu0 %v1899
        %v1901 = vpop.xlane.xlu0 %1900
        %v1902 = vrcp.pop %v1880
        %v1903 = vmul.f32 %v1863, %v1902
        %v1904 = vrcp.pop %v1883
        %v1905 = vmul.f32 %v1865, %v1904
        %v1906 = vrcp.pop %v1886
        %v1907 = vmul.f32 %v1867, %v1906
        %v1908 = vrcp.pop %v1889
        %v1909 = vmul.f32 %v1869, %v1908
        %v1910 = vrcp.pop %v1892
        %v1911 = vmul.f32 %v1871, %v1910
        %v1912 = vrcp.pop %v1895
        %v1913 = vmul.f32 %v1873, %v1912
        %v1914 = vrcp.pop %v1898
        %v1915 = vmul.f32 %v1875, %v1914
        %v1916 = vrcp.pop %v1901
        %v1917 = vmul.f32 %v1877, %v1916
        %1926 = vrot.lane.b32.xlu0 %v1184, 96
        %v1927 = vpop.permute.xlu0 %1926
        %1928 = vrot.lane.b32.xlu0 %v1189, 96
        %v1929 = vpop.permute.xlu0 %1928
        %1930 = vrot.lane.b32.xlu0 %v1194, 96
        %v1931 = vpop.permute.xlu0 %1930
        %1932 = vrot.lane.b32.xlu0 %v1199, 96
        %v1933 = vpop.permute.xlu0 %1932
        %1934 = vrot.lane.b32.xlu0 %v1204, 96
        %v1935 = vpop.permute.xlu0 %1934
        %1936 = vrot.lane.b32.xlu0 %v1209, 96
        %v1937 = vpop.permute.xlu0 %1936
        %1938 = vrot.lane.b32.xlu0 %v1214, 96
        %v1939 = vpop.permute.xlu0 %1938
        %1940 = vrot.lane.b32.xlu0 %v1219, 96
        %v1941 = vpop.permute.xlu0 %1940
        %v1951 = vsel %vm1427, %v1903, 0
        %v1954 = vsel %vm1427, %v1905, 0
        %v1957 = vsel %vm1427, %v1907, 0
        %v1960 = vsel %vm1427, %v1909, 0
        %v1963 = vsel %vm1427, %v1911, 0
        %v1966 = vsel %vm1427, %v1913, 0
        %v1969 = vsel %vm1427, %v1915, 0
        %v1972 = vsel %vm1427, %v1917, 0
        %1974 = vmatprep.subr.mxu0 0.0
        %1975 = vmatpush1.msra.mxu0 0.0
        %1976 = vmatprep.subr.mxu0 0.0
        %1977 = vmatpush1.msra.mxu0 0.0
        %1978 = vmatprep.subr.mxu0 0.0
        %1979 = vmatpush1.msra.mxu0 0.0
        %1980 = vmatprep.subr.mxu0 0.0
        %1981 = vmatpush1.msra.mxu0 0.0
        %1982 = vmatprep.subr.mxu0 0.0
        %1983 = vmatpush1.msra.mxu0 0.0
        %1984 = vmatprep.subr.mxu0 0.0
        %1985 = vmatpush1.msra.mxu0 0.0
        %1986 = vmatprep.subr.mxu0 0.0
        %1987 = vmatpush1.msra.mxu0 0.0
        %1988 = vmatprep.subr.mxu0 0.0
        %1989 = vmatpush1.msra.mxu0 0.0
        %1990 = vmatprep.subr.mxu0 0.0
        %1991 = vmatpush1.msra.mxu0 %v1941
        %1992 = vmatprep.subr.mxu0 0.0
        %1993 = vmatpush1.msra.mxu0 %v1939
        %1994 = vmatprep.subr.mxu0 0.0
        %1995 = vmatpush1.msra.mxu0 %v1937
        %1996 = vmatprep.subr.mxu0 0.0
        %1997 = vmatpush1.msra.mxu0 %v1935
        %1998 = vmatprep.subr.mxu0 0.0
        %1999 = vmatpush1.msra.mxu0 %v1933
        %2000 = vmatprep.subr.mxu0 0.0
        %2001 = vmatpush1.msra.mxu0 %v1931
        %2002 = vmatprep.subr.mxu0 0.0
        %2003 = vmatpush1.msra.mxu0 %v1929
        %2004 = vmatprep.subr.mxu0 0.0
        %2005 = vmatpush1.msra.mxu0 %v1927
        %2006 = vmatprep.subr.mxu0 0.0
        %2007 = vmatpush2.msra.mxu0 0.0
        %2008 = vmatprep.subr.mxu0 0.0
        %2009 = vmatpush2.msra.mxu0 0.0
        %2010 = vmatprep.subr.mxu0 0.0
        %2011 = vmatpush2.msra.mxu0 0.0
        %2012 = vmatprep.subr.mxu0 0.0
        %2013 = vmatpush2.msra.mxu0 0.0
        %2014 = vmatprep.subr.mxu0 0.0
        %2015 = vmatpush2.msra.mxu0 0.0
        %2016 = vmatprep.subr.mxu0 0.0
        %2017 = vmatpush2.msra.mxu0 0.0
        %2018 = vmatprep.subr.mxu0 0.0
        %2019 = vmatpush2.msra.mxu0 0.0
        %2020 = vmatprep.subr.mxu0 0.0
        %2021 = vmatpush2.msra.mxu0 0.0
        %2022 = vmatprep.subr.mxu0 0.0
        %2023 = vmatpush2.msra.mxu0 0.0
        %2024 = vmatprep.subr.mxu0 0.0
        %2025 = vmatpush2.msra.mxu0 0.0
        %2026 = vmatprep.subr.mxu0 0.0
        %2027 = vmatpush2.msra.mxu0 0.0
        %2028 = vmatprep.subr.mxu0 0.0
        %2029 = vmatpush2.msra.mxu0 0.0
        %2030 = vmatprep.subr.mxu0 0.0
        %2031 = vmatpush2.msra.mxu0 0.0
        %2032 = vmatprep.subr.mxu0 0.0
        %2033 = vmatpush2.msra.mxu0 0.0
        %2034 = vmatprep.subr.mxu0 0.0
        %2035 = vmatpush2.msra.mxu0 0.0
        %2036 = vmatprep.subr.mxu0 0.0
        %2037 = vmatpush2.msra.mxu0 0.0
        %2038 = vmatprep.mubr.f32.mxu0 0.0
        %2039 = vmatmul.mubr.f32.gmra.mxu0 %v1951
        %v2040 = vpop.f32.mrf.mxu0
        %v2041 = vadd.f32 0.0, %v2040
        %v2042 = vpop.f32.mrf.mxu0
        %2043 = vmatprep.mubr.f32.mxu0 0.0
        %2044 = vmatmul.mubr.f32.gmra.mxu0 %v1954
        %v2045 = vpop.f32.mrf.mxu0
        %v2046 = vadd.f32 0.0, %v2045
        %v2047 = vpop.f32.mrf.mxu0
        %2048 = vmatprep.mubr.f32.mxu0 0.0
        %2049 = vmatmul.mubr.f32.gmra.mxu0 %v1957
        %v2050 = vpop.f32.mrf.mxu0
        %v2051 = vadd.f32 0.0, %v2050
        %v2052 = vpop.f32.mrf.mxu0
        %2053 = vmatprep.mubr.f32.mxu0 0.0
        %2054 = vmatmul.mubr.f32.gmra.mxu0 %v1960
        %v2055 = vpop.f32.mrf.mxu0
        %v2056 = vadd.f32 0.0, %v2055
        %v2057 = vpop.f32.mrf.mxu0
        %2058 = vmatprep.mubr.f32.mxu0 0.0
        %2059 = vmatmul.mubr.f32.gmra.mxu0 %v1963
        %v2060 = vpop.f32.mrf.mxu0
        %v2061 = vadd.f32 0.0, %v2060
        %v2062 = vpop.f32.mrf.mxu0
        %2063 = vmatprep.mubr.f32.mxu0 0.0
        %2064 = vmatmul.mubr.f32.gmra.mxu0 %v1966
        %v2065 = vpop.f32.mrf.mxu0
        %v2066 = vadd.f32 0.0, %v2065
        %v2067 = vpop.f32.mrf.mxu0
        %2068 = vmatprep.mubr.f32.mxu0 0.0
        %2069 = vmatmul.mubr.f32.gmra.mxu0 %v1969
        %v2070 = vpop.f32.mrf.mxu0
        %v2071 = vadd.f32 0.0, %v2070
        %v2072 = vpop.f32.mrf.mxu0
        %2073 = vmatprep.mubr.f32.mxu0 0.0
        %2074 = vmatmul.mubr.f32.gmra.mxu0 %v1972
        %v2075 = vpop.f32.mrf.mxu0
        %v2076 = vadd.f32 0.0, %v2075
        %v2077 = vpop.f32.mrf.mxu0
        %2078 = vdwg.mxu0
        %v2080 = vsel %vm1257, %v2041, 0
        %v2083 = vsel %vm1257, %v2046, 0
        %v2086 = vsel %vm1257, %v2051, 0
        %v2089 = vsel %vm1257, %v2056, 0
        %v2092 = vsel %vm1257, %v2061, 0
        %v2095 = vsel %vm1257, %v2066, 0
        %v2098 = vsel %vm1257, %v2071, 0
        %v2101 = vsel %vm1257, %v2076, 0
        %2103 = vmatprep.subr.mxu0 0.0
        %2104 = vmatpush1.msra.mxu0 0.0
        %2105 = vmatprep.subr.mxu0 0.0
        %2106 = vmatpush1.msra.mxu0 0.0
        %2107 = vmatprep.subr.mxu0 0.0
        %2108 = vmatpush1.msra.mxu0 0.0
        %2109 = vmatprep.subr.mxu0 0.0
        %2110 = vmatpush1.msra.mxu0 0.0
        %2111 = vmatprep.subr.mxu0 0.0
        %2112 = vmatpush1.msra.mxu0 0.0
        %2113 = vmatprep.subr.mxu0 0.0
        %2114 = vmatpush1.msra.mxu0 0.0
        %2115 = vmatprep.subr.mxu0 0.0
        %2116 = vmatpush1.msra.mxu0 0.0
        %2117 = vmatprep.subr.mxu0 0.0
        %2118 = vmatpush1.msra.mxu0 0.0
        %2119 = vmatprep.subr.mxu0 0.0
        %2120 = vmatpush1.msra.mxu0 0.0
        %2121 = vmatprep.subr.mxu0 0.0
        %2122 = vmatpush1.msra.mxu0 0.0
        %2123 = vmatprep.subr.mxu0 0.0
        %2124 = vmatpush1.msra.mxu0 0.0
        %2125 = vmatprep.subr.mxu0 0.0
        %2126 = vmatpush1.msra.mxu0 0.0
        %2127 = vmatprep.subr.mxu0 0.0
        %2128 = vmatpush1.msra.mxu0 %v1248
        %2129 = vmatprep.subr.mxu0 0.0
        %2130 = vmatpush1.msra.mxu0 %v1247
        %2131 = vmatprep.subr.mxu0 0.0
        %2132 = vmatpush1.msra.mxu0 %v1246
        %2133 = vmatprep.subr.mxu0 0.0
        %2134 = vmatpush1.msra.mxu0 %v1245
        %2135 = vmatprep.subr.mxu0 0.0
        %2136 = vmatpush2.msra.mxu0 0.0
        %2137 = vmatprep.subr.mxu0 0.0
        %2138 = vmatpush2.msra.mxu0 0.0
        %2139 = vmatprep.subr.mxu0 0.0
        %2140 = vmatpush2.msra.mxu0 0.0
        %2141 = vmatprep.subr.mxu0 0.0
        %2142 = vmatpush2.msra.mxu0 0.0
        %2143 = vmatprep.subr.mxu0 0.0
        %2144 = vmatpush2.msra.mxu0 0.0
        %2145 = vmatprep.subr.mxu0 0.0
        %2146 = vmatpush2.msra.mxu0 0.0
        %2147 = vmatprep.subr.mxu0 0.0
        %2148 = vmatpush2.msra.mxu0 0.0
        %2149 = vmatprep.subr.mxu0 0.0
        %2150 = vmatpush2.msra.mxu0 0.0
        %2151 = vmatprep.subr.mxu0 0.0
        %2152 = vmatpush2.msra.mxu0 0.0
        %2153 = vmatprep.subr.mxu0 0.0
        %2154 = vmatpush2.msra.mxu0 0.0
        %2155 = vmatprep.subr.mxu0 0.0
        %2156 = vmatpush2.msra.mxu0 0.0
        %2157 = vmatprep.subr.mxu0 0.0
        %2158 = vmatpush2.msra.mxu0 0.0
        %2159 = vmatprep.subr.mxu0 0.0
        %2160 = vmatpush2.msra.mxu0 0.0
        %2161 = vmatprep.subr.mxu0 0.0
        %2162 = vmatpush2.msra.mxu0 0.0
        %2163 = vmatprep.subr.mxu0 0.0
        %2164 = vmatpush2.msra.mxu0 0.0
        %2165 = vmatprep.subr.mxu0 0.0
        %2166 = vmatpush2.msra.mxu0 0.0
        %2167 = vmatprep.mubr.f32.mxu0 0.0
        %2168 = vmatmul.mubr.f32.gmra.mxu0 %v2080
        %v2169 = vpop.f32.mrf.mxu0
        %v2170 = vadd.f32 0.0, %v2169
        %v2171 = vpop.f32.mrf.mxu0
        %2172 = vmatprep.mubr.f32.mxu0 0.0
        %2173 = vmatmul.mubr.f32.gmra.mxu0 %v2083
        %v2174 = vpop.f32.mrf.mxu0
        %v2175 = vadd.f32 0.0, %v2174
        %v2176 = vpop.f32.mrf.mxu0
        %2177 = vmatprep.mubr.f32.mxu0 0.0
        %2178 = vmatmul.mubr.f32.gmra.mxu0 %v2086
        %v2179 = vpop.f32.mrf.mxu0
        %v2180 = vadd.f32 0.0, %v2179
        %v2181 = vpop.f32.mrf.mxu0
        %2182 = vmatprep.mubr.f32.mxu0 0.0
        %2183 = vmatmul.mubr.f32.gmra.mxu0 %v2089
        %v2184 = vpop.f32.mrf.mxu0
        %v2185 = vadd.f32 0.0, %v2184
        %v2186 = vpop.f32.mrf.mxu0
        %2187 = vmatprep.mubr.f32.mxu0 0.0
        %2188 = vmatmul.mubr.f32.gmra.mxu0 %v2092
        %v2189 = vpop.f32.mrf.mxu0
        %v2190 = vadd.f32 0.0, %v2189
        %v2191 = vpop.f32.mrf.mxu0
        %2192 = vmatprep.mubr.f32.mxu0 0.0
        %2193 = vmatmul.mubr.f32.gmra.mxu0 %v2095
        %v2194 = vpop.f32.mrf.mxu0
        %v2195 = vadd.f32 0.0, %v2194
        %v2196 = vpop.f32.mrf.mxu0
        %2197 = vmatprep.mubr.f32.mxu0 0.0
        %2198 = vmatmul.mubr.f32.gmra.mxu0 %v2098
        %v2199 = vpop.f32.mrf.mxu0
        %v2200 = vadd.f32 0.0, %v2199
        %v2201 = vpop.f32.mrf.mxu0
        %2202 = vmatprep.mubr.f32.mxu0 0.0
        %2203 = vmatmul.mubr.f32.gmra.mxu0 %v2101
        %v2204 = vpop.f32.mrf.mxu0
        %v2205 = vadd.f32 0.0, %v2204
        %v2206 = vpop.f32.mrf.mxu0
        %2207 = vdwg.mxu0
        %v2209 = vsel %vm1257, %v1607, 0
        %v2212 = vsel %vm1257, %v1612, 0
        %v2215 = vsel %vm1257, %v1617, 0
        %v2218 = vsel %vm1257, %v1622, 0
        %v2221 = vsel %vm1257, %v1627, 0
        %v2224 = vsel %vm1257, %v1632, 0
        %v2227 = vsel %vm1257, %v1637, 0
        %v2230 = vsel %vm1257, %v1642, 0
        %2232 = vmatprep.subr.mxu0 0.0
        %2233 = vmatpush1.msra.mxu0 0.0
        %2234 = vmatprep.subr.mxu0 0.0
        %2235 = vmatpush1.msra.mxu0 0.0
        %2236 = vmatprep.subr.mxu0 0.0
        %2237 = vmatpush1.msra.mxu0 0.0
        %2238 = vmatprep.subr.mxu0 0.0
        %2239 = vmatpush1.msra.mxu0 0.0
        %2240 = vmatprep.subr.mxu0 0.0
        %2241 = vmatpush1.msra.mxu0 0.0
        %2242 = vmatprep.subr.mxu0 0.0
        %2243 = vmatpush1.msra.mxu0 0.0
        %2244 = vmatprep.subr.mxu0 0.0
        %2245 = vmatpush1.msra.mxu0 0.0
        %2246 = vmatprep.subr.mxu0 0.0
        %2247 = vmatpush1.msra.mxu0 0.0
        %2248 = vmatprep.subr.mxu0 0.0
        %2249 = vmatpush1.msra.mxu0 0.0
        %2250 = vmatprep.subr.mxu0 0.0
        %2251 = vmatpush1.msra.mxu0 0.0
        %2252 = vmatprep.subr.mxu0 0.0
        %2253 = vmatpush1.msra.mxu0 0.0
        %2254 = vmatprep.subr.mxu0 0.0
        %2255 = vmatpush1.msra.mxu0 0.0
        %2256 = vmatprep.subr.mxu0 0.0
        %2257 = vmatpush1.msra.mxu0 %v1244
        %2258 = vmatprep.subr.mxu0 0.0
        %2259 = vmatpush1.msra.mxu0 %v1243
        %2260 = vmatprep.subr.mxu0 0.0
        %2261 = vmatpush1.msra.mxu0 %v1242
        %2262 = vmatprep.subr.mxu0 0.0
        %2263 = vmatpush1.msra.mxu0 %v1241
        %2264 = vmatprep.subr.mxu0 0.0
        %2265 = vmatpush2.msra.mxu0 0.0
        %2266 = vmatprep.subr.mxu0 0.0
        %2267 = vmatpush2.msra.mxu0 0.0
        %2268 = vmatprep.subr.mxu0 0.0
        %2269 = vmatpush2.msra.mxu0 0.0
        %2270 = vmatprep.subr.mxu0 0.0
        %2271 = vmatpush2.msra.mxu0 0.0
        %2272 = vmatprep.subr.mxu0 0.0
        %2273 = vmatpush2.msra.mxu0 0.0
        %2274 = vmatprep.subr.mxu0 0.0
        %2275 = vmatpush2.msra.mxu0 0.0
        %2276 = vmatprep.subr.mxu0 0.0
        %2277 = vmatpush2.msra.mxu0 0.0
        %2278 = vmatprep.subr.mxu0 0.0
        %2279 = vmatpush2.msra.mxu0 0.0
        %2280 = vmatprep.subr.mxu0 0.0
        %2281 = vmatpush2.msra.mxu0 0.0
        %2282 = vmatprep.subr.mxu0 0.0
        %2283 = vmatpush2.msra.mxu0 0.0
        %2284 = vmatprep.subr.mxu0 0.0
        %2285 = vmatpush2.msra.mxu0 0.0
        %2286 = vmatprep.subr.mxu0 0.0
        %2287 = vmatpush2.msra.mxu0 0.0
        %2288 = vmatprep.subr.mxu0 0.0
        %2289 = vmatpush2.msra.mxu0 0.0
        %2290 = vmatprep.subr.mxu0 0.0
        %2291 = vmatpush2.msra.mxu0 0.0
        %2292 = vmatprep.subr.mxu0 0.0
        %2293 = vmatpush2.msra.mxu0 0.0
        %2294 = vmatprep.subr.mxu0 0.0
        %2295 = vmatpush2.msra.mxu0 0.0
        %2296 = vmatprep.mubr.f32.mxu0 0.0
        %2297 = vmatmul.mubr.f32.gmra.mxu0 %v2209
        %v2298 = vpop.f32.mrf.mxu0
        %v2299 = vadd.f32 %v2170, %v2298
        %v2300 = vpop.f32.mrf.mxu0
        %2301 = vmatprep.mubr.f32.mxu0 0.0
        %2302 = vmatmul.mubr.f32.gmra.mxu0 %v2212
        %v2303 = vpop.f32.mrf.mxu0
        %v2304 = vadd.f32 %v2175, %v2303
        %v2305 = vpop.f32.mrf.mxu0
        %2306 = vmatprep.mubr.f32.mxu0 0.0
        %2307 = vmatmul.mubr.f32.gmra.mxu0 %v2215
        %v2308 = vpop.f32.mrf.mxu0
        %v2309 = vadd.f32 %v2180, %v2308
        %v2310 = vpop.f32.mrf.mxu0
        %2311 = vmatprep.mubr.f32.mxu0 0.0
        %2312 = vmatmul.mubr.f32.gmra.mxu0 %v2218
        %v2313 = vpop.f32.mrf.mxu0
        %v2314 = vadd.f32 %v2185, %v2313
        %v2315 = vpop.f32.mrf.mxu0
        %2316 = vmatprep.mubr.f32.mxu0 0.0
        %2317 = vmatmul.mubr.f32.gmra.mxu0 %v2221
        %v2318 = vpop.f32.mrf.mxu0
        %v2319 = vadd.f32 %v2190, %v2318
        %v2320 = vpop.f32.mrf.mxu0
        %2321 = vmatprep.mubr.f32.mxu0 0.0
        %2322 = vmatmul.mubr.f32.gmra.mxu0 %v2224
        %v2323 = vpop.f32.mrf.mxu0
        %v2324 = vadd.f32 %v2195, %v2323
        %v2325 = vpop.f32.mrf.mxu0
        %2326 = vmatprep.mubr.f32.mxu0 0.0
        %2327 = vmatmul.mubr.f32.gmra.mxu0 %v2227
        %v2328 = vpop.f32.mrf.mxu0
        %v2329 = vadd.f32 %v2200, %v2328
        %v2330 = vpop.f32.mrf.mxu0
        %2331 = vmatprep.mubr.f32.mxu0 0.0
        %2332 = vmatmul.mubr.f32.gmra.mxu0 %v2230
        %v2333 = vpop.f32.mrf.mxu0
        %v2334 = vadd.f32 %v2205, %v2333
        %v2335 = vpop.f32.mrf.mxu0
        %2336 = vdwg.mxu0
        %2337 = vrot.lane.b32.xlu0 %v928, 64
        %v2338 = vpop.permute.xlu0 %2337
        %2339 = vrot.lane.b32.xlu0 %v933, 64
        %v2340 = vpop.permute.xlu0 %2339
        %2341 = vrot.lane.b32.xlu0 %v938, 64
        %v2342 = vpop.permute.xlu0 %2341
        %2343 = vrot.lane.b32.xlu0 %v943, 64
        %v2344 = vpop.permute.xlu0 %2343
        %2345 = vrot.lane.b32.xlu0 %v948, 64
        %v2346 = vpop.permute.xlu0 %2345
        %2347 = vrot.lane.b32.xlu0 %v953, 64
        %v2348 = vpop.permute.xlu0 %2347
        %2349 = vrot.lane.b32.xlu0 %v958, 64
        %v2350 = vpop.permute.xlu0 %2349
        %2351 = vrot.lane.b32.xlu0 %v963, 64
        %v2352 = vpop.permute.xlu0 %2351
        %2353 = vrot.lane.b32.xlu0 %v1056, 64
        %v2354 = vpop.permute.xlu0 %2353
        %2355 = vrot.lane.b32.xlu0 %v1061, 64
        %v2356 = vpop.permute.xlu0 %2355
        %2357 = vrot.lane.b32.xlu0 %v1066, 64
        %v2358 = vpop.permute.xlu0 %2357
        %2359 = vrot.lane.b32.xlu0 %v1071, 64
        %v2360 = vpop.permute.xlu0 %2359
        %2361 = vrot.lane.b32.xlu0 %v1076, 64
        %v2362 = vpop.permute.xlu0 %2361
        %2363 = vrot.lane.b32.xlu0 %v1081, 64
        %v2364 = vpop.permute.xlu0 %2363
        %2365 = vrot.lane.b32.xlu0 %v1086, 64
        %v2366 = vpop.permute.xlu0 %2365
        %2367 = vrot.lane.b32.xlu0 %v1091, 64
        %v2368 = vpop.permute.xlu0 %2367
        %v2369 = vsel %vm1257, %v2338, 0
        %v2371 = vsel %vm1257, %v2340, 0
        %v2373 = vsel %vm1257, %v2342, 0
        %v2375 = vsel %vm1257, %v2344, 0
        %v2377 = vsel %vm1257, %v2346, 0
        %v2379 = vsel %vm1257, %v2348, 0
        %v2381 = vsel %vm1257, %v2350, 0
        %v2383 = vsel %vm1257, %v2352, 0
        %v2385 = vsel %vm1257, %v2354, 0
        %v2387 = vsel %vm1257, %v2356, 0
        %v2389 = vsel %vm1257, %v2358, 0
        %v2391 = vsel %vm1257, %v2360, 0
        %v2393 = vsel %vm1257, %v2362, 0
        %v2395 = vsel %vm1257, %v2364, 0
        %v2397 = vsel %vm1257, %v2366, 0
        %v2399 = vsel %vm1257, %v2368, 0
        %2401 = vmatprep.subr.mxu0 0.0
        %2402 = vmatpush1.xpose.msra.mxu0 0.0
        %2403 = vmatprep.subr.mxu0 0.0
        %2404 = vmatpush1.xpose.msra.mxu0 0.0
        %2405 = vmatprep.subr.mxu0 0.0
        %2406 = vmatpush1.xpose.msra.mxu0 0.0
        %2407 = vmatprep.subr.mxu0 0.0
        %2408 = vmatpush1.xpose.msra.mxu0 0.0
        %2409 = vmatprep.subr.mxu0 0.0
        %2410 = vmatpush1.xpose.msra.mxu0 0.0
        %2411 = vmatprep.subr.mxu0 0.0
        %2412 = vmatpush1.xpose.msra.mxu0 0.0
        %2413 = vmatprep.subr.mxu0 0.0
        %2414 = vmatpush1.xpose.msra.mxu0 0.0
        %2415 = vmatprep.subr.mxu0 0.0
        %2416 = vmatpush1.xpose.msra.mxu0 0.0
        %2417 = vmatprep.subr.mxu0 0.0
        %2418 = vmatpush1.xpose.msra.mxu0 %v2399
        %2419 = vmatprep.subr.mxu0 0.0
        %2420 = vmatpush1.xpose.msra.mxu0 %v2397
        %2421 = vmatprep.subr.mxu0 0.0
        %2422 = vmatpush1.xpose.msra.mxu0 %v2395
        %2423 = vmatprep.subr.mxu0 0.0
        %2424 = vmatpush1.xpose.msra.mxu0 %v2393
        %2425 = vmatprep.subr.mxu0 0.0
        %2426 = vmatpush1.xpose.msra.mxu0 %v2391
        %2427 = vmatprep.subr.mxu0 0.0
        %2428 = vmatpush1.xpose.msra.mxu0 %v2389
        %2429 = vmatprep.subr.mxu0 0.0
        %2430 = vmatpush1.xpose.msra.mxu0 %v2387
        %2431 = vmatprep.subr.mxu0 0.0
        %2432 = vmatpush1.xpose.msra.mxu0 %v2385
        %2433 = vmatprep.subr.mxu0 0.0
        %2434 = vmatpush2.xpose.msra.mxu0 0.0
        %2435 = vmatprep.subr.mxu0 0.0
        %2436 = vmatpush2.xpose.msra.mxu0 0.0
        %2437 = vmatprep.subr.mxu0 0.0
        %2438 = vmatpush2.xpose.msra.mxu0 0.0
        %2439 = vmatprep.subr.mxu0 0.0
        %2440 = vmatpush2.xpose.msra.mxu0 0.0
        %2441 = vmatprep.subr.mxu0 0.0
        %2442 = vmatpush2.xpose.msra.mxu0 0.0
        %2443 = vmatprep.subr.mxu0 0.0
        %2444 = vmatpush2.xpose.msra.mxu0 0.0
        %2445 = vmatprep.subr.mxu0 0.0
        %2446 = vmatpush2.xpose.msra.mxu0 0.0
        %2447 = vmatprep.subr.mxu0 0.0
        %2448 = vmatpush2.xpose.msra.mxu0 0.0
        %2449 = vmatprep.subr.mxu0 0.0
        %2450 = vmatpush2.xpose.msra.mxu0 0.0
        %2451 = vmatprep.subr.mxu0 0.0
        %2452 = vmatpush2.xpose.msra.mxu0 0.0
        %2453 = vmatprep.subr.mxu0 0.0
        %2454 = vmatpush2.xpose.msra.mxu0 0.0
        %2455 = vmatprep.subr.mxu0 0.0
        %2456 = vmatpush2.xpose.msra.mxu0 0.0
        %2457 = vmatprep.subr.mxu0 0.0
        %2458 = vmatpush2.xpose.msra.mxu0 0.0
        %2459 = vmatprep.subr.mxu0 0.0
        %2460 = vmatpush2.xpose.msra.mxu0 0.0
        %2461 = vmatprep.subr.mxu0 0.0
        %2462 = vmatpush2.xpose.msra.mxu0 0.0
        %2463 = vmatprep.subr.mxu0 0.0
        %2464 = vmatpush2.xpose.msra.mxu0 0.0
        %2465 = vmatprep.mubr.f32.mxu0 0.0
        %2466 = vmatmul.mubr.f32.gmra.mxu0 %v2369
        %v2467 = vpop.f32.mrf.mxu0
        %v2468 = vadd.f32 0.0, %v2467
        %v2469 = vpop.f32.mrf.mxu0
        %2470 = vmatprep.mubr.f32.mxu0 0.0
        %2471 = vmatmul.mubr.f32.gmra.mxu0 %v2371
        %v2472 = vpop.f32.mrf.mxu0
        %v2473 = vadd.f32 0.0, %v2472
        %v2474 = vpop.f32.mrf.mxu0
        %2475 = vmatprep.mubr.f32.mxu0 0.0
        %2476 = vmatmul.mubr.f32.gmra.mxu0 %v2373
        %v2477 = vpop.f32.mrf.mxu0
        %v2478 = vadd.f32 0.0, %v2477
        %v2479 = vpop.f32.mrf.mxu0
        %2480 = vmatprep.mubr.f32.mxu0 0.0
        %2481 = vmatmul.mubr.f32.gmra.mxu0 %v2375
        %v2482 = vpop.f32.mrf.mxu0
        %v2483 = vadd.f32 0.0, %v2482
        %v2484 = vpop.f32.mrf.mxu0
        %2485 = vmatprep.mubr.f32.mxu0 0.0
        %2486 = vmatmul.mubr.f32.gmra.mxu0 %v2377
        %v2487 = vpop.f32.mrf.mxu0
        %v2488 = vadd.f32 0.0, %v2487
        %v2489 = vpop.f32.mrf.mxu0
        %2490 = vmatprep.mubr.f32.mxu0 0.0
        %2491 = vmatmul.mubr.f32.gmra.mxu0 %v2379
        %v2492 = vpop.f32.mrf.mxu0
        %v2493 = vadd.f32 0.0, %v2492
        %v2494 = vpop.f32.mrf.mxu0
        %2495 = vmatprep.mubr.f32.mxu0 0.0
        %2496 = vmatmul.mubr.f32.gmra.mxu0 %v2381
        %v2497 = vpop.f32.mrf.mxu0
        %v2498 = vadd.f32 0.0, %v2497
        %v2499 = vpop.f32.mrf.mxu0
        %2500 = vmatprep.mubr.f32.mxu0 0.0
        %2501 = vmatmul.mubr.f32.gmra.mxu0 %v2383
        %v2502 = vpop.f32.mrf.mxu0
        %v2503 = vadd.f32 0.0, %v2502
        %v2504 = vpop.f32.mrf.mxu0
        %2505 = vdwg.mxu0
        %v2506 = vsel %vm1233, -inf, %v2468
        %v2507 = vsel %vm1234, -inf, %v2473
        %v2508 = vsel %vm1235, -inf, %v2478
        %v2509 = vsel %vm1236, -inf, %v2483
        %v2510 = vsel %vm1237, -inf, %v2488
        %v2511 = vsel %vm1238, -inf, %v2493
        %v2512 = vsel %vm1239, -inf, %v2498
        %v2513 = vsel %vm1240, -inf, %v2503
        %v2514 = vmul.f32 %v2506, 0.17677669
        %v2515 = vmul.f32 %v2507, 0.17677669
        %v2516 = vmul.f32 %v2508, 0.17677669
        %v2517 = vmul.f32 %v2509, 0.17677669
        %v2518 = vmul.f32 %v2510, 0.17677669
        %v2519 = vmul.f32 %v2511, 0.17677669
        %v2520 = vmul.f32 %v2512, 0.17677669
        %v2521 = vmul.f32 %v2513, 0.17677669
        %v2522 = vsel %vm1427, %v2514, -inf
        %2523 = vmax.xlane.f32.xlu0 %v2522
        %v2524 = vpop.xlane.xlu0 %2523
        %v2525 = vsel %vm1427, %v2515, -inf
        %2526 = vmax.xlane.f32.xlu0 %v2525
        %v2527 = vpop.xlane.xlu0 %2526
        %v2528 = vsel %vm1427, %v2516, -inf
        %2529 = vmax.xlane.f32.xlu0 %v2528
        %v2530 = vpop.xlane.xlu0 %2529
        %v2531 = vsel %vm1427, %v2517, -inf
        %2532 = vmax.xlane.f32.xlu0 %v2531
        %v2533 = vpop.xlane.xlu0 %2532
        %v2534 = vsel %vm1427, %v2518, -inf
        %2535 = vmax.xlane.f32.xlu0 %v2534
        %v2536 = vpop.xlane.xlu0 %2535
        %v2537 = vsel %vm1427, %v2519, -inf
        %2538 = vmax.xlane.f32.xlu0 %v2537
        %v2539 = vpop.xlane.xlu0 %2538
        %v2540 = vsel %vm1427, %v2520, -inf
        %2541 = vmax.xlane.f32.xlu0 %v2540
        %v2542 = vpop.xlane.xlu0 %2541
        %v2543 = vsel %vm1427, %v2521, -inf
        %2544 = vmax.xlane.f32.xlu0 %v2543
        %v2545 = vpop.xlane.xlu0 %2544
        %v2546 = vsub.f32 %v2514, %v2524
        %v2547 = vsub.f32 %v2515, %v2527
        %v2548 = vsub.f32 %v2516, %v2530
        %v2549 = vsub.f32 %v2517, %v2533
        %v2550 = vsub.f32 %v2518, %v2536
        %v2551 = vsub.f32 %v2519, %v2539
        %v2552 = vsub.f32 %v2520, %v2542
        %v2553 = vsub.f32 %v2521, %v2545
        %v2554 = vmul.f32 %v2546, 1.442695
        %v2555 = vpow.pop %v2554
        %v2556 = vmul.f32 %v2547, 1.442695
        %v2557 = vpow.pop %v2556
        %v2558 = vmul.f32 %v2548, 1.442695
        %v2559 = vpow.pop %v2558
        %v2560 = vmul.f32 %v2549, 1.442695
        %v2561 = vpow.pop %v2560
        %v2562 = vmul.f32 %v2550, 1.442695
        %v2563 = vpow.pop %v2562
        %v2564 = vmul.f32 %v2551, 1.442695
        %v2565 = vpow.pop %v2564
        %v2566 = vmul.f32 %v2552, 1.442695
        %v2567 = vpow.pop %v2566
        %v2568 = vmul.f32 %v2553, 1.442695
        %v2569 = vpow.pop %v2568
        %v2570 = vsel %vm1427, %v2555, 0.0
        %2571 = vadd.xlane.f32.xlu0 %v2570
        %v2572 = vpop.xlane.xlu0 %2571
        %v2573 = vsel %vm1427, %v2557, 0.0
        %2574 = vadd.xlane.f32.xlu0 %v2573
        %v2575 = vpop.xlane.xlu0 %2574
        %v2576 = vsel %vm1427, %v2559, 0.0
        %2577 = vadd.xlane.f32.xlu0 %v2576
        %v2578 = vpop.xlane.xlu0 %2577
        %v2579 = vsel %vm1427, %v2561, 0.0
        %2580 = vadd.xlane.f32.xlu0 %v2579
        %v2581 = vpop.xlane.xlu0 %2580
        %v2582 = vsel %vm1427, %v2563, 0.0
        %2583 = vadd.xlane.f32.xlu0 %v2582
        %v2584 = vpop.xlane.xlu0 %2583
        %v2585 = vsel %vm1427, %v2565, 0.0
        %2586 = vadd.xlane.f32.xlu0 %v2585
        %v2587 = vpop.xlane.xlu0 %2586
        %v2588 = vsel %vm1427, %v2567, 0.0
        %2589 = vadd.xlane.f32.xlu0 %v2588
        %v2590 = vpop.xlane.xlu0 %2589
        %v2591 = vsel %vm1427, %v2569, 0.0
        %2592 = vadd.xlane.f32.xlu0 %v2591
        %v2593 = vpop.xlane.xlu0 %2592
        %v2594 = vrcp.pop %v2572
        %v2595 = vmul.f32 %v2555, %v2594
        %v2596 = vrcp.pop %v2575
        %v2597 = vmul.f32 %v2557, %v2596
        %v2598 = vrcp.pop %v2578
        %v2599 = vmul.f32 %v2559, %v2598
        %v2600 = vrcp.pop %v2581
        %v2601 = vmul.f32 %v2561, %v2600
        %v2602 = vrcp.pop %v2584
        %v2603 = vmul.f32 %v2563, %v2602
        %v2604 = vrcp.pop %v2587
        %v2605 = vmul.f32 %v2565, %v2604
        %v2606 = vrcp.pop %v2590
        %v2607 = vmul.f32 %v2567, %v2606
        %v2608 = vrcp.pop %v2593
        %v2609 = vmul.f32 %v2569, %v2608
        %2610 = vrot.lane.b32.xlu0 %v1184, 64
        %v2611 = vpop.permute.xlu0 %2610
        %2612 = vrot.lane.b32.xlu0 %v1189, 64
        %v2613 = vpop.permute.xlu0 %2612
        %2614 = vrot.lane.b32.xlu0 %v1194, 64
        %v2615 = vpop.permute.xlu0 %2614
        %2616 = vrot.lane.b32.xlu0 %v1199, 64
        %v2617 = vpop.permute.xlu0 %2616
        %2618 = vrot.lane.b32.xlu0 %v1204, 64
        %v2619 = vpop.permute.xlu0 %2618
        %2620 = vrot.lane.b32.xlu0 %v1209, 64
        %v2621 = vpop.permute.xlu0 %2620
        %2622 = vrot.lane.b32.xlu0 %v1214, 64
        %v2623 = vpop.permute.xlu0 %2622
        %2624 = vrot.lane.b32.xlu0 %v1219, 64
        %v2625 = vpop.permute.xlu0 %2624
        %v2635 = vsel %vm1427, %v2595, 0
        %v2638 = vsel %vm1427, %v2597, 0
        %v2641 = vsel %vm1427, %v2599, 0
        %v2644 = vsel %vm1427, %v2601, 0
        %v2647 = vsel %vm1427, %v2603, 0
        %v2650 = vsel %vm1427, %v2605, 0
        %v2653 = vsel %vm1427, %v2607, 0
        %v2656 = vsel %vm1427, %v2609, 0
        %2658 = vmatprep.subr.mxu0 0.0
        %2659 = vmatpush1.msra.mxu0 0.0
        %2660 = vmatprep.subr.mxu0 0.0
        %2661 = vmatpush1.msra.mxu0 0.0
        %2662 = vmatprep.subr.mxu0 0.0
        %2663 = vmatpush1.msra.mxu0 0.0
        %2664 = vmatprep.subr.mxu0 0.0
        %2665 = vmatpush1.msra.mxu0 0.0
        %2666 = vmatprep.subr.mxu0 0.0
        %2667 = vmatpush1.msra.mxu0 0.0
        %2668 = vmatprep.subr.mxu0 0.0
        %2669 = vmatpush1.msra.mxu0 0.0
        %2670 = vmatprep.subr.mxu0 0.0
        %2671 = vmatpush1.msra.mxu0 0.0
        %2672 = vmatprep.subr.mxu0 0.0
        %2673 = vmatpush1.msra.mxu0 0.0
        %2674 = vmatprep.subr.mxu0 0.0
        %2675 = vmatpush1.msra.mxu0 %v2625
        %2676 = vmatprep.subr.mxu0 0.0
        %2677 = vmatpush1.msra.mxu0 %v2623
        %2678 = vmatprep.subr.mxu0 0.0
        %2679 = vmatpush1.msra.mxu0 %v2621
        %2680 = vmatprep.subr.mxu0 0.0
        %2681 = vmatpush1.msra.mxu0 %v2619
        %2682 = vmatprep.subr.mxu0 0.0
        %2683 = vmatpush1.msra.mxu0 %v2617
        %2684 = vmatprep.subr.mxu0 0.0
        %2685 = vmatpush1.msra.mxu0 %v2615
        %2686 = vmatprep.subr.mxu0 0.0
        %2687 = vmatpush1.msra.mxu0 %v2613
        %2688 = vmatprep.subr.mxu0 0.0
        %2689 = vmatpush1.msra.mxu0 %v2611
        %2690 = vmatprep.subr.mxu0 0.0
        %2691 = vmatpush2.msra.mxu0 0.0
        %2692 = vmatprep.subr.mxu0 0.0
        %2693 = vmatpush2.msra.mxu0 0.0
        %2694 = vmatprep.subr.mxu0 0.0
        %2695 = vmatpush2.msra.mxu0 0.0
        %2696 = vmatprep.subr.mxu0 0.0
        %2697 = vmatpush2.msra.mxu0 0.0
        %2698 = vmatprep.subr.mxu0 0.0
        %2699 = vmatpush2.msra.mxu0 0.0
        %2700 = vmatprep.subr.mxu0 0.0
        %2701 = vmatpush2.msra.mxu0 0.0
        %2702 = vmatprep.subr.mxu0 0.0
        %2703 = vmatpush2.msra.mxu0 0.0
        %2704 = vmatprep.subr.mxu0 0.0
        %2705 = vmatpush2.msra.mxu0 0.0
        %2706 = vmatprep.subr.mxu0 0.0
        %2707 = vmatpush2.msra.mxu0 0.0
        %2708 = vmatprep.subr.mxu0 0.0
        %2709 = vmatpush2.msra.mxu0 0.0
        %2710 = vmatprep.subr.mxu0 0.0
        %2711 = vmatpush2.msra.mxu0 0.0
        %2712 = vmatprep.subr.mxu0 0.0
        %2713 = vmatpush2.msra.mxu0 0.0
        %2714 = vmatprep.subr.mxu0 0.0
        %2715 = vmatpush2.msra.mxu0 0.0
        %2716 = vmatprep.subr.mxu0 0.0
        %2717 = vmatpush2.msra.mxu0 0.0
        %2718 = vmatprep.subr.mxu0 0.0
        %2719 = vmatpush2.msra.mxu0 0.0
        %2720 = vmatprep.subr.mxu0 0.0
        %2721 = vmatpush2.msra.mxu0 0.0
        %2722 = vmatprep.mubr.f32.mxu0 0.0
        %2723 = vmatmul.mubr.f32.gmra.mxu0 %v2635
        %v2724 = vpop.f32.mrf.mxu0
        %v2725 = vadd.f32 0.0, %v2724
        %v2726 = vpop.f32.mrf.mxu0
        %2727 = vmatprep.mubr.f32.mxu0 0.0
        %2728 = vmatmul.mubr.f32.gmra.mxu0 %v2638
        %v2729 = vpop.f32.mrf.mxu0
        %v2730 = vadd.f32 0.0, %v2729
        %v2731 = vpop.f32.mrf.mxu0
        %2732 = vmatprep.mubr.f32.mxu0 0.0
        %2733 = vmatmul.mubr.f32.gmra.mxu0 %v2641
        %v2734 = vpop.f32.mrf.mxu0
        %v2735 = vadd.f32 0.0, %v2734
        %v2736 = vpop.f32.mrf.mxu0
        %2737 = vmatprep.mubr.f32.mxu0 0.0
        %2738 = vmatmul.mubr.f32.gmra.mxu0 %v2644
        %v2739 = vpop.f32.mrf.mxu0
        %v2740 = vadd.f32 0.0, %v2739
        %v2741 = vpop.f32.mrf.mxu0
        %2742 = vmatprep.mubr.f32.mxu0 0.0
        %2743 = vmatmul.mubr.f32.gmra.mxu0 %v2647
        %v2744 = vpop.f32.mrf.mxu0
        %v2745 = vadd.f32 0.0, %v2744
        %v2746 = vpop.f32.mrf.mxu0
        %2747 = vmatprep.mubr.f32.mxu0 0.0
        %2748 = vmatmul.mubr.f32.gmra.mxu0 %v2650
        %v2749 = vpop.f32.mrf.mxu0
        %v2750 = vadd.f32 0.0, %v2749
        %v2751 = vpop.f32.mrf.mxu0
        %2752 = vmatprep.mubr.f32.mxu0 0.0
        %2753 = vmatmul.mubr.f32.gmra.mxu0 %v2653
        %v2754 = vpop.f32.mrf.mxu0
        %v2755 = vadd.f32 0.0, %v2754
        %v2756 = vpop.f32.mrf.mxu0
        %2757 = vmatprep.mubr.f32.mxu0 0.0
        %2758 = vmatmul.mubr.f32.gmra.mxu0 %v2656
        %v2759 = vpop.f32.mrf.mxu0
        %v2760 = vadd.f32 0.0, %v2759
        %v2761 = vpop.f32.mrf.mxu0
        %2762 = vdwg.mxu0
        %v2764 = vsel %vm1257, %v2725, 0
        %v2767 = vsel %vm1257, %v2730, 0
        %v2770 = vsel %vm1257, %v2735, 0
        %v2773 = vsel %vm1257, %v2740, 0
        %v2776 = vsel %vm1257, %v2745, 0
        %v2779 = vsel %vm1257, %v2750, 0
        %v2782 = vsel %vm1257, %v2755, 0
        %v2785 = vsel %vm1257, %v2760, 0
        %2787 = vmatprep.subr.mxu0 0.0
        %2788 = vmatpush1.msra.mxu0 0.0
        %2789 = vmatprep.subr.mxu0 0.0
        %2790 = vmatpush1.msra.mxu0 0.0
        %2791 = vmatprep.subr.mxu0 0.0
        %2792 = vmatpush1.msra.mxu0 0.0
        %2793 = vmatprep.subr.mxu0 0.0
        %2794 = vmatpush1.msra.mxu0 0.0
        %2795 = vmatprep.subr.mxu0 0.0
        %2796 = vmatpush1.msra.mxu0 0.0
        %2797 = vmatprep.subr.mxu0 0.0
        %2798 = vmatpush1.msra.mxu0 0.0
        %2799 = vmatprep.subr.mxu0 0.0
        %2800 = vmatpush1.msra.mxu0 0.0
        %2801 = vmatprep.subr.mxu0 0.0
        %2802 = vmatpush1.msra.mxu0 0.0
        %2803 = vmatprep.subr.mxu0 0.0
        %2804 = vmatpush1.msra.mxu0 0.0
        %2805 = vmatprep.subr.mxu0 0.0
        %2806 = vmatpush1.msra.mxu0 0.0
        %2807 = vmatprep.subr.mxu0 0.0
        %2808 = vmatpush1.msra.mxu0 0.0
        %2809 = vmatprep.subr.mxu0 0.0
        %2810 = vmatpush1.msra.mxu0 0.0
        %2811 = vmatprep.subr.mxu0 0.0
        %2812 = vmatpush1.msra.mxu0 %v1252
        %2813 = vmatprep.subr.mxu0 0.0
        %2814 = vmatpush1.msra.mxu0 %v1251
        %2815 = vmatprep.subr.mxu0 0.0
        %2816 = vmatpush1.msra.mxu0 %v1250
        %2817 = vmatprep.subr.mxu0 0.0
        %2818 = vmatpush1.msra.mxu0 %v1249
        %2819 = vmatprep.subr.mxu0 0.0
        %2820 = vmatpush2.msra.mxu0 0.0
        %2821 = vmatprep.subr.mxu0 0.0
        %2822 = vmatpush2.msra.mxu0 0.0
        %2823 = vmatprep.subr.mxu0 0.0
        %2824 = vmatpush2.msra.mxu0 0.0
        %2825 = vmatprep.subr.mxu0 0.0
        %2826 = vmatpush2.msra.mxu0 0.0
        %2827 = vmatprep.subr.mxu0 0.0
        %2828 = vmatpush2.msra.mxu0 0.0
        %2829 = vmatprep.subr.mxu0 0.0
        %2830 = vmatpush2.msra.mxu0 0.0
        %2831 = vmatprep.subr.mxu0 0.0
        %2832 = vmatpush2.msra.mxu0 0.0
        %2833 = vmatprep.subr.mxu0 0.0
        %2834 = vmatpush2.msra.mxu0 0.0
        %2835 = vmatprep.subr.mxu0 0.0
        %2836 = vmatpush2.msra.mxu0 0.0
        %2837 = vmatprep.subr.mxu0 0.0
        %2838 = vmatpush2.msra.mxu0 0.0
        %2839 = vmatprep.subr.mxu0 0.0
        %2840 = vmatpush2.msra.mxu0 0.0
        %2841 = vmatprep.subr.mxu0 0.0
        %2842 = vmatpush2.msra.mxu0 0.0
        %2843 = vmatprep.subr.mxu0 0.0
        %2844 = vmatpush2.msra.mxu0 0.0
        %2845 = vmatprep.subr.mxu0 0.0
        %2846 = vmatpush2.msra.mxu0 0.0
        %2847 = vmatprep.subr.mxu0 0.0
        %2848 = vmatpush2.msra.mxu0 0.0
        %2849 = vmatprep.subr.mxu0 0.0
        %2850 = vmatpush2.msra.mxu0 0.0
        %2851 = vmatprep.mubr.f32.mxu0 0.0
        %2852 = vmatmul.mubr.f32.gmra.mxu0 %v2764
        %v2853 = vpop.f32.mrf.mxu0
        %v2854 = vadd.f32 0.0, %v2853
        %v2855 = vpop.f32.mrf.mxu0
        %2856 = vmatprep.mubr.f32.mxu0 0.0
        %2857 = vmatmul.mubr.f32.gmra.mxu0 %v2767
        %v2858 = vpop.f32.mrf.mxu0
        %v2859 = vadd.f32 0.0, %v2858
        %v2860 = vpop.f32.mrf.mxu0
        %2861 = vmatprep.mubr.f32.mxu0 0.0
        %2862 = vmatmul.mubr.f32.gmra.mxu0 %v2770
        %v2863 = vpop.f32.mrf.mxu0
        %v2864 = vadd.f32 0.0, %v2863
        %v2865 = vpop.f32.mrf.mxu0
        %2866 = vmatprep.mubr.f32.mxu0 0.0
        %2867 = vmatmul.mubr.f32.gmra.mxu0 %v2773
        %v2868 = vpop.f32.mrf.mxu0
        %v2869 = vadd.f32 0.0, %v2868
        %v2870 = vpop.f32.mrf.mxu0
        %2871 = vmatprep.mubr.f32.mxu0 0.0
        %2872 = vmatmul.mubr.f32.gmra.mxu0 %v2776
        %v2873 = vpop.f32.mrf.mxu0
        %v2874 = vadd.f32 0.0, %v2873
        %v2875 = vpop.f32.mrf.mxu0
        %2876 = vmatprep.mubr.f32.mxu0 0.0
        %2877 = vmatmul.mubr.f32.gmra.mxu0 %v2779
        %v2878 = vpop.f32.mrf.mxu0
        %v2879 = vadd.f32 0.0, %v2878
        %v2880 = vpop.f32.mrf.mxu0
        %2881 = vmatprep.mubr.f32.mxu0 0.0
        %2882 = vmatmul.mubr.f32.gmra.mxu0 %v2782
        %v2883 = vpop.f32.mrf.mxu0
        %v2884 = vadd.f32 0.0, %v2883
        %v2885 = vpop.f32.mrf.mxu0
        %2886 = vmatprep.mubr.f32.mxu0 0.0
        %2887 = vmatmul.mubr.f32.gmra.mxu0 %v2785
        %v2888 = vpop.f32.mrf.mxu0
        %v2889 = vadd.f32 0.0, %v2888
        %v2890 = vpop.f32.mrf.mxu0
        %2891 = vdwg.mxu0
        %v2892 = vadd.f32 %v2299, %v2854
        %v2893 = vadd.f32 %v2304, %v2859
        %v2894 = vadd.f32 %v2309, %v2864
        %v2895 = vadd.f32 %v2314, %v2869
        %v2896 = vadd.f32 %v2319, %v2874
        %v2897 = vadd.f32 %v2324, %v2879
        %v2898 = vadd.f32 %v2329, %v2884
        %v2899 = vadd.f32 %v2334, %v2889
        %2900 = vrot.lane.b32.xlu0 %v928, 32
        %v2901 = vpop.permute.xlu0 %2900
        %2902 = vrot.lane.b32.xlu0 %v933, 32
        %v2903 = vpop.permute.xlu0 %2902
        %2904 = vrot.lane.b32.xlu0 %v938, 32
        %v2905 = vpop.permute.xlu0 %2904
        %2906 = vrot.lane.b32.xlu0 %v943, 32
        %v2907 = vpop.permute.xlu0 %2906
        %2908 = vrot.lane.b32.xlu0 %v948, 32
        %v2909 = vpop.permute.xlu0 %2908
        %2910 = vrot.lane.b32.xlu0 %v953, 32
        %v2911 = vpop.permute.xlu0 %2910
        %2912 = vrot.lane.b32.xlu0 %v958, 32
        %v2913 = vpop.permute.xlu0 %2912
        %2914 = vrot.lane.b32.xlu0 %v963, 32
        %v2915 = vpop.permute.xlu0 %2914
        %2916 = vrot.lane.b32.xlu0 %v1056, 32
        %v2917 = vpop.permute.xlu0 %2916
        %2918 = vrot.lane.b32.xlu0 %v1061, 32
        %v2919 = vpop.permute.xlu0 %2918
        %2920 = vrot.lane.b32.xlu0 %v1066, 32
        %v2921 = vpop.permute.xlu0 %2920
        %2922 = vrot.lane.b32.xlu0 %v1071, 32
        %v2923 = vpop.permute.xlu0 %2922
        %2924 = vrot.lane.b32.xlu0 %v1076, 32
        %v2925 = vpop.permute.xlu0 %2924
        %2926 = vrot.lane.b32.xlu0 %v1081, 32
        %v2927 = vpop.permute.xlu0 %2926
        %2928 = vrot.lane.b32.xlu0 %v1086, 32
        %v2929 = vpop.permute.xlu0 %2928
        %2930 = vrot.lane.b32.xlu0 %v1091, 32
        %v2931 = vpop.permute.xlu0 %2930
        %v2932 = vsel %vm1257, %v2901, 0
        %v2934 = vsel %vm1257, %v2903, 0
        %v2936 = vsel %vm1257, %v2905, 0
        %v2938 = vsel %vm1257, %v2907, 0
        %v2940 = vsel %vm1257, %v2909, 0
        %v2942 = vsel %vm1257, %v2911, 0
        %v2944 = vsel %vm1257, %v2913, 0
        %v2946 = vsel %vm1257, %v2915, 0
        %v2948 = vsel %vm1257, %v2917, 0
        %v2950 = vsel %vm1257, %v2919, 0
        %v2952 = vsel %vm1257, %v2921, 0
        %v2954 = vsel %vm1257, %v2923, 0
        %v2956 = vsel %vm1257, %v2925, 0
        %v2958 = vsel %vm1257, %v2927, 0
        %v2960 = vsel %vm1257, %v2929, 0
        %v2962 = vsel %vm1257, %v2931, 0
        %2964 = vmatprep.subr.mxu0 0.0
        %2965 = vmatpush1.xpose.msra.mxu0 0.0
        %2966 = vmatprep.subr.mxu0 0.0
        %2967 = vmatpush1.xpose.msra.mxu0 0.0
        %2968 = vmatprep.subr.mxu0 0.0
        %2969 = vmatpush1.xpose.msra.mxu0 0.0
        %2970 = vmatprep.subr.mxu0 0.0
        %2971 = vmatpush1.xpose.msra.mxu0 0.0
        %2972 = vmatprep.subr.mxu0 0.0
        %2973 = vmatpush1.xpose.msra.mxu0 0.0
        %2974 = vmatprep.subr.mxu0 0.0
        %2975 = vmatpush1.xpose.msra.mxu0 0.0
        %2976 = vmatprep.subr.mxu0 0.0
        %2977 = vmatpush1.xpose.msra.mxu0 0.0
        %2978 = vmatprep.subr.mxu0 0.0
        %2979 = vmatpush1.xpose.msra.mxu0 0.0
        %2980 = vmatprep.subr.mxu0 0.0
        %2981 = vmatpush1.xpose.msra.mxu0 %v2962
        %2982 = vmatprep.subr.mxu0 0.0
        %2983 = vmatpush1.xpose.msra.mxu0 %v2960
        %2984 = vmatprep.subr.mxu0 0.0
        %2985 = vmatpush1.xpose.msra.mxu0 %v2958
        %2986 = vmatprep.subr.mxu0 0.0
        %2987 = vmatpush1.xpose.msra.mxu0 %v2956
        %2988 = vmatprep.subr.mxu0 0.0
        %2989 = vmatpush1.xpose.msra.mxu0 %v2954
        %2990 = vmatprep.subr.mxu0 0.0
        %2991 = vmatpush1.xpose.msra.mxu0 %v2952
        %2992 = vmatprep.subr.mxu0 0.0
        %2993 = vmatpush1.xpose.msra.mxu0 %v2950
        %2994 = vmatprep.subr.mxu0 0.0
        %2995 = vmatpush1.xpose.msra.mxu0 %v2948
        %2996 = vmatprep.subr.mxu0 0.0
        %2997 = vmatpush2.xpose.msra.mxu0 0.0
        %2998 = vmatprep.subr.mxu0 0.0
        %2999 = vmatpush2.xpose.msra.mxu0 0.0
        %3000 = vmatprep.subr.mxu0 0.0
        %3001 = vmatpush2.xpose.msra.mxu0 0.0
        %3002 = vmatprep.subr.mxu0 0.0
        %3003 = vmatpush2.xpose.msra.mxu0 0.0
        %3004 = vmatprep.subr.mxu0 0.0
        %3005 = vmatpush2.xpose.msra.mxu0 0.0
        %3006 = vmatprep.subr.mxu0 0.0
        %3007 = vmatpush2.xpose.msra.mxu0 0.0
        %3008 = vmatprep.subr.mxu0 0.0
        %3009 = vmatpush2.xpose.msra.mxu0 0.0
        %3010 = vmatprep.subr.mxu0 0.0
        %3011 = vmatpush2.xpose.msra.mxu0 0.0
        %3012 = vmatprep.subr.mxu0 0.0
        %3013 = vmatpush2.xpose.msra.mxu0 0.0
        %3014 = vmatprep.subr.mxu0 0.0
        %3015 = vmatpush2.xpose.msra.mxu0 0.0
        %3016 = vmatprep.subr.mxu0 0.0
        %3017 = vmatpush2.xpose.msra.mxu0 0.0
        %3018 = vmatprep.subr.mxu0 0.0
        %3019 = vmatpush2.xpose.msra.mxu0 0.0
        %3020 = vmatprep.subr.mxu0 0.0
        %3021 = vmatpush2.xpose.msra.mxu0 0.0
        %3022 = vmatprep.subr.mxu0 0.0
        %3023 = vmatpush2.xpose.msra.mxu0 0.0
        %3024 = vmatprep.subr.mxu0 0.0
        %3025 = vmatpush2.xpose.msra.mxu0 0.0
        %3026 = vmatprep.subr.mxu0 0.0
        %3027 = vmatpush2.xpose.msra.mxu0 0.0
        %3028 = vmatprep.mubr.f32.mxu0 0.0
        %3029 = vmatmul.mubr.f32.gmra.mxu0 %v2932
        %v3030 = vpop.f32.mrf.mxu0
        %v3031 = vadd.f32 0.0, %v3030
        %v3032 = vpop.f32.mrf.mxu0
        %3033 = vmatprep.mubr.f32.mxu0 0.0
        %3034 = vmatmul.mubr.f32.gmra.mxu0 %v2934
        %v3035 = vpop.f32.mrf.mxu0
        %v3036 = vadd.f32 0.0, %v3035
        %v3037 = vpop.f32.mrf.mxu0
        %3038 = vmatprep.mubr.f32.mxu0 0.0
        %3039 = vmatmul.mubr.f32.gmra.mxu0 %v2936
        %v3040 = vpop.f32.mrf.mxu0
        %v3041 = vadd.f32 0.0, %v3040
        %v3042 = vpop.f32.mrf.mxu0
        %3043 = vmatprep.mubr.f32.mxu0 0.0
        %3044 = vmatmul.mubr.f32.gmra.mxu0 %v2938
        %v3045 = vpop.f32.mrf.mxu0
        %v3046 = vadd.f32 0.0, %v3045
        %v3047 = vpop.f32.mrf.mxu0
        %3048 = vmatprep.mubr.f32.mxu0 0.0
        %3049 = vmatmul.mubr.f32.gmra.mxu0 %v2940
        %v3050 = vpop.f32.mrf.mxu0
        %v3051 = vadd.f32 0.0, %v3050
        %v3052 = vpop.f32.mrf.mxu0
        %3053 = vmatprep.mubr.f32.mxu0 0.0
        %3054 = vmatmul.mubr.f32.gmra.mxu0 %v2942
        %v3055 = vpop.f32.mrf.mxu0
        %v3056 = vadd.f32 0.0, %v3055
        %v3057 = vpop.f32.mrf.mxu0
        %3058 = vmatprep.mubr.f32.mxu0 0.0
        %3059 = vmatmul.mubr.f32.gmra.mxu0 %v2944
        %v3060 = vpop.f32.mrf.mxu0
        %v3061 = vadd.f32 0.0, %v3060
        %v3062 = vpop.f32.mrf.mxu0
        %3063 = vmatprep.mubr.f32.mxu0 0.0
        %3064 = vmatmul.mubr.f32.gmra.mxu0 %v2946
        %v3065 = vpop.f32.mrf.mxu0
        %v3066 = vadd.f32 0.0, %v3065
        %v3067 = vpop.f32.mrf.mxu0
        %3068 = vdwg.mxu0
        %v3069 = vsel %vm1233, -inf, %v3031
        %v3070 = vsel %vm1234, -inf, %v3036
        %v3071 = vsel %vm1235, -inf, %v3041
        %v3072 = vsel %vm1236, -inf, %v3046
        %v3073 = vsel %vm1237, -inf, %v3051
        %v3074 = vsel %vm1238, -inf, %v3056
        %v3075 = vsel %vm1239, -inf, %v3061
        %v3076 = vsel %vm1240, -inf, %v3066
        %v3077 = vmul.f32 %v3069, 0.17677669
        %v3078 = vmul.f32 %v3070, 0.17677669
        %v3079 = vmul.f32 %v3071, 0.17677669
        %v3080 = vmul.f32 %v3072, 0.17677669
        %v3081 = vmul.f32 %v3073, 0.17677669
        %v3082 = vmul.f32 %v3074, 0.17677669
        %v3083 = vmul.f32 %v3075, 0.17677669
        %v3084 = vmul.f32 %v3076, 0.17677669
        %v3085 = vsel %vm1427, %v3077, -inf
        %3086 = vmax.xlane.f32.xlu0 %v3085
        %v3087 = vpop.xlane.xlu0 %3086
        %v3088 = vsel %vm1427, %v3078, -inf
        %3089 = vmax.xlane.f32.xlu0 %v3088
        %v3090 = vpop.xlane.xlu0 %3089
        %v3091 = vsel %vm1427, %v3079, -inf
        %3092 = vmax.xlane.f32.xlu0 %v3091
        %v3093 = vpop.xlane.xlu0 %3092
        %v3094 = vsel %vm1427, %v3080, -inf
        %3095 = vmax.xlane.f32.xlu0 %v3094
        %v3096 = vpop.xlane.xlu0 %3095
        %v3097 = vsel %vm1427, %v3081, -inf
        %3098 = vmax.xlane.f32.xlu0 %v3097
        %v3099 = vpop.xlane.xlu0 %3098
        %v3100 = vsel %vm1427, %v3082, -inf
        %3101 = vmax.xlane.f32.xlu0 %v3100
        %v3102 = vpop.xlane.xlu0 %3101
        %v3103 = vsel %vm1427, %v3083, -inf
        %3104 = vmax.xlane.f32.xlu0 %v3103
        %v3105 = vpop.xlane.xlu0 %3104
        %v3106 = vsel %vm1427, %v3084, -inf
        %3107 = vmax.xlane.f32.xlu0 %v3106
        %v3108 = vpop.xlane.xlu0 %3107
        %v3109 = vsub.f32 %v3077, %v3087
        %v3110 = vsub.f32 %v3078, %v3090
        %v3111 = vsub.f32 %v3079, %v3093
        %v3112 = vsub.f32 %v3080, %v3096
        %v3113 = vsub.f32 %v3081, %v3099
        %v3114 = vsub.f32 %v3082, %v3102
        %v3115 = vsub.f32 %v3083, %v3105
        %v3116 = vsub.f32 %v3084, %v3108
        %v3117 = vmul.f32 %v3109, 1.442695
        %v3118 = vpow.pop %v3117
        %v3119 = vmul.f32 %v3110, 1.442695
        %v3120 = vpow.pop %v3119
        %v3121 = vmul.f32 %v3111, 1.442695
        %v3122 = vpow.pop %v3121
        %v3123 = vmul.f32 %v3112, 1.442695
        %v3124 = vpow.pop %v3123
        %v3125 = vmul.f32 %v3113, 1.442695
        %v3126 = vpow.pop %v3125
        %v3127 = vmul.f32 %v3114, 1.442695
        %v3128 = vpow.pop %v3127
        %v3129 = vmul.f32 %v3115, 1.442695
        %v3130 = vpow.pop %v3129
        %v3131 = vmul.f32 %v3116, 1.442695
        %v3132 = vpow.pop %v3131
        %v3133 = vsel %vm1427, %v3118, 0.0
        %3134 = vadd.xlane.f32.xlu0 %v3133
        %v3135 = vpop.xlane.xlu0 %3134
        %v3136 = vsel %vm1427, %v3120, 0.0
        %3137 = vadd.xlane.f32.xlu0 %v3136
        %v3138 = vpop.xlane.xlu0 %3137
        %v3139 = vsel %vm1427, %v3122, 0.0
        %3140 = vadd.xlane.f32.xlu0 %v3139
        %v3141 = vpop.xlane.xlu0 %3140
        %v3142 = vsel %vm1427, %v3124, 0.0
        %3143 = vadd.xlane.f32.xlu0 %v3142
        %v3144 = vpop.xlane.xlu0 %3143
        %v3145 = vsel %vm1427, %v3126, 0.0
        %3146 = vadd.xlane.f32.xlu0 %v3145
        %v3147 = vpop.xlane.xlu0 %3146
        %v3148 = vsel %vm1427, %v3128, 0.0
        %3149 = vadd.xlane.f32.xlu0 %v3148
        %v3150 = vpop.xlane.xlu0 %3149
        %v3151 = vsel %vm1427, %v3130, 0.0
        %3152 = vadd.xlane.f32.xlu0 %v3151
        %v3153 = vpop.xlane.xlu0 %3152
        %v3154 = vsel %vm1427, %v3132, 0.0
        %3155 = vadd.xlane.f32.xlu0 %v3154
        %v3156 = vpop.xlane.xlu0 %3155
        %v3157 = vrcp.pop %v3135
        %v3158 = vmul.f32 %v3118, %v3157
        %v3159 = vrcp.pop %v3138
        %v3160 = vmul.f32 %v3120, %v3159
        %v3161 = vrcp.pop %v3141
        %v3162 = vmul.f32 %v3122, %v3161
        %v3163 = vrcp.pop %v3144
        %v3164 = vmul.f32 %v3124, %v3163
        %v3165 = vrcp.pop %v3147
        %v3166 = vmul.f32 %v3126, %v3165
        %v3167 = vrcp.pop %v3150
        %v3168 = vmul.f32 %v3128, %v3167
        %v3169 = vrcp.pop %v3153
        %v3170 = vmul.f32 %v3130, %v3169
        %v3171 = vrcp.pop %v3156
        %v3172 = vmul.f32 %v3132, %v3171
        %3173 = vrot.lane.b32.xlu0 %v1184, 32
        %v3174 = vpop.permute.xlu0 %3173
        %3175 = vrot.lane.b32.xlu0 %v1189, 32
        %v3176 = vpop.permute.xlu0 %3175
        %3177 = vrot.lane.b32.xlu0 %v1194, 32
        %v3178 = vpop.permute.xlu0 %3177
        %3179 = vrot.lane.b32.xlu0 %v1199, 32
        %v3180 = vpop.permute.xlu0 %3179
        %3181 = vrot.lane.b32.xlu0 %v1204, 32
        %v3182 = vpop.permute.xlu0 %3181
        %3183 = vrot.lane.b32.xlu0 %v1209, 32
        %v3184 = vpop.permute.xlu0 %3183
        %3185 = vrot.lane.b32.xlu0 %v1214, 32
        %v3186 = vpop.permute.xlu0 %3185
        %3187 = vrot.lane.b32.xlu0 %v1219, 32
        %v3188 = vpop.permute.xlu0 %3187
        %v3198 = vsel %vm1427, %v3158, 0
        %v3201 = vsel %vm1427, %v3160, 0
        %v3204 = vsel %vm1427, %v3162, 0
        %v3207 = vsel %vm1427, %v3164, 0
        %v3210 = vsel %vm1427, %v3166, 0
        %v3213 = vsel %vm1427, %v3168, 0
        %v3216 = vsel %vm1427, %v3170, 0
        %v3219 = vsel %vm1427, %v3172, 0
        %3221 = vmatprep.subr.mxu0 0.0
        %3222 = vmatpush1.msra.mxu0 0.0
        %3223 = vmatprep.subr.mxu0 0.0
        %3224 = vmatpush1.msra.mxu0 0.0
        %3225 = vmatprep.subr.mxu0 0.0
        %3226 = vmatpush1.msra.mxu0 0.0
        %3227 = vmatprep.subr.mxu0 0.0
        %3228 = vmatpush1.msra.mxu0 0.0
        %3229 = vmatprep.subr.mxu0 0.0
        %3230 = vmatpush1.msra.mxu0 0.0
        %3231 = vmatprep.subr.mxu0 0.0
        %3232 = vmatpush1.msra.mxu0 0.0
        %3233 = vmatprep.subr.mxu0 0.0
        %3234 = vmatpush1.msra.mxu0 0.0
        %3235 = vmatprep.subr.mxu0 0.0
        %3236 = vmatpush1.msra.mxu0 0.0
        %3237 = vmatprep.subr.mxu0 0.0
        %3238 = vmatpush1.msra.mxu0 %v3188
        %3239 = vmatprep.subr.mxu0 0.0
        %3240 = vmatpush1.msra.mxu0 %v3186
        %3241 = vmatprep.subr.mxu0 0.0
        %3242 = vmatpush1.msra.mxu0 %v3184
        %3243 = vmatprep.subr.mxu0 0.0
        %3244 = vmatpush1.msra.mxu0 %v3182
        %3245 = vmatprep.subr.mxu0 0.0
        %3246 = vmatpush1.msra.mxu0 %v3180
        %3247 = vmatprep.subr.mxu0 0.0
        %3248 = vmatpush1.msra.mxu0 %v3178
        %3249 = vmatprep.subr.mxu0 0.0
        %3250 = vmatpush1.msra.mxu0 %v3176
        %3251 = vmatprep.subr.mxu0 0.0
        %3252 = vmatpush1.msra.mxu0 %v3174
        %3253 = vmatprep.subr.mxu0 0.0
        %3254 = vmatpush2.msra.mxu0 0.0
        %3255 = vmatprep.subr.mxu0 0.0
        %3256 = vmatpush2.msra.mxu0 0.0
        %3257 = vmatprep.subr.mxu0 0.0
        %3258 = vmatpush2.msra.mxu0 0.0
        %3259 = vmatprep.subr.mxu0 0.0
        %3260 = vmatpush2.msra.mxu0 0.0
        %3261 = vmatprep.subr.mxu0 0.0
        %3262 = vmatpush2.msra.mxu0 0.0
        %3263 = vmatprep.subr.mxu0 0.0
        %3264 = vmatpush2.msra.mxu0 0.0
        %3265 = vmatprep.subr.mxu0 0.0
        %3266 = vmatpush2.msra.mxu0 0.0
        %3267 = vmatprep.subr.mxu0 0.0
        %3268 = vmatpush2.msra.mxu0 0.0
        %3269 = vmatprep.subr.mxu0 0.0
        %3270 = vmatpush2.msra.mxu0 0.0
        %3271 = vmatprep.subr.mxu0 0.0
        %3272 = vmatpush2.msra.mxu0 0.0
        %3273 = vmatprep.subr.mxu0 0.0
        %3274 = vmatpush2.msra.mxu0 0.0
        %3275 = vmatprep.subr.mxu0 0.0
        %3276 = vmatpush2.msra.mxu0 0.0
        %3277 = vmatprep.subr.mxu0 0.0
        %3278 = vmatpush2.msra.mxu0 0.0
        %3279 = vmatprep.subr.mxu0 0.0
        %3280 = vmatpush2.msra.mxu0 0.0
        %3281 = vmatprep.subr.mxu0 0.0
        %3282 = vmatpush2.msra.mxu0 0.0
        %3283 = vmatprep.subr.mxu0 0.0
        %3284 = vmatpush2.msra.mxu0 0.0
        %3285 = vmatprep.mubr.f32.mxu0 0.0
        %3286 = vmatmul.mubr.f32.gmra.mxu0 %v3198
        %v3287 = vpop.f32.mrf.mxu0
        %v3288 = vadd.f32 0.0, %v3287
        %v3289 = vpop.f32.mrf.mxu0
        %3290 = vmatprep.mubr.f32.mxu0 0.0
        %3291 = vmatmul.mubr.f32.gmra.mxu0 %v3201
        %v3292 = vpop.f32.mrf.mxu0
        %v3293 = vadd.f32 0.0, %v3292
        %v3294 = vpop.f32.mrf.mxu0
        %3295 = vmatprep.mubr.f32.mxu0 0.0
        %3296 = vmatmul.mubr.f32.gmra.mxu0 %v3204
        %v3297 = vpop.f32.mrf.mxu0
        %v3298 = vadd.f32 0.0, %v3297
        %v3299 = vpop.f32.mrf.mxu0
        %3300 = vmatprep.mubr.f32.mxu0 0.0
        %3301 = vmatmul.mubr.f32.gmra.mxu0 %v3207
        %v3302 = vpop.f32.mrf.mxu0
        %v3303 = vadd.f32 0.0, %v3302
        %v3304 = vpop.f32.mrf.mxu0
        %3305 = vmatprep.mubr.f32.mxu0 0.0
        %3306 = vmatmul.mubr.f32.gmra.mxu0 %v3210
        %v3307 = vpop.f32.mrf.mxu0
        %v3308 = vadd.f32 0.0, %v3307
        %v3309 = vpop.f32.mrf.mxu0
        %3310 = vmatprep.mubr.f32.mxu0 0.0
        %3311 = vmatmul.mubr.f32.gmra.mxu0 %v3213
        %v3312 = vpop.f32.mrf.mxu0
        %v3313 = vadd.f32 0.0, %v3312
        %v3314 = vpop.f32.mrf.mxu0
        %3315 = vmatprep.mubr.f32.mxu0 0.0
        %3316 = vmatmul.mubr.f32.gmra.mxu0 %v3216
        %v3317 = vpop.f32.mrf.mxu0
        %v3318 = vadd.f32 0.0, %v3317
        %v3319 = vpop.f32.mrf.mxu0
        %3320 = vmatprep.mubr.f32.mxu0 0.0
        %3321 = vmatmul.mubr.f32.gmra.mxu0 %v3219
        %v3322 = vpop.f32.mrf.mxu0
        %v3323 = vadd.f32 0.0, %v3322
        %v3324 = vpop.f32.mrf.mxu0
        %3325 = vdwg.mxu0
        %v3327 = vsel %vm1257, %v3288, 0
        %v3330 = vsel %vm1257, %v3293, 0
        %v3333 = vsel %vm1257, %v3298, 0
        %v3336 = vsel %vm1257, %v3303, 0
        %v3339 = vsel %vm1257, %v3308, 0
        %v3342 = vsel %vm1257, %v3313, 0
        %v3345 = vsel %vm1257, %v3318, 0
        %v3348 = vsel %vm1257, %v3323, 0
        %3350 = vmatprep.subr.mxu0 0.0
        %3351 = vmatpush1.msra.mxu0 0.0
        %3352 = vmatprep.subr.mxu0 0.0
        %3353 = vmatpush1.msra.mxu0 0.0
        %3354 = vmatprep.subr.mxu0 0.0
        %3355 = vmatpush1.msra.mxu0 0.0
        %3356 = vmatprep.subr.mxu0 0.0
        %3357 = vmatpush1.msra.mxu0 0.0
        %3358 = vmatprep.subr.mxu0 0.0
        %3359 = vmatpush1.msra.mxu0 0.0
        %3360 = vmatprep.subr.mxu0 0.0
        %3361 = vmatpush1.msra.mxu0 0.0
        %3362 = vmatprep.subr.mxu0 0.0
        %3363 = vmatpush1.msra.mxu0 0.0
        %3364 = vmatprep.subr.mxu0 0.0
        %3365 = vmatpush1.msra.mxu0 0.0
        %3366 = vmatprep.subr.mxu0 0.0
        %3367 = vmatpush1.msra.mxu0 0.0
        %3368 = vmatprep.subr.mxu0 0.0
        %3369 = vmatpush1.msra.mxu0 0.0
        %3370 = vmatprep.subr.mxu0 0.0
        %3371 = vmatpush1.msra.mxu0 0.0
        %3372 = vmatprep.subr.mxu0 0.0
        %3373 = vmatpush1.msra.mxu0 0.0
        %3374 = vmatprep.subr.mxu0 0.0
        %3375 = vmatpush1.msra.mxu0 %v1256
        %3376 = vmatprep.subr.mxu0 0.0
        %3377 = vmatpush1.msra.mxu0 %v1255
        %3378 = vmatprep.subr.mxu0 0.0
        %3379 = vmatpush1.msra.mxu0 %v1254
        %3380 = vmatprep.subr.mxu0 0.0
        %3381 = vmatpush1.msra.mxu0 %v1253
        %3382 = vmatprep.subr.mxu0 0.0
        %3383 = vmatpush2.msra.mxu0 0.0
        %3384 = vmatprep.subr.mxu0 0.0
        %3385 = vmatpush2.msra.mxu0 0.0
        %3386 = vmatprep.subr.mxu0 0.0
        %3387 = vmatpush2.msra.mxu0 0.0
        %3388 = vmatprep.subr.mxu0 0.0
        %3389 = vmatpush2.msra.mxu0 0.0
        %3390 = vmatprep.subr.mxu0 0.0
        %3391 = vmatpush2.msra.mxu0 0.0
        %3392 = vmatprep.subr.mxu0 0.0
        %3393 = vmatpush2.msra.mxu0 0.0
        %3394 = vmatprep.subr.mxu0 0.0
        %3395 = vmatpush2.msra.mxu0 0.0
        %3396 = vmatprep.subr.mxu0 0.0
        %3397 = vmatpush2.msra.mxu0 0.0
        %3398 = vmatprep.subr.mxu0 0.0
        %3399 = vmatpush2.msra.mxu0 0.0
        %3400 = vmatprep.subr.mxu0 0.0
        %3401 = vmatpush2.msra.mxu0 0.0
        %3402 = vmatprep.subr.mxu0 0.0
        %3403 = vmatpush2.msra.mxu0 0.0
        %3404 = vmatprep.subr.mxu0 0.0
        %3405 = vmatpush2.msra.mxu0 0.0
        %3406 = vmatprep.subr.mxu0 0.0
        %3407 = vmatpush2.msra.mxu0 0.0
        %3408 = vmatprep.subr.mxu0 0.0
        %3409 = vmatpush2.msra.mxu0 0.0
        %3410 = vmatprep.subr.mxu0 0.0
        %3411 = vmatpush2.msra.mxu0 0.0
        %3412 = vmatprep.subr.mxu0 0.0
        %3413 = vmatpush2.msra.mxu0 0.0
        %3414 = vmatprep.mubr.f32.mxu0 0.0
        %3415 = vmatmul.mubr.f32.gmra.mxu0 %v3327
        %v3416 = vpop.f32.mrf.mxu0
        %v3417 = vadd.f32 0.0, %v3416
        %v3418 = vpop.f32.mrf.mxu0
        %3419 = vmatprep.mubr.f32.mxu0 0.0
        %3420 = vmatmul.mubr.f32.gmra.mxu0 %v3330
        %v3421 = vpop.f32.mrf.mxu0
        %v3422 = vadd.f32 0.0, %v3421
        %v3423 = vpop.f32.mrf.mxu0
        %3424 = vmatprep.mubr.f32.mxu0 0.0
        %3425 = vmatmul.mubr.f32.gmra.mxu0 %v3333
        %v3426 = vpop.f32.mrf.mxu0
        %v3427 = vadd.f32 0.0, %v3426
        %v3428 = vpop.f32.mrf.mxu0
        %3429 = vmatprep.mubr.f32.mxu0 0.0
        %3430 = vmatmul.mubr.f32.gmra.mxu0 %v3336
        %v3431 = vpop.f32.mrf.mxu0
        %v3432 = vadd.f32 0.0, %v3431
        %v3433 = vpop.f32.mrf.mxu0
        %3434 = vmatprep.mubr.f32.mxu0 0.0
        %3435 = vmatmul.mubr.f32.gmra.mxu0 %v3339
        %v3436 = vpop.f32.mrf.mxu0
        %v3437 = vadd.f32 0.0, %v3436
        %v3438 = vpop.f32.mrf.mxu0
        %3439 = vmatprep.mubr.f32.mxu0 0.0
        %3440 = vmatmul.mubr.f32.gmra.mxu0 %v3342
        %v3441 = vpop.f32.mrf.mxu0
        %v3442 = vadd.f32 0.0, %v3441
        %v3443 = vpop.f32.mrf.mxu0
        %3444 = vmatprep.mubr.f32.mxu0 0.0
        %3445 = vmatmul.mubr.f32.gmra.mxu0 %v3345
        %v3446 = vpop.f32.mrf.mxu0
        %v3447 = vadd.f32 0.0, %v3446
        %v3448 = vpop.f32.mrf.mxu0
        %3449 = vmatprep.mubr.f32.mxu0 0.0
        %3450 = vmatmul.mubr.f32.gmra.mxu0 %v3348
        %v3451 = vpop.f32.mrf.mxu0
        %v3452 = vadd.f32 0.0, %v3451
        %v3453 = vpop.f32.mrf.mxu0
        %3454 = vdwg.mxu0
        %v3455 = vadd.f32 %v2892, %v3417
        %v3456 = vadd.f32 %v2893, %v3422
        %v3457 = vadd.f32 %v2894, %v3427
        %v3458 = vadd.f32 %v2895, %v3432
        %v3459 = vadd.f32 %v2896, %v3437
        %v3460 = vadd.f32 %v2897, %v3442
        %v3461 = vadd.f32 %v2898, %v3447
        %v3462 = vadd.f32 %v2899, %v3452
        %v3463 = vld [vmem:[%s10] sm:$0x1]
        %v3465 = vlaneseq
        %v3466 = vshrl.u32 %v3465, 7
        %v3467 = vsub.s32 0, %v3466
        %v3468 = vrot.slane %v3463, %v3467
        %v3470 = vadd.f32 %v3455, %v3468
        %v3471 = vadd.f32 %v3456, %v3468
        %v3472 = vadd.f32 %v3457, %v3468
        %v3473 = vadd.f32 %v3458, %v3468
        %v3474 = vadd.f32 %v3459, %v3468
        %v3475 = vadd.f32 %v3460, %v3468
        %v3476 = vadd.f32 %v3461, %v3468
        %v3477 = vadd.f32 %v3462, %v3468
        %v3478 = vadd.f32 %v3470, %v654
        %v3479 = vadd.f32 %v3471, %v655
        %v3480 = vadd.f32 %v3472, %v656
        %v3481 = vadd.f32 %v3473, %v657
        %v3482 = vadd.f32 %v3474, %v658
        %v3483 = vadd.f32 %v3475, %v659
        %v3484 = vadd.f32 %v3476, %v660
        %v3485 = vadd.f32 %v3477, %v661
        %3486 = vadd.xlane.f32.xlu0 %v3478
        %v3487 = vpop.xlane.xlu0 %3486
        %3488 = vadd.xlane.f32.xlu0 %v3479
        %v3489 = vpop.xlane.xlu0 %3488
        %3490 = vadd.xlane.f32.xlu0 %v3480
        %v3491 = vpop.xlane.xlu0 %3490
        %3492 = vadd.xlane.f32.xlu0 %v3481
        %v3493 = vpop.xlane.xlu0 %3492
        %3494 = vadd.xlane.f32.xlu0 %v3482
        %v3495 = vpop.xlane.xlu0 %3494
        %3496 = vadd.xlane.f32.xlu0 %v3483
        %v3497 = vpop.xlane.xlu0 %3496
        %3498 = vadd.xlane.f32.xlu0 %v3484
        %v3499 = vpop.xlane.xlu0 %3498
        %3500 = vadd.xlane.f32.xlu0 %v3485
        %v3501 = vpop.xlane.xlu0 %3500
        %v3502 = vmul.f32 %v3487, %v678
        %v3503 = vmul.f32 %v3489, %v678
        %v3504 = vmul.f32 %v3491, %v678
        %v3505 = vmul.f32 %v3493, %v678
        %v3506 = vmul.f32 %v3495, %v678
        %v3507 = vmul.f32 %v3497, %v678
        %v3508 = vmul.f32 %v3499, %v678
        %v3509 = vmul.f32 %v3501, %v678
        %v3510 = vsub.f32 %v3478, %v3502
        %v3511 = vsub.f32 %v3479, %v3503
        %v3512 = vsub.f32 %v3480, %v3504
        %v3513 = vsub.f32 %v3481, %v3505
        %v3514 = vsub.f32 %v3482, %v3506
        %v3515 = vsub.f32 %v3483, %v3507
        %v3516 = vsub.f32 %v3484, %v3508
        %v3517 = vsub.f32 %v3485, %v3509
        %v3518 = vmul.f32 %v3510, %v3510
        %v3519 = vmul.f32 %v3511, %v3511
        %v3520 = vmul.f32 %v3512, %v3512
        %v3521 = vmul.f32 %v3513, %v3513
        %v3522 = vmul.f32 %v3514, %v3514
        %v3523 = vmul.f32 %v3515, %v3515
        %v3524 = vmul.f32 %v3516, %v3516
        %v3525 = vmul.f32 %v3517, %v3517
        %3526 = vadd.xlane.f32.xlu0 %v3518
        %v3527 = vpop.xlane.xlu0 %3526
        %3528 = vadd.xlane.f32.xlu0 %v3519
        %v3529 = vpop.xlane.xlu0 %3528
        %3530 = vadd.xlane.f32.xlu0 %v3520
        %v3531 = vpop.xlane.xlu0 %3530
        %3532 = vadd.xlane.f32.xlu0 %v3521
        %v3533 = vpop.xlane.xlu0 %3532
        %3534 = vadd.xlane.f32.xlu0 %v3522
        %v3535 = vpop.xlane.xlu0 %3534
        %3536 = vadd.xlane.f32.xlu0 %v3523
        %v3537 = vpop.xlane.xlu0 %3536
        %3538 = vadd.xlane.f32.xlu0 %v3524
        %v3539 = vpop.xlane.xlu0 %3538
        %3540 = vadd.xlane.f32.xlu0 %v3525
        %v3541 = vpop.xlane.xlu0 %3540
        %v3542 = vmul.f32 %v3527, %v719
        %v3543 = vmul.f32 %v3529, %v719
        %v3544 = vmul.f32 %v3531, %v719
        %v3545 = vmul.f32 %v3533, %v719
        %v3546 = vmul.f32 %v3535, %v719
        %v3547 = vmul.f32 %v3537, %v719
        %v3548 = vmul.f32 %v3539, %v719
        %v3549 = vmul.f32 %v3541, %v719
        %v3550 = vld [vmem:[%s11] sm:$0x1]
        %v3551 = vsub.f32 %v3542, 1e-05
        %v3552 = vsub.f32 %v3543, 1e-05
        %v3553 = vsub.f32 %v3544, 1e-05
        %v3554 = vsub.f32 %v3545, 1e-05
        %v3555 = vsub.f32 %v3546, 1e-05
        %v3556 = vsub.f32 %v3547, 1e-05
        %v3557 = vsub.f32 %v3548, 1e-05
        %v3558 = vsub.f32 %v3549, 1e-05
        %v3559 = vrsqrt.pop %v3551
        %v3560 = vmul.f32 %v3551, %v3559
        %vm3561 = vcmp.eq.f32.partialorder %v3551, inf
        %v3562 = vsel %vm3561, %v3551, %v3560
        %vm3563 = vcmp.eq.f32.partialorder %v3551, 0.0
        %v3564 = vand.u32 %v3551, 2147483648
        %v3565 = vsel %vm3563, %v3564, %v3562
        %v3566 = vrsqrt.pop %v3552
        %v3567 = vmul.f32 %v3552, %v3566
        %vm3568 = vcmp.eq.f32.partialorder %v3552, inf
        %v3569 = vsel %vm3568, %v3552, %v3567
        %vm3570 = vcmp.eq.f32.partialorder %v3552, 0.0
        %v3571 = vand.u32 %v3552, 2147483648
        %v3572 = vsel %vm3570, %v3571, %v3569
        %v3573 = vrsqrt.pop %v3553
        %v3574 = vmul.f32 %v3553, %v3573
        %vm3575 = vcmp.eq.f32.partialorder %v3553, inf
        %v3576 = vsel %vm3575, %v3553, %v3574
        %vm3577 = vcmp.eq.f32.partialorder %v3553, 0.0
        %v3578 = vand.u32 %v3553, 2147483648
        %v3579 = vsel %vm3577, %v3578, %v3576
        %v3580 = vrsqrt.pop %v3554
        %v3581 = vmul.f32 %v3554, %v3580
        %vm3582 = vcmp.eq.f32.partialorder %v3554, inf
        %v3583 = vsel %vm3582, %v3554, %v3581
        %vm3584 = vcmp.eq.f32.partialorder %v3554, 0.0
        %v3585 = vand.u32 %v3554, 2147483648
        %v3586 = vsel %vm3584, %v3585, %v3583
        %v3587 = vrsqrt.pop %v3555
        %v3588 = vmul.f32 %v3555, %v3587
        %vm3589 = vcmp.eq.f32.partialorder %v3555, inf
        %v3590 = vsel %vm3589, %v3555, %v3588
        %vm3591 = vcmp.eq.f32.partialorder %v3555, 0.0
        %v3592 = vand.u32 %v3555, 2147483648
        %v3593 = vsel %vm3591, %v3592, %v3590
        %v3594 = vrsqrt.pop %v3556
        %v3595 = vmul.f32 %v3556, %v3594
        %vm3596 = vcmp.eq.f32.partialorder %v3556, inf
        %v3597 = vsel %vm3596, %v3556, %v3595
        %vm3598 = vcmp.eq.f32.partialorder %v3556, 0.0
        %v3599 = vand.u32 %v3556, 2147483648
        %v3600 = vsel %vm3598, %v3599, %v3597
        %v3601 = vrsqrt.pop %v3557
        %v3602 = vmul.f32 %v3557, %v3601
        %vm3603 = vcmp.eq.f32.partialorder %v3557, inf
        %v3604 = vsel %vm3603, %v3557, %v3602
        %vm3605 = vcmp.eq.f32.partialorder %v3557, 0.0
        %v3606 = vand.u32 %v3557, 2147483648
        %v3607 = vsel %vm3605, %v3606, %v3604
        %v3608 = vrsqrt.pop %v3558
        %v3609 = vmul.f32 %v3558, %v3608
        %vm3610 = vcmp.eq.f32.partialorder %v3558, inf
        %v3611 = vsel %vm3610, %v3558, %v3609
        %vm3612 = vcmp.eq.f32.partialorder %v3558, 0.0
        %v3613 = vand.u32 %v3558, 2147483648
        %v3614 = vsel %vm3612, %v3613, %v3611
        %v3615 = vrcp.pop %v3565
        %v3616 = vmul.f32 %v3510, %v3615
        %v3617 = vrcp.pop %v3572
        %v3618 = vmul.f32 %v3511, %v3617
        %v3619 = vrcp.pop %v3579
        %v3620 = vmul.f32 %v3512, %v3619
        %v3621 = vrcp.pop %v3586
        %v3622 = vmul.f32 %v3513, %v3621
        %v3623 = vrcp.pop %v3593
        %v3624 = vmul.f32 %v3514, %v3623
        %v3625 = vrcp.pop %v3600
        %v3626 = vmul.f32 %v3515, %v3625
        %v3627 = vrcp.pop %v3607
        %v3628 = vmul.f32 %v3516, %v3627
        %v3629 = vrcp.pop %v3614
        %v3630 = vmul.f32 %v3517, %v3629
        %v3632 = vlaneseq
        %v3633 = vshrl.u32 %v3632, 7
        %v3634 = vsub.s32 0, %v3633
        %v3635 = vrot.slane %v3550, %v3634
        %v3637 = vmul.f32 %v3635, %v3616
        %v3638 = vmul.f32 %v3635, %v3618
        %v3639 = vmul.f32 %v3635, %v3620
        %v3640 = vmul.f32 %v3635, %v3622
        %v3641 = vmul.f32 %v3635, %v3624
        %v3642 = vmul.f32 %v3635, %v3626
        %v3643 = vmul.f32 %v3635, %v3628
        %v3644 = vmul.f32 %v3635, %v3630
        %v3645 = vld [vmem:[%s12] sm:$0x1]
        %v3647 = vlaneseq
        %v3648 = vshrl.u32 %v3647, 7
        %v3649 = vsub.s32 0, %v3648
        %v3650 = vrot.slane %v3645, %v3649
        %v3652 = vmul.f32 %v3637, %v3650
        %v3653 = vmul.f32 %v3638, %v3650
        %v3654 = vmul.f32 %v3639, %v3650
        %v3655 = vmul.f32 %v3640, %v3650
        %v3656 = vmul.f32 %v3641, %v3650
        %v3657 = vmul.f32 %v3642, %v3650
        %v3658 = vmul.f32 %v3643, %v3650
        %v3659 = vmul.f32 %v3644, %v3650
        %v3660 = vld [vmem:[#allocation11] sm:$0xff]
        %v3661 = vld [vmem:[#allocation11 + $0x8] sm:$0xff]
        %v3662 = vld [vmem:[#allocation11 + $0x10] sm:$0xff]
        %v3663 = vld [vmem:[#allocation11 + $0x18] sm:$0xff]
        %v3664 = vld [vmem:[#allocation11 + $0x20] sm:$0xff]
        %v3665 = vld [vmem:[#allocation11 + $0x28] sm:$0xff]
        %v3666 = vld [vmem:[#allocation11 + $0x30] sm:$0xff]
        %v3667 = vld [vmem:[#allocation11 + $0x38] sm:$0xff]
        %v3668 = vld [vmem:[#allocation11 + $0x40] sm:$0xff]
        %v3669 = vld [vmem:[#allocation11 + $0x48] sm:$0xff]
        %v3670 = vld [vmem:[#allocation11 + $0x50] sm:$0xff]
        %v3671 = vld [vmem:[#allocation11 + $0x58] sm:$0xff]
        %v3672 = vld [vmem:[#allocation11 + $0x60] sm:$0xff]
        %v3673 = vld [vmem:[#allocation11 + $0x68] sm:$0xff]
        %v3674 = vld [vmem:[#allocation11 + $0x70] sm:$0xff]
        %v3675 = vld [vmem:[#allocation11 + $0x78] sm:$0xff]
        %v3676 = vld [vmem:[#allocation11 + $0x80] sm:$0xff]
        %v3677 = vld [vmem:[#allocation11 + $0x88] sm:$0xff]
        %v3678 = vld [vmem:[#allocation11 + $0x90] sm:$0xff]
        %v3679 = vld [vmem:[#allocation11 + $0x98] sm:$0xff]
        %v3680 = vld [vmem:[#allocation11 + $0xa0] sm:$0xff]
        %v3681 = vld [vmem:[#allocation11 + $0xa8] sm:$0xff]
        %v3682 = vld [vmem:[#allocation11 + $0xb0] sm:$0xff]
        %v3683 = vld [vmem:[#allocation11 + $0xb8] sm:$0xff]
        %v3684 = vld [vmem:[#allocation11 + $0xc0] sm:$0xff]
        %v3685 = vld [vmem:[#allocation11 + $0xc8] sm:$0xff]
        %v3686 = vld [vmem:[#allocation11 + $0xd0] sm:$0xff]
        %v3687 = vld [vmem:[#allocation11 + $0xd8] sm:$0xff]
        %v3688 = vld [vmem:[#allocation11 + $0xe0] sm:$0xff]
        %v3689 = vld [vmem:[#allocation11 + $0xe8] sm:$0xff]
        %v3690 = vld [vmem:[#allocation11 + $0xf0] sm:$0xff]
        %v3691 = vld [vmem:[#allocation11 + $0xf8] sm:$0xff]
        %v3692 = vld [vmem:[#allocation11 + $0x100] sm:$0xff]
        %v3693 = vld [vmem:[#allocation11 + $0x108] sm:$0xff]
        %v3694 = vld [vmem:[#allocation11 + $0x110] sm:$0xff]
        %v3695 = vld [vmem:[#allocation11 + $0x118] sm:$0xff]
        %v3696 = vld [vmem:[#allocation11 + $0x120] sm:$0xff]
        %v3697 = vld [vmem:[#allocation11 + $0x128] sm:$0xff]
        %v3698 = vld [vmem:[#allocation11 + $0x130] sm:$0xff]
        %v3699 = vld [vmem:[#allocation11 + $0x138] sm:$0xff]
        %v3700 = vld [vmem:[#allocation11 + $0x140] sm:$0xff]
        %v3701 = vld [vmem:[#allocation11 + $0x148] sm:$0xff]
        %v3702 = vld [vmem:[#allocation11 + $0x150] sm:$0xff]
        %v3703 = vld [vmem:[#allocation11 + $0x158] sm:$0xff]
        %v3704 = vld [vmem:[#allocation11 + $0x160] sm:$0xff]
        %v3705 = vld [vmem:[#allocation11 + $0x168] sm:$0xff]
        %v3706 = vld [vmem:[#allocation11 + $0x170] sm:$0xff]
        %v3707 = vld [vmem:[#allocation11 + $0x178] sm:$0xff]
        %v3708 = vld [vmem:[#allocation11 + $0x180] sm:$0xff]
        %v3709 = vld [vmem:[#allocation11 + $0x188] sm:$0xff]
        %v3710 = vld [vmem:[#allocation11 + $0x190] sm:$0xff]
        %v3711 = vld [vmem:[#allocation11 + $0x198] sm:$0xff]
        %v3712 = vld [vmem:[#allocation11 + $0x1a0] sm:$0xff]
        %v3713 = vld [vmem:[#allocation11 + $0x1a8] sm:$0xff]
        %v3714 = vld [vmem:[#allocation11 + $0x1b0] sm:$0xff]
        %v3715 = vld [vmem:[#allocation11 + $0x1b8] sm:$0xff]
        %v3716 = vld [vmem:[#allocation11 + $0x1c0] sm:$0xff]
        %v3717 = vld [vmem:[#allocation11 + $0x1c8] sm:$0xff]
        %v3718 = vld [vmem:[#allocation11 + $0x1d0] sm:$0xff]
        %v3719 = vld [vmem:[#allocation11 + $0x1d8] sm:$0xff]
        %v3720 = vld [vmem:[#allocation11 + $0x1e0] sm:$0xff]
        %v3721 = vld [vmem:[#allocation11 + $0x1e8] sm:$0xff]
        %v3722 = vld [vmem:[#allocation11 + $0x1f0] sm:$0xff]
        %v3723 = vld [vmem:[#allocation11 + $0x1f8] sm:$0xff]
        %v3724 = vld [vmem:[%s14] sm:$0xf]
        %v3726 = vlaneseq
        %v3727 = vshrl.u32 %v3726, 7
        %v3728 = vsub.s32 0, %v3727
        %v3729 = vrot.slane %v3724, %v3728
        %v3730 = vlaneseq
        %v3731 = vshrl.u32 %v3730, 7
        %v3732 = vsub.s32 1, %v3731
        %v3733 = vrot.slane %v3724, %v3732
        %v3734 = vlaneseq
        %v3735 = vshrl.u32 %v3734, 7
        %v3736 = vsub.s32 2, %v3735
        %v3737 = vrot.slane %v3724, %v3736
        %v3738 = vlaneseq
        %v3739 = vshrl.u32 %v3738, 7
        %v3740 = vsub.s32 3, %v3739
        %v3741 = vrot.slane %v3724, %v3740
        %3746 = vmatprep.subr.mxu0 %v3721
        %3747 = vmatpush1.msra.mxu0 %v3720
        %3748 = vmatprep.subr.mxu0 %v3717
        %3749 = vmatpush1.msra.mxu0 %v3716
        %3750 = vmatprep.subr.mxu0 %v3713
        %3751 = vmatpush1.msra.mxu0 %v3712
        %3752 = vmatprep.subr.mxu0 %v3709
        %3753 = vmatpush1.msra.mxu0 %v3708
        %3754 = vmatprep.subr.mxu0 %v3705
        %3755 = vmatpush1.msra.mxu0 %v3704
        %3756 = vmatprep.subr.mxu0 %v3701
        %3757 = vmatpush1.msra.mxu0 %v3700
        %3758 = vmatprep.subr.mxu0 %v3697
        %3759 = vmatpush1.msra.mxu0 %v3696
        %3760 = vmatprep.subr.mxu0 %v3693
        %3761 = vmatpush1.msra.mxu0 %v3692
        %3762 = vmatprep.subr.mxu0 %v3689
        %3763 = vmatpush1.msra.mxu0 %v3688
        %3764 = vmatprep.subr.mxu0 %v3685
        %3765 = vmatpush1.msra.mxu0 %v3684
        %3766 = vmatprep.subr.mxu0 %v3681
        %3767 = vmatpush1.msra.mxu0 %v3680
        %3768 = vmatprep.subr.mxu0 %v3677
        %3769 = vmatpush1.msra.mxu0 %v3676
        %3770 = vmatprep.subr.mxu0 %v3673
        %3771 = vmatpush1.msra.mxu0 %v3672
        %3772 = vmatprep.subr.mxu0 %v3669
        %3773 = vmatpush1.msra.mxu0 %v3668
        %3774 = vmatprep.subr.mxu0 %v3665
        %3775 = vmatpush1.msra.mxu0 %v3664
        %3776 = vmatprep.subr.mxu0 %v3661
        %3777 = vmatpush1.msra.mxu0 %v3660
        %3778 = vmatprep.subr.mxu0 0.0
        %3779 = vmatpush2.msra.mxu0 0.0
        %3780 = vmatprep.subr.mxu0 0.0
        %3781 = vmatpush2.msra.mxu0 0.0
        %3782 = vmatprep.subr.mxu0 0.0
        %3783 = vmatpush2.msra.mxu0 0.0
        %3784 = vmatprep.subr.mxu0 0.0
        %3785 = vmatpush2.msra.mxu0 0.0
        %3786 = vmatprep.subr.mxu0 0.0
        %3787 = vmatpush2.msra.mxu0 0.0
        %3788 = vmatprep.subr.mxu0 0.0
        %3789 = vmatpush2.msra.mxu0 0.0
        %3790 = vmatprep.subr.mxu0 0.0
        %3791 = vmatpush2.msra.mxu0 0.0
        %3792 = vmatprep.subr.mxu0 0.0
        %3793 = vmatpush2.msra.mxu0 0.0
        %3794 = vmatprep.subr.mxu0 0.0
        %3795 = vmatpush2.msra.mxu0 0.0
        %3796 = vmatprep.subr.mxu0 0.0
        %3797 = vmatpush2.msra.mxu0 0.0
        %3798 = vmatprep.subr.mxu0 0.0
        %3799 = vmatpush2.msra.mxu0 0.0
        %3800 = vmatprep.subr.mxu0 0.0
        %3801 = vmatpush2.msra.mxu0 0.0
        %3802 = vmatprep.subr.mxu0 0.0
        %3803 = vmatpush2.msra.mxu0 0.0
        %3804 = vmatprep.subr.mxu0 0.0
        %3805 = vmatpush2.msra.mxu0 0.0
        %3806 = vmatprep.subr.mxu0 0.0
        %3807 = vmatpush2.msra.mxu0 0.0
        %3808 = vmatprep.subr.mxu0 0.0
        %3809 = vmatpush2.msra.mxu0 0.0
        %3810 = vmatprep.mubr.f32.mxu0 0.0
        %3811 = vmatmul.mubr.f32.gmra.mxu0 %v3652
        %v3812 = vpop.f32.mrf.mxu0
        %v3813 = vadd.f32 %v3729, %v3812
        %v3814 = vpop.f32.mrf.mxu0
        %v3815 = vadd.f32 %v3733, %v3814
        %3816 = vmatprep.mubr.f32.mxu0 0.0
        %3817 = vmatmul.mubr.f32.gmra.mxu0 %v3653
        %v3818 = vpop.f32.mrf.mxu0
        %v3819 = vadd.f32 %v3729, %v3818
        %v3820 = vpop.f32.mrf.mxu0
        %v3821 = vadd.f32 %v3733, %v3820
        %3822 = vmatprep.mubr.f32.mxu0 0.0
        %3823 = vmatmul.mubr.f32.gmra.mxu0 %v3654
        %v3824 = vpop.f32.mrf.mxu0
        %v3825 = vadd.f32 %v3729, %v3824
        %v3826 = vpop.f32.mrf.mxu0
        %v3827 = vadd.f32 %v3733, %v3826
        %3828 = vmatprep.mubr.f32.mxu0 0.0
        %3829 = vmatmul.mubr.f32.gmra.mxu0 %v3655
        %v3830 = vpop.f32.mrf.mxu0
        %v3831 = vadd.f32 %v3729, %v3830
        %v3832 = vpop.f32.mrf.mxu0
        %v3833 = vadd.f32 %v3733, %v3832
        %3834 = vmatprep.mubr.f32.mxu0 0.0
        %3835 = vmatmul.mubr.f32.gmra.mxu0 %v3656
        %v3836 = vpop.f32.mrf.mxu0
        %v3837 = vadd.f32 %v3729, %v3836
        %v3838 = vpop.f32.mrf.mxu0
        %v3839 = vadd.f32 %v3733, %v3838
        %3840 = vmatprep.mubr.f32.mxu0 0.0
        %3841 = vmatmul.mubr.f32.gmra.mxu0 %v3657
        %v3842 = vpop.f32.mrf.mxu0
        %v3843 = vadd.f32 %v3729, %v3842
        %v3844 = vpop.f32.mrf.mxu0
        %v3845 = vadd.f32 %v3733, %v3844
        %3846 = vmatprep.mubr.f32.mxu0 0.0
        %3847 = vmatmul.mubr.f32.gmra.mxu0 %v3658
        %v3848 = vpop.f32.mrf.mxu0
        %v3849 = vadd.f32 %v3729, %v3848
        %v3850 = vpop.f32.mrf.mxu0
        %v3851 = vadd.f32 %v3733, %v3850
        %3852 = vmatprep.mubr.f32.mxu0 0.0
        %3853 = vmatmul.mubr.f32.gmra.mxu0 %v3659
        %v3854 = vpop.f32.mrf.mxu0
        %v3855 = vadd.f32 %v3729, %v3854
        %v3856 = vpop.f32.mrf.mxu0
        %v3857 = vadd.f32 %v3733, %v3856
        %3858 = vdwg.mxu0
        %3859 = vmatprep.subr.mxu0 %v3723
        %3860 = vmatpush1.msra.mxu0 %v3722
        %3861 = vmatprep.subr.mxu0 %v3719
        %3862 = vmatpush1.msra.mxu0 %v3718
        %3863 = vmatprep.subr.mxu0 %v3715
        %3864 = vmatpush1.msra.mxu0 %v3714
        %3865 = vmatprep.subr.mxu0 %v3711
        %3866 = vmatpush1.msra.mxu0 %v3710
        %3867 = vmatprep.subr.mxu0 %v3707
        %3868 = vmatpush1.msra.mxu0 %v3706
        %3869 = vmatprep.subr.mxu0 %v3703
        %3870 = vmatpush1.msra.mxu0 %v3702
        %3871 = vmatprep.subr.mxu0 %v3699
        %3872 = vmatpush1.msra.mxu0 %v3698
        %3873 = vmatprep.subr.mxu0 %v3695
        %3874 = vmatpush1.msra.mxu0 %v3694
        %3875 = vmatprep.subr.mxu0 %v3691
        %3876 = vmatpush1.msra.mxu0 %v3690
        %3877 = vmatprep.subr.mxu0 %v3687
        %3878 = vmatpush1.msra.mxu0 %v3686
        %3879 = vmatprep.subr.mxu0 %v3683
        %3880 = vmatpush1.msra.mxu0 %v3682
        %3881 = vmatprep.subr.mxu0 %v3679
        %3882 = vmatpush1.msra.mxu0 %v3678
        %3883 = vmatprep.subr.mxu0 %v3675
        %3884 = vmatpush1.msra.mxu0 %v3674
        %3885 = vmatprep.subr.mxu0 %v3671
        %3886 = vmatpush1.msra.mxu0 %v3670
        %3887 = vmatprep.subr.mxu0 %v3667
        %3888 = vmatpush1.msra.mxu0 %v3666
        %3889 = vmatprep.subr.mxu0 %v3663
        %3890 = vmatpush1.msra.mxu0 %v3662
        %3891 = vmatprep.subr.mxu0 0.0
        %3892 = vmatpush2.msra.mxu0 0.0
        %3893 = vmatprep.subr.mxu0 0.0
        %3894 = vmatpush2.msra.mxu0 0.0
        %3895 = vmatprep.subr.mxu0 0.0
        %3896 = vmatpush2.msra.mxu0 0.0
        %3897 = vmatprep.subr.mxu0 0.0
        %3898 = vmatpush2.msra.mxu0 0.0
        %3899 = vmatprep.subr.mxu0 0.0
        %3900 = vmatpush2.msra.mxu0 0.0
        %3901 = vmatprep.subr.mxu0 0.0
        %3902 = vmatpush2.msra.mxu0 0.0
        %3903 = vmatprep.subr.mxu0 0.0
        %3904 = vmatpush2.msra.mxu0 0.0
        %3905 = vmatprep.subr.mxu0 0.0
        %3906 = vmatpush2.msra.mxu0 0.0
        %3907 = vmatprep.subr.mxu0 0.0
        %3908 = vmatpush2.msra.mxu0 0.0
        %3909 = vmatprep.subr.mxu0 0.0
        %3910 = vmatpush2.msra.mxu0 0.0
        %3911 = vmatprep.subr.mxu0 0.0
        %3912 = vmatpush2.msra.mxu0 0.0
        %3913 = vmatprep.subr.mxu0 0.0
        %3914 = vmatpush2.msra.mxu0 0.0
        %3915 = vmatprep.subr.mxu0 0.0
        %3916 = vmatpush2.msra.mxu0 0.0
        %3917 = vmatprep.subr.mxu0 0.0
        %3918 = vmatpush2.msra.mxu0 0.0
        %3919 = vmatprep.subr.mxu0 0.0
        %3920 = vmatpush2.msra.mxu0 0.0
        %3921 = vmatprep.subr.mxu0 0.0
        %3922 = vmatpush2.msra.mxu0 0.0
        %3923 = vmatprep.mubr.f32.mxu0 0.0
        %3924 = vmatmul.mubr.f32.gmra.mxu0 %v3652
        %v3925 = vpop.f32.mrf.mxu0
        %v3926 = vadd.f32 %v3737, %v3925
        %v3927 = vpop.f32.mrf.mxu0
        %v3928 = vadd.f32 %v3741, %v3927
        %3929 = vmatprep.mubr.f32.mxu0 0.0
        %3930 = vmatmul.mubr.f32.gmra.mxu0 %v3653
        %v3931 = vpop.f32.mrf.mxu0
        %v3932 = vadd.f32 %v3737, %v3931
        %v3933 = vpop.f32.mrf.mxu0
        %v3934 = vadd.f32 %v3741, %v3933
        %3935 = vmatprep.mubr.f32.mxu0 0.0
        %3936 = vmatmul.mubr.f32.gmra.mxu0 %v3654
        %v3937 = vpop.f32.mrf.mxu0
        %v3938 = vadd.f32 %v3737, %v3937
        %v3939 = vpop.f32.mrf.mxu0
        %v3940 = vadd.f32 %v3741, %v3939
        %3941 = vmatprep.mubr.f32.mxu0 0.0
        %3942 = vmatmul.mubr.f32.gmra.mxu0 %v3655
        %v3943 = vpop.f32.mrf.mxu0
        %v3944 = vadd.f32 %v3737, %v3943
        %v3945 = vpop.f32.mrf.mxu0
        %v3946 = vadd.f32 %v3741, %v3945
        %3947 = vmatprep.mubr.f32.mxu0 0.0
        %3948 = vmatmul.mubr.f32.gmra.mxu0 %v3656
        %v3949 = vpop.f32.mrf.mxu0
        %v3950 = vadd.f32 %v3737, %v3949
        %v3951 = vpop.f32.mrf.mxu0
        %v3952 = vadd.f32 %v3741, %v3951
        %3953 = vmatprep.mubr.f32.mxu0 0.0
        %3954 = vmatmul.mubr.f32.gmra.mxu0 %v3657
        %v3955 = vpop.f32.mrf.mxu0
        %v3956 = vadd.f32 %v3737, %v3955
        %v3957 = vpop.f32.mrf.mxu0
        %v3958 = vadd.f32 %v3741, %v3957
        %3959 = vmatprep.mubr.f32.mxu0 0.0
        %3960 = vmatmul.mubr.f32.gmra.mxu0 %v3658
        %v3961 = vpop.f32.mrf.mxu0
        %v3962 = vadd.f32 %v3737, %v3961
        %v3963 = vpop.f32.mrf.mxu0
        %v3964 = vadd.f32 %v3741, %v3963
        %3965 = vmatprep.mubr.f32.mxu0 0.0
        %3966 = vmatmul.mubr.f32.gmra.mxu0 %v3659
        %v3967 = vpop.f32.mrf.mxu0
        %v3968 = vadd.f32 %v3737, %v3967
        %v3969 = vpop.f32.mrf.mxu0
        %v3970 = vadd.f32 %v3741, %v3969
        %3971 = vdwg.mxu0
        %v3972 = vmul.f32 %v3813, 0.5
        %v3973 = vmul.f32 %v3815, 0.5
        %v3974 = vmul.f32 %v3926, 0.5
        %v3975 = vmul.f32 %v3928, 0.5
        %v3976 = vmul.f32 %v3819, 0.5
        %v3977 = vmul.f32 %v3821, 0.5
        %v3978 = vmul.f32 %v3932, 0.5
        %v3979 = vmul.f32 %v3934, 0.5
        %v3980 = vmul.f32 %v3825, 0.5
        %v3981 = vmul.f32 %v3827, 0.5
        %v3982 = vmul.f32 %v3938, 0.5
        %v3983 = vmul.f32 %v3940, 0.5
        %v3984 = vmul.f32 %v3831, 0.5
        %v3985 = vmul.f32 %v3833, 0.5
        %v3986 = vmul.f32 %v3944, 0.5
        %v3987 = vmul.f32 %v3946, 0.5
        %v3988 = vmul.f32 %v3837, 0.5
        %v3989 = vmul.f32 %v3839, 0.5
        %v3990 = vmul.f32 %v3950, 0.5
        %v3991 = vmul.f32 %v3952, 0.5
        %v3992 = vmul.f32 %v3843, 0.5
        %v3993 = vmul.f32 %v3845, 0.5
        %v3994 = vmul.f32 %v3956, 0.5
        %v3995 = vmul.f32 %v3958, 0.5
        %v3996 = vmul.f32 %v3849, 0.5
        %v3997 = vmul.f32 %v3851, 0.5
        %v3998 = vmul.f32 %v3962, 0.5
        %v3999 = vmul.f32 %v3964, 0.5
        %v4000 = vmul.f32 %v3855, 0.5
        %v4001 = vmul.f32 %v3857, 0.5
        %v4002 = vmul.f32 %v3968, 0.5
        %v4003 = vmul.f32 %v3970, 0.5
        %v4004 = vmul.f32 %v3813, %v3813
        %v4005 = vmul.f32 %v3815, %v3815
        %v4006 = vmul.f32 %v3926, %v3926
        %v4007 = vmul.f32 %v3928, %v3928
        %v4008 = vmul.f32 %v3819, %v3819
        %v4009 = vmul.f32 %v3821, %v3821
        %v4010 = vmul.f32 %v3932, %v3932
        %v4011 = vmul.f32 %v3934, %v3934
        %v4012 = vmul.f32 %v3825, %v3825
        %v4013 = vmul.f32 %v3827, %v3827
        %v4014 = vmul.f32 %v3938, %v3938
        %v4015 = vmul.f32 %v3940, %v3940
        %v4016 = vmul.f32 %v3831, %v3831
        %v4017 = vmul.f32 %v3833, %v3833
        %v4018 = vmul.f32 %v3944, %v3944
        %v4019 = vmul.f32 %v3946, %v3946
        %v4020 = vmul.f32 %v3837, %v3837
        %v4021 = vmul.f32 %v3839, %v3839
        %v4022 = vmul.f32 %v3950, %v3950
        %v4023 = vmul.f32 %v3952, %v3952
        %v4024 = vmul.f32 %v3843, %v3843
        %v4025 = vmul.f32 %v3845, %v3845
        %v4026 = vmul.f32 %v3956, %v3956
        %v4027 = vmul.f32 %v3958, %v3958
        %v4028 = vmul.f32 %v3849, %v3849
        %v4029 = vmul.f32 %v3851, %v3851
        %v4030 = vmul.f32 %v3962, %v3962
        %v4031 = vmul.f32 %v3964, %v3964
        %v4032 = vmul.f32 %v3855, %v3855
        %v4033 = vmul.f32 %v3857, %v3857
        %v4034 = vmul.f32 %v3968, %v3968
        %v4035 = vmul.f32 %v3970, %v3970
        %v4036 = vmul.f32 %v4004, %v3813
        %v4037 = vmul.f32 %v4005, %v3815
        %v4038 = vmul.f32 %v4006, %v3926
        %v4039 = vmul.f32 %v4007, %v3928
        %v4040 = vmul.f32 %v4008, %v3819
        %v4041 = vmul.f32 %v4009, %v3821
        %v4042 = vmul.f32 %v4010, %v3932
        %v4043 = vmul.f32 %v4011, %v3934
        %v4044 = vmul.f32 %v4012, %v3825
        %v4045 = vmul.f32 %v4013, %v3827
        %v4046 = vmul.f32 %v4014, %v3938
        %v4047 = vmul.f32 %v4015, %v3940
        %v4048 = vmul.f32 %v4016, %v3831
        %v4049 = vmul.f32 %v4017, %v3833
        %v4050 = vmul.f32 %v4018, %v3944
        %v4051 = vmul.f32 %v4019, %v3946
        %v4052 = vmul.f32 %v4020, %v3837
        %v4053 = vmul.f32 %v4021, %v3839
        %v4054 = vmul.f32 %v4022, %v3950
        %v4055 = vmul.f32 %v4023, %v3952
        %v4056 = vmul.f32 %v4024, %v3843
        %v4057 = vmul.f32 %v4025, %v3845
        %v4058 = vmul.f32 %v4026, %v3956
        %v4059 = vmul.f32 %v4027, %v3958
        %v4060 = vmul.f32 %v4028, %v3849
        %v4061 = vmul.f32 %v4029, %v3851
        %v4062 = vmul.f32 %v4030, %v3962
        %v4063 = vmul.f32 %v4031, %v3964
        %v4064 = vmul.f32 %v4032, %v3855
        %v4065 = vmul.f32 %v4033, %v3857
        %v4066 = vmul.f32 %v4034, %v3968
        %v4067 = vmul.f32 %v4035, %v3970
        %v4068 = vmul.f32 %v4036, 0.044715
        %v4069 = vmul.f32 %v4037, 0.044715
        %v4070 = vmul.f32 %v4038, 0.044715
        %v4071 = vmul.f32 %v4039, 0.044715
        %v4072 = vmul.f32 %v4040, 0.044715
        %v4073 = vmul.f32 %v4041, 0.044715
        %v4074 = vmul.f32 %v4042, 0.044715
        %v4075 = vmul.f32 %v4043, 0.044715
        %v4076 = vmul.f32 %v4044, 0.044715
        %v4077 = vmul.f32 %v4045, 0.044715
        %v4078 = vmul.f32 %v4046, 0.044715
        %v4079 = vmul.f32 %v4047, 0.044715
        %v4080 = vmul.f32 %v4048, 0.044715
        %v4081 = vmul.f32 %v4049, 0.044715
        %v4082 = vmul.f32 %v4050, 0.044715
        %v4083 = vmul.f32 %v4051, 0.044715
        %v4084 = vmul.f32 %v4052, 0.044715
        %v4085 = vmul.f32 %v4053, 0.044715
        %v4086 = vmul.f32 %v4054, 0.044715
        %v4087 = vmul.f32 %v4055, 0.044715
        %v4088 = vmul.f32 %v4056, 0.044715
        %v4089 = vmul.f32 %v4057, 0.044715
        %v4090 = vmul.f32 %v4058, 0.044715
        %v4091 = vmul.f32 %v4059, 0.044715
        %v4092 = vmul.f32 %v4060, 0.044715
        %v4093 = vmul.f32 %v4061, 0.044715
        %v4094 = vmul.f32 %v4062, 0.044715
        %v4095 = vmul.f32 %v4063, 0.044715
        %v4096 = vmul.f32 %v4064, 0.044715
        %v4097 = vmul.f32 %v4065, 0.044715
        %v4098 = vmul.f32 %v4066, 0.044715
        %v4099 = vmul.f32 %v4067, 0.044715
        %v4100 = vadd.f32 %v3813, %v4068
        %v4101 = vadd.f32 %v3815, %v4069
        %v4102 = vadd.f32 %v3926, %v4070
        %v4103 = vadd.f32 %v3928, %v4071
        %v4104 = vadd.f32 %v3819, %v4072
        %v4105 = vadd.f32 %v3821, %v4073
        %v4106 = vadd.f32 %v3932, %v4074
        %v4107 = vadd.f32 %v3934, %v4075
        %v4108 = vadd.f32 %v3825, %v4076
        %v4109 = vadd.f32 %v3827, %v4077
        %v4110 = vadd.f32 %v3938, %v4078
        %v4111 = vadd.f32 %v3940, %v4079
        %v4112 = vadd.f32 %v3831, %v4080
        %v4113 = vadd.f32 %v3833, %v4081
        %v4114 = vadd.f32 %v3944, %v4082
        %v4115 = vadd.f32 %v3946, %v4083
        %v4116 = vadd.f32 %v3837, %v4084
        %v4117 = vadd.f32 %v3839, %v4085
        %v4118 = vadd.f32 %v3950, %v4086
        %v4119 = vadd.f32 %v3952, %v4087
        %v4120 = vadd.f32 %v3843, %v4088
        %v4121 = vadd.f32 %v3845, %v4089
        %v4122 = vadd.f32 %v3956, %v4090
        %v4123 = vadd.f32 %v3958, %v4091
        %v4124 = vadd.f32 %v3849, %v4092
        %v4125 = vadd.f32 %v3851, %v4093
        %v4126 = vadd.f32 %v3962, %v4094
        %v4127 = vadd.f32 %v3964, %v4095
        %v4128 = vadd.f32 %v3855, %v4096
        %v4129 = vadd.f32 %v3857, %v4097
        %v4130 = vadd.f32 %v3968, %v4098
        %v4131 = vadd.f32 %v3970, %v4099
        %v4132 = vmul.f32 %v4100, 0.7978846
        %v4133 = vmul.f32 %v4101, 0.7978846
        %v4134 = vmul.f32 %v4102, 0.7978846
        %v4135 = vmul.f32 %v4103, 0.7978846
        %v4136 = vmul.f32 %v4104, 0.7978846
        %v4137 = vmul.f32 %v4105, 0.7978846
        %v4138 = vmul.f32 %v4106, 0.7978846
        %v4139 = vmul.f32 %v4107, 0.7978846
        %v4140 = vmul.f32 %v4108, 0.7978846
        %v4141 = vmul.f32 %v4109, 0.7978846
        %v4142 = vmul.f32 %v4110, 0.7978846
        %v4143 = vmul.f32 %v4111, 0.7978846
        %v4144 = vmul.f32 %v4112, 0.7978846
        %v4145 = vmul.f32 %v4113, 0.7978846
        %v4146 = vmul.f32 %v4114, 0.7978846
        %v4147 = vmul.f32 %v4115, 0.7978846
        %v4148 = vmul.f32 %v4116, 0.7978846
        %v4149 = vmul.f32 %v4117, 0.7978846
        %v4150 = vmul.f32 %v4118, 0.7978846
        %v4151 = vmul.f32 %v4119, 0.7978846
        %v4152 = vmul.f32 %v4120, 0.7978846
        %v4153 = vmul.f32 %v4121, 0.7978846
        %v4154 = vmul.f32 %v4122, 0.7978846
        %v4155 = vmul.f32 %v4123, 0.7978846
        %v4156 = vmul.f32 %v4124, 0.7978846
        %v4157 = vmul.f32 %v4125, 0.7978846
        %v4158 = vmul.f32 %v4126, 0.7978846
        %v4159 = vmul.f32 %v4127, 0.7978846
        %v4160 = vmul.f32 %v4128, 0.7978846
        %v4161 = vmul.f32 %v4129, 0.7978846
        %v4162 = vmul.f32 %v4130, 0.7978846
        %v4163 = vmul.f32 %v4131, 0.7978846
        %v4164 = vtanh.pop %v4132
        %v4165 = vtanh.pop %v4133
        %v4166 = vtanh.pop %v4134
        %v4167 = vtanh.pop %v4135
        %v4168 = vtanh.pop %v4136
        %v4169 = vtanh.pop %v4137
        %v4170 = vtanh.pop %v4138
        %v4171 = vtanh.pop %v4139
        %v4172 = vtanh.pop %v4140
        %v4173 = vtanh.pop %v4141
        %v4174 = vtanh.pop %v4142
        %v4175 = vtanh.pop %v4143
        %v4176 = vtanh.pop %v4144
        %v4177 = vtanh.pop %v4145
        %v4178 = vtanh.pop %v4146
        %v4179 = vtanh.pop %v4147
        %v4180 = vtanh.pop %v4148
        %v4181 = vtanh.pop %v4149
        %v4182 = vtanh.pop %v4150
        %v4183 = vtanh.pop %v4151
        %v4184 = vtanh.pop %v4152
        %v4185 = vtanh.pop %v4153
        %v4186 = vtanh.pop %v4154
        %v4187 = vtanh.pop %v4155
        %v4188 = vtanh.pop %v4156
        %v4189 = vtanh.pop %v4157
        %v4190 = vtanh.pop %v4158
        %v4191 = vtanh.pop %v4159
        %v4192 = vtanh.pop %v4160
        %v4193 = vtanh.pop %v4161
        %v4194 = vtanh.pop %v4162
        %v4195 = vtanh.pop %v4163
        %v4196 = vadd.f32 %v4164, 1.0
        %v4197 = vadd.f32 %v4165, 1.0
        %v4198 = vadd.f32 %v4166, 1.0
        %v4199 = vadd.f32 %v4167, 1.0
        %v4200 = vadd.f32 %v4168, 1.0
        %v4201 = vadd.f32 %v4169, 1.0
        %v4202 = vadd.f32 %v4170, 1.0
        %v4203 = vadd.f32 %v4171, 1.0
        %v4204 = vadd.f32 %v4172, 1.0
        %v4205 = vadd.f32 %v4173, 1.0
        %v4206 = vadd.f32 %v4174, 1.0
        %v4207 = vadd.f32 %v4175, 1.0
        %v4208 = vadd.f32 %v4176, 1.0
        %v4209 = vadd.f32 %v4177, 1.0
        %v4210 = vadd.f32 %v4178, 1.0
        %v4211 = vadd.f32 %v4179, 1.0
        %v4212 = vadd.f32 %v4180, 1.0
        %v4213 = vadd.f32 %v4181, 1.0
        %v4214 = vadd.f32 %v4182, 1.0
        %v4215 = vadd.f32 %v4183, 1.0
        %v4216 = vadd.f32 %v4184, 1.0
        %v4217 = vadd.f32 %v4185, 1.0
        %v4218 = vadd.f32 %v4186, 1.0
        %v4219 = vadd.f32 %v4187, 1.0
        %v4220 = vadd.f32 %v4188, 1.0
        %v4221 = vadd.f32 %v4189, 1.0
        %v4222 = vadd.f32 %v4190, 1.0
        %v4223 = vadd.f32 %v4191, 1.0
        %v4224 = vadd.f32 %v4192, 1.0
        %v4225 = vadd.f32 %v4193, 1.0
        %v4226 = vadd.f32 %v4194, 1.0
        %v4227 = vadd.f32 %v4195, 1.0
        %v4228 = vmul.f32 %v3972, %v4196
        %v4229 = vmul.f32 %v3973, %v4197
        %v4230 = vmul.f32 %v3974, %v4198
        %v4231 = vmul.f32 %v3975, %v4199
        %v4232 = vmul.f32 %v3976, %v4200
        %v4233 = vmul.f32 %v3977, %v4201
        %v4234 = vmul.f32 %v3978, %v4202
        %v4235 = vmul.f32 %v3979, %v4203
        %v4236 = vmul.f32 %v3980, %v4204
        %v4237 = vmul.f32 %v3981, %v4205
        %v4238 = vmul.f32 %v3982, %v4206
        %v4239 = vmul.f32 %v3983, %v4207
        %v4240 = vmul.f32 %v3984, %v4208
        %v4241 = vmul.f32 %v3985, %v4209
        %v4242 = vmul.f32 %v3986, %v4210
        %v4243 = vmul.f32 %v3987, %v4211
        %v4244 = vmul.f32 %v3988, %v4212
        %v4245 = vmul.f32 %v3989, %v4213
        %v4246 = vmul.f32 %v3990, %v4214
        %v4247 = vmul.f32 %v3991, %v4215
        %v4248 = vmul.f32 %v3992, %v4216
        %v4249 = vmul.f32 %v3993, %v4217
        %v4250 = vmul.f32 %v3994, %v4218
        %v4251 = vmul.f32 %v3995, %v4219
        %v4252 = vmul.f32 %v3996, %v4220
        %v4253 = vmul.f32 %v3997, %v4221
        %v4254 = vmul.f32 %v3998, %v4222
        %v4255 = vmul.f32 %v3999, %v4223
        %v4256 = vmul.f32 %v4000, %v4224
        %v4257 = vmul.f32 %v4001, %v4225
        %v4258 = vmul.f32 %v4002, %v4226
        %v4259 = vmul.f32 %v4003, %v4227
        %v4260 = vld [vmem:[#allocation13] sm:$0xff]
        %v4261 = vld [vmem:[#allocation13 + $0x8] sm:$0xff]
        %v4262 = vld [vmem:[#allocation13 + $0x10] sm:$0xff]
        %v4263 = vld [vmem:[#allocation13 + $0x18] sm:$0xff]
        %v4264 = vld [vmem:[#allocation13 + $0x20] sm:$0xff]
        %v4265 = vld [vmem:[#allocation13 + $0x28] sm:$0xff]
        %v4266 = vld [vmem:[#allocation13 + $0x30] sm:$0xff]
        %v4267 = vld [vmem:[#allocation13 + $0x38] sm:$0xff]
        %v4268 = vld [vmem:[#allocation13 + $0x40] sm:$0xff]
        %v4269 = vld [vmem:[#allocation13 + $0x48] sm:$0xff]
        %v4270 = vld [vmem:[#allocation13 + $0x50] sm:$0xff]
        %v4271 = vld [vmem:[#allocation13 + $0x58] sm:$0xff]
        %v4272 = vld [vmem:[#allocation13 + $0x60] sm:$0xff]
        %v4273 = vld [vmem:[#allocation13 + $0x68] sm:$0xff]
        %v4274 = vld [vmem:[#allocation13 + $0x70] sm:$0xff]
        %v4275 = vld [vmem:[#allocation13 + $0x78] sm:$0xff]
        %v4276 = vld [vmem:[#allocation13 + $0x80] sm:$0xff]
        %v4277 = vld [vmem:[#allocation13 + $0x88] sm:$0xff]
        %v4278 = vld [vmem:[#allocation13 + $0x90] sm:$0xff]
        %v4279 = vld [vmem:[#allocation13 + $0x98] sm:$0xff]
        %v4280 = vld [vmem:[#allocation13 + $0xa0] sm:$0xff]
        %v4281 = vld [vmem:[#allocation13 + $0xa8] sm:$0xff]
        %v4282 = vld [vmem:[#allocation13 + $0xb0] sm:$0xff]
        %v4283 = vld [vmem:[#allocation13 + $0xb8] sm:$0xff]
        %v4284 = vld [vmem:[#allocation13 + $0xc0] sm:$0xff]
        %v4285 = vld [vmem:[#allocation13 + $0xc8] sm:$0xff]
        %v4286 = vld [vmem:[#allocation13 + $0xd0] sm:$0xff]
        %v4287 = vld [vmem:[#allocation13 + $0xd8] sm:$0xff]
        %v4288 = vld [vmem:[#allocation13 + $0xe0] sm:$0xff]
        %v4289 = vld [vmem:[#allocation13 + $0xe8] sm:$0xff]
        %v4290 = vld [vmem:[#allocation13 + $0xf0] sm:$0xff]
        %v4291 = vld [vmem:[#allocation13 + $0xf8] sm:$0xff]
        %v4292 = vld [vmem:[#allocation13 + $0x100] sm:$0xff]
        %v4293 = vld [vmem:[#allocation13 + $0x108] sm:$0xff]
        %v4294 = vld [vmem:[#allocation13 + $0x110] sm:$0xff]
        %v4295 = vld [vmem:[#allocation13 + $0x118] sm:$0xff]
        %v4296 = vld [vmem:[#allocation13 + $0x120] sm:$0xff]
        %v4297 = vld [vmem:[#allocation13 + $0x128] sm:$0xff]
        %v4298 = vld [vmem:[#allocation13 + $0x130] sm:$0xff]
        %v4299 = vld [vmem:[#allocation13 + $0x138] sm:$0xff]
        %v4300 = vld [vmem:[#allocation13 + $0x140] sm:$0xff]
        %v4301 = vld [vmem:[#allocation13 + $0x148] sm:$0xff]
        %v4302 = vld [vmem:[#allocation13 + $0x150] sm:$0xff]
        %v4303 = vld [vmem:[#allocation13 + $0x158] sm:$0xff]
        %v4304 = vld [vmem:[#allocation13 + $0x160] sm:$0xff]
        %v4305 = vld [vmem:[#allocation13 + $0x168] sm:$0xff]
        %v4306 = vld [vmem:[#allocation13 + $0x170] sm:$0xff]
        %v4307 = vld [vmem:[#allocation13 + $0x178] sm:$0xff]
        %v4308 = vld [vmem:[#allocation13 + $0x180] sm:$0xff]
        %v4309 = vld [vmem:[#allocation13 + $0x188] sm:$0xff]
        %v4310 = vld [vmem:[#allocation13 + $0x190] sm:$0xff]
        %v4311 = vld [vmem:[#allocation13 + $0x198] sm:$0xff]
        %v4312 = vld [vmem:[#allocation13 + $0x1a0] sm:$0xff]
        %v4313 = vld [vmem:[#allocation13 + $0x1a8] sm:$0xff]
        %v4314 = vld [vmem:[#allocation13 + $0x1b0] sm:$0xff]
        %v4315 = vld [vmem:[#allocation13 + $0x1b8] sm:$0xff]
        %v4316 = vld [vmem:[#allocation13 + $0x1c0] sm:$0xff]
        %v4317 = vld [vmem:[#allocation13 + $0x1c8] sm:$0xff]
        %v4318 = vld [vmem:[#allocation13 + $0x1d0] sm:$0xff]
        %v4319 = vld [vmem:[#allocation13 + $0x1d8] sm:$0xff]
        %v4320 = vld [vmem:[#allocation13 + $0x1e0] sm:$0xff]
        %v4321 = vld [vmem:[#allocation13 + $0x1e8] sm:$0xff]
        %v4322 = vld [vmem:[#allocation13 + $0x1f0] sm:$0xff]
        %v4323 = vld [vmem:[#allocation13 + $0x1f8] sm:$0xff]
        %v4324 = vld [vmem:[%s16] sm:$0x1]
        %v4326 = vlaneseq
        %v4327 = vshrl.u32 %v4326, 7
        %v4328 = vsub.s32 0, %v4327
        %v4329 = vrot.slane %v4324, %v4328
        %4331 = vmatprep.subr.mxu0 0.0
        %4332 = vmatpush1.msra.mxu0 %v4275
        %4333 = vmatprep.subr.mxu0 0.0
        %4334 = vmatpush1.msra.mxu0 %v4274
        %4335 = vmatprep.subr.mxu0 0.0
        %4336 = vmatpush1.msra.mxu0 %v4273
        %4337 = vmatprep.subr.mxu0 0.0
        %4338 = vmatpush1.msra.mxu0 %v4272
        %4339 = vmatprep.subr.mxu0 0.0
        %4340 = vmatpush1.msra.mxu0 %v4271
        %4341 = vmatprep.subr.mxu0 0.0
        %4342 = vmatpush1.msra.mxu0 %v4270
        %4343 = vmatprep.subr.mxu0 0.0
        %4344 = vmatpush1.msra.mxu0 %v4269
        %4345 = vmatprep.subr.mxu0 0.0
        %4346 = vmatpush1.msra.mxu0 %v4268
        %4347 = vmatprep.subr.mxu0 0.0
        %4348 = vmatpush1.msra.mxu0 %v4267
        %4349 = vmatprep.subr.mxu0 0.0
        %4350 = vmatpush1.msra.mxu0 %v4266
        %4351 = vmatprep.subr.mxu0 0.0
        %4352 = vmatpush1.msra.mxu0 %v4265
        %4353 = vmatprep.subr.mxu0 0.0
        %4354 = vmatpush1.msra.mxu0 %v4264
        %4355 = vmatprep.subr.mxu0 0.0
        %4356 = vmatpush1.msra.mxu0 %v4263
        %4357 = vmatprep.subr.mxu0 0.0
        %4358 = vmatpush1.msra.mxu0 %v4262
        %4359 = vmatprep.subr.mxu0 0.0
        %4360 = vmatpush1.msra.mxu0 %v4261
        %4361 = vmatprep.subr.mxu0 0.0
        %4362 = vmatpush1.msra.mxu0 %v4260
        %4363 = vmatprep.subr.mxu0 0.0
        %4364 = vmatpush2.msra.mxu0 %v4291
        %4365 = vmatprep.subr.mxu0 0.0
        %4366 = vmatpush2.msra.mxu0 %v4290
        %4367 = vmatprep.subr.mxu0 0.0
        %4368 = vmatpush2.msra.mxu0 %v4289
        %4369 = vmatprep.subr.mxu0 0.0
        %4370 = vmatpush2.msra.mxu0 %v4288
        %4371 = vmatprep.subr.mxu0 0.0
        %4372 = vmatpush2.msra.mxu0 %v4287
        %4373 = vmatprep.subr.mxu0 0.0
        %4374 = vmatpush2.msra.mxu0 %v4286
        %4375 = vmatprep.subr.mxu0 0.0
        %4376 = vmatpush2.msra.mxu0 %v4285
        %4377 = vmatprep.subr.mxu0 0.0
        %4378 = vmatpush2.msra.mxu0 %v4284
        %4379 = vmatprep.subr.mxu0 0.0
        %4380 = vmatpush2.msra.mxu0 %v4283
        %4381 = vmatprep.subr.mxu0 0.0
        %4382 = vmatpush2.msra.mxu0 %v4282
        %4383 = vmatprep.subr.mxu0 0.0
        %4384 = vmatpush2.msra.mxu0 %v4281
        %4385 = vmatprep.subr.mxu0 0.0
        %4386 = vmatpush2.msra.mxu0 %v4280
        %4387 = vmatprep.subr.mxu0 0.0
        %4388 = vmatpush2.msra.mxu0 %v4279
        %4389 = vmatprep.subr.mxu0 0.0
        %4390 = vmatpush2.msra.mxu0 %v4278
        %4391 = vmatprep.subr.mxu0 0.0
        %4392 = vmatpush2.msra.mxu0 %v4277
        %4393 = vmatprep.subr.mxu0 0.0
        %4394 = vmatpush2.msra.mxu0 %v4276
        %4395 = vmatprep.mubr.f32.mxu0 %v4229
        %4396 = vmatmul.mubr.f32.gmra.mxu0 %v4228
        %v4397 = vpop.f32.mrf.mxu0
        %v4398 = vadd.f32 %v4329, %v4397
        %v4399 = vpop.f32.mrf.mxu0
        %4400 = vmatprep.mubr.f32.mxu0 %v4233
        %4401 = vmatmul.mubr.f32.gmra.mxu0 %v4232
        %v4402 = vpop.f32.mrf.mxu0
        %v4403 = vadd.f32 %v4329, %v4402
        %v4404 = vpop.f32.mrf.mxu0
        %4405 = vmatprep.mubr.f32.mxu0 %v4237
        %4406 = vmatmul.mubr.f32.gmra.mxu0 %v4236
        %v4407 = vpop.f32.mrf.mxu0
        %v4408 = vadd.f32 %v4329, %v4407
        %v4409 = vpop.f32.mrf.mxu0
        %4410 = vmatprep.mubr.f32.mxu0 %v4241
        %4411 = vmatmul.mubr.f32.gmra.mxu0 %v4240
        %v4412 = vpop.f32.mrf.mxu0
        %v4413 = vadd.f32 %v4329, %v4412
        %v4414 = vpop.f32.mrf.mxu0
        %4415 = vmatprep.mubr.f32.mxu0 %v4245
        %4416 = vmatmul.mubr.f32.gmra.mxu0 %v4244
        %v4417 = vpop.f32.mrf.mxu0
        %v4418 = vadd.f32 %v4329, %v4417
        %v4419 = vpop.f32.mrf.mxu0
        %4420 = vmatprep.mubr.f32.mxu0 %v4249
        %4421 = vmatmul.mubr.f32.gmra.mxu0 %v4248
        %v4422 = vpop.f32.mrf.mxu0
        %v4423 = vadd.f32 %v4329, %v4422
        %v4424 = vpop.f32.mrf.mxu0
        %4425 = vmatprep.mubr.f32.mxu0 %v4253
        %4426 = vmatmul.mubr.f32.gmra.mxu0 %v4252
        %v4427 = vpop.f32.mrf.mxu0
        %v4428 = vadd.f32 %v4329, %v4427
        %v4429 = vpop.f32.mrf.mxu0
        %4430 = vmatprep.mubr.f32.mxu0 %v4257
        %4431 = vmatmul.mubr.f32.gmra.mxu0 %v4256
        %v4432 = vpop.f32.mrf.mxu0
        %v4433 = vadd.f32 %v4329, %v4432
        %v4434 = vpop.f32.mrf.mxu0
        %4435 = vdwg.mxu0
        %4436 = vmatprep.subr.mxu0 0.0
        %4437 = vmatpush1.msra.mxu0 %v4307
        %4438 = vmatprep.subr.mxu0 0.0
        %4439 = vmatpush1.msra.mxu0 %v4306
        %4440 = vmatprep.subr.mxu0 0.0
        %4441 = vmatpush1.msra.mxu0 %v4305
        %4442 = vmatprep.subr.mxu0 0.0
        %4443 = vmatpush1.msra.mxu0 %v4304
        %4444 = vmatprep.subr.mxu0 0.0
        %4445 = vmatpush1.msra.mxu0 %v4303
        %4446 = vmatprep.subr.mxu0 0.0
        %4447 = vmatpush1.msra.mxu0 %v4302
        %4448 = vmatprep.subr.mxu0 0.0
        %4449 = vmatpush1.msra.mxu0 %v4301
        %4450 = vmatprep.subr.mxu0 0.0
        %4451 = vmatpush1.msra.mxu0 %v4300
        %4452 = vmatprep.subr.mxu0 0.0
        %4453 = vmatpush1.msra.mxu0 %v4299
        %4454 = vmatprep.subr.mxu0 0.0
        %4455 = vmatpush1.msra.mxu0 %v4298
        %4456 = vmatprep.subr.mxu0 0.0
        %4457 = vmatpush1.msra.mxu0 %v4297
        %4458 = vmatprep.subr.mxu0 0.0
        %4459 = vmatpush1.msra.mxu0 %v4296
        %4460 = vmatprep.subr.mxu0 0.0
        %4461 = vmatpush1.msra.mxu0 %v4295
        %4462 = vmatprep.subr.mxu0 0.0
        %4463 = vmatpush1.msra.mxu0 %v4294
        %4464 = vmatprep.subr.mxu0 0.0
        %4465 = vmatpush1.msra.mxu0 %v4293
        %4466 = vmatprep.subr.mxu0 0.0
        %4467 = vmatpush1.msra.mxu0 %v4292
        %4468 = vmatprep.subr.mxu0 0.0
        %4469 = vmatpush2.msra.mxu0 %v4323
        %4470 = vmatprep.subr.mxu0 0.0
        %4471 = vmatpush2.msra.mxu0 %v4322
        %4472 = vmatprep.subr.mxu0 0.0
        %4473 = vmatpush2.msra.mxu0 %v4321
        %4474 = vmatprep.subr.mxu0 0.0
        %4475 = vmatpush2.msra.mxu0 %v4320
        %4476 = vmatprep.subr.mxu0 0.0
        %4477 = vmatpush2.msra.mxu0 %v4319
        %4478 = vmatprep.subr.mxu0 0.0
        %4479 = vmatpush2.msra.mxu0 %v4318
        %4480 = vmatprep.subr.mxu0 0.0
        %4481 = vmatpush2.msra.mxu0 %v4317
        %4482 = vmatprep.subr.mxu0 0.0
        %4483 = vmatpush2.msra.mxu0 %v4316
        %4484 = vmatprep.subr.mxu0 0.0
        %4485 = vmatpush2.msra.mxu0 %v4315
        %4486 = vmatprep.subr.mxu0 0.0
        %4487 = vmatpush2.msra.mxu0 %v4314
        %4488 = vmatprep.subr.mxu0 0.0
        %4489 = vmatpush2.msra.mxu0 %v4313
        %4490 = vmatprep.subr.mxu0 0.0
        %4491 = vmatpush2.msra.mxu0 %v4312
        %4492 = vmatprep.subr.mxu0 0.0
        %4493 = vmatpush2.msra.mxu0 %v4311
        %4494 = vmatprep.subr.mxu0 0.0
        %4495 = vmatpush2.msra.mxu0 %v4310
        %4496 = vmatprep.subr.mxu0 0.0
        %4497 = vmatpush2.msra.mxu0 %v4309
        %4498 = vmatprep.subr.mxu0 0.0
        %4499 = vmatpush2.msra.mxu0 %v4308
        %4500 = vmatprep.mubr.f32.mxu0 %v4231
        %4501 = vmatmul.mubr.f32.gmra.mxu0 %v4230
        %v4502 = vpop.f32.mrf.mxu0
        %v4503 = vadd.f32 %v4398, %v4502
        %v4504 = vpop.f32.mrf.mxu0
        %4505 = vmatprep.mubr.f32.mxu0 %v4235
        %4506 = vmatmul.mubr.f32.gmra.mxu0 %v4234
        %v4507 = vpop.f32.mrf.mxu0
        %v4508 = vadd.f32 %v4403, %v4507
        %v4509 = vpop.f32.mrf.mxu0
        %4510 = vmatprep.mubr.f32.mxu0 %v4239
        %4511 = vmatmul.mubr.f32.gmra.mxu0 %v4238
        %v4512 = vpop.f32.mrf.mxu0
        %v4513 = vadd.f32 %v4408, %v4512
        %v4514 = vpop.f32.mrf.mxu0
        %4515 = vmatprep.mubr.f32.mxu0 %v4243
        %4516 = vmatmul.mubr.f32.gmra.mxu0 %v4242
        %v4517 = vpop.f32.mrf.mxu0
        %v4518 = vadd.f32 %v4413, %v4517
        %v4519 = vpop.f32.mrf.mxu0
        %4520 = vmatprep.mubr.f32.mxu0 %v4247
        %4521 = vmatmul.mubr.f32.gmra.mxu0 %v4246
        %v4522 = vpop.f32.mrf.mxu0
        %v4523 = vadd.f32 %v4418, %v4522
        %v4524 = vpop.f32.mrf.mxu0
        %4525 = vmatprep.mubr.f32.mxu0 %v4251
        %4526 = vmatmul.mubr.f32.gmra.mxu0 %v4250
        %v4527 = vpop.f32.mrf.mxu0
        %v4528 = vadd.f32 %v4423, %v4527
        %v4529 = vpop.f32.mrf.mxu0
        %4530 = vmatprep.mubr.f32.mxu0 %v4255
        %4531 = vmatmul.mubr.f32.gmra.mxu0 %v4254
        %v4532 = vpop.f32.mrf.mxu0
        %v4533 = vadd.f32 %v4428, %v4532
        %v4534 = vpop.f32.mrf.mxu0
        %4535 = vmatprep.mubr.f32.mxu0 %v4259
        %4536 = vmatmul.mubr.f32.gmra.mxu0 %v4258
        %v4537 = vpop.f32.mrf.mxu0
        %v4538 = vadd.f32 %v4433, %v4537
        %v4539 = vpop.f32.mrf.mxu0
        %4540 = vdwg.mxu0
        %v4541 = vadd.f32 %v4503, %v3478
        %v4542 = vadd.f32 %v4508, %v3479
        %v4543 = vadd.f32 %v4513, %v3480
        %v4544 = vadd.f32 %v4518, %v3481
        %v4545 = vadd.f32 %v4523, %v3482
        %v4546 = vadd.f32 %v4528, %v3483
        %v4547 = vadd.f32 %v4533, %v3484
        %v4548 = vadd.f32 %v4538, %v3485
        %4549 = vst [vmem:[%s653] sm:$0xff] %v4541
        %4550 = vst [vmem:[%s653 + $0x8] sm:$0xff] %v4542
        %4551 = vst [vmem:[%s653 + $0x10] sm:$0xff] %v4543
        %4552 = vst [vmem:[%s653 + $0x18] sm:$0xff] %v4544
        %4553 = vst [vmem:[%s653 + $0x20] sm:$0xff] %v4545
        %4554 = vst [vmem:[%s653 + $0x28] sm:$0xff] %v4546
        %4555 = vst [vmem:[%s653 + $0x30] sm:$0xff] %v4547
        %4556 = vst [vmem:[%s653 + $0x38] sm:$0xff] %v4548
        %s4557 = sand.u32 %s407, 1
        %s4558 = scalar_lea.sflag [#allocation4], %s4557
        %s4559 = sand.u32 %s407, 1
        %s4560 = smul.addr %s4559, 64
        %s4561 = scalar_lea.vmem [#allocation14], %s4560
        // Predicated region
        $region117: #{tpu_custom_call.1} parent=87 // pred_check
          %p4562 = pneg %p417
        $region118: #{tpu_custom_call.1} parent=87 // pred_check_branch
          %4564 = sbr.rel (%p4562) target = $region120
        $region119: #{tpu_custom_call.1} parent=87 // pred_region
          %s4566 = ssub.s32 1024, 1024
          %4567 = vsyncadd %s4558, %s4566
          %s4568 = smul.addr %s37, 8
          %s4569 = smul.addr %s4568, 128
          %s4570 = scalar_lea.hbm %s17, %s4569
          %s4571 = sshll.u32 %s4561, 4
          %s4572 = int_to_ptr.vmem [resolvable:$true] %s4571
          %4577 = dma.vmem_to_hbm [thread:$0]  %s4572, 1024, %s4570, %s4558, 128, 128, 8
        $region120: #{tpu_custom_call.1} parent=87 // pred_fallthru
          _
      $region88: #{tpu_custom_call.1} parent=5 // pred_fallthru
        _
      %p4578 = scmp.le.s32.totalorder 2, %s32
      // Predicated region
      $region121: #{tpu_custom_call.1} parent=5 // pred_check
        %p4579 = pneg %p4578
      $region122: #{tpu_custom_call.1} parent=5 // pred_check_branch
        %4581 = sbr.rel (%p4579) target = $region124
      $region123: #{tpu_custom_call.1} parent=5 // pred_region
        %s4582 = ssub.s32 %s32, 2
        // Predicated region
        $region125: #{tpu_custom_call.1} parent=123 // pred_check
          %p4583 = pneg %p423
        $region126: #{tpu_custom_call.1} parent=123 // pred_check_branch
          %4585 = sbr.rel (%p4583) target = $region128
        $region127: #{tpu_custom_call.1} parent=123 // pred_region
          %s4586 = sand.u32 %s408, 1
          %s4587 = scalar_lea.sflag [#allocation4], %s4586
          %s4588 = sand.u32 %s408, 1
          %s4589 = smul.addr %s4588, 64
          %s4590 = scalar_lea.vmem [#allocation14], %s4589
          %4591 = dma.done %s4587, 1024
        $region128: #{tpu_custom_call.1} parent=123 // pred_fallthru
          _
      $region124: #{tpu_custom_call.1} parent=5 // pred_fallthru
        _
    $region6: #{tpu_custom_call.1} parent=1 // loop_footer
      %s36 = sadd.s32 1, %s32
    $region7: #{tpu_custom_call.1} parent=1 // loop_footer_branch
      %31 = sbr.rel target = $region3
    $region8: #{tpu_custom_call.1} parent=1 // loop_exit
      _
    %4592 = vsyncpa [#allocation3], 1
    %s4593 = scalar_lea.sflag [#allocation3], 1
    %4594 = vsyncpa %s4593, 1
    %4595 = vsyncpa [#allocation6], 1
    %4596 = vsyncpa [#allocation9], 1
    %4597 = vsyncpa [#allocation12], 1
    %4598 = vsyncpa [#allocation4], 1
    %s4599 = scalar_lea.sflag [#allocation4], 1
    %4600 = vsyncpa %s4599, 1

</llo_original>
